<compile_context>
chip_gen: v6e
topology: v6e:2x2x1
jax: 0.10.0
libtpu: 0.0.40
codegen_flags: <defaults>
</compile_context>

<pallas_src>
import numpy as np
import jax
import jax.numpy as jnp
from jax.experimental import pallas as pl
from jax.experimental.pallas import tpu as pltpu


def _bilinear_matrix(out_size: int, in_size: int) -> np.ndarray:
    """1-D interpolation matrix matching F.interpolate(mode='bilinear', align_corners=False)."""
    A = np.zeros((out_size, in_size), dtype=np.float32)
    scale = in_size / out_size
    for i in range(out_size):
        src = (i + 0.5) * scale - 0.5
        src = max(src, 0.0)
        i0 = min(int(np.floor(src)), in_size - 1)
        i1 = min(i0 + 1, in_size - 1)
        frac = src - i0
        A[i, i0] += 1.0 - frac
        A[i, i1] += frac
    return A


def make_gate_tables(H, W, Hg, Wg):
    """Host-side, one-time tables.

    * ah1 / aw1t: separable bilinear factors g-grid -> theta-grid.
    * ah2e / ah2o / aw2t: separable factors theta-grid -> x-grid, with the H factor
      split into even/odd rows so the upsampled map is produced directly in the
      packed (H/2, 2W) lane layout (no in-kernel relayout).
    * cw4: (2W, 4*Wt) one-hot block matrix; one matmul per channel turns the packed
      row-pair plane (Ht, 2W) into the four 2x2/stride-2 conv tap grids (Ht, 4*Wt),
      quarter k = i*2 + j  <->  tap (i, j)."""
    Ht, Wt = H // 2, W // 2
    ah1 = _bilinear_matrix(Ht, Hg)              # (Ht, Hg)
    aw1t = _bilinear_matrix(Wt, Wg).T           # (Wg, Wt)
    ah2 = _bilinear_matrix(H, Ht)               # (H, Ht)
    aw2t = _bilinear_matrix(W, Wt).T            # (Wt, W)

    cw = np.zeros((2, W, Wt), np.float32)       # column-parity / tap-j selection
    for j in range(2):
        for wt in range(Wt):
            cw[j, 2 * wt + j, wt] = 1.0
    cw4 = np.zeros((2 * W, 4 * Wt), np.float32)
    cw4[0:W, 0:Wt] = cw[0]                      # (i=0, j=0)
    cw4[0:W, Wt:2 * Wt] = cw[1]                 # (i=0, j=1)
    cw4[W:2 * W, 2 * Wt:3 * Wt] = cw[0]         # (i=1, j=0)
    cw4[W:2 * W, 3 * Wt:4 * Wt] = cw[1]         # (i=1, j=1)

    return dict(
        cw4=jnp.asarray(cw4),
        ah1=jnp.asarray(ah1),
        aw1t=jnp.asarray(aw1t),
        ah2e=jnp.asarray(np.ascontiguousarray(ah2[0::2])),   # (Ht, Ht) even output rows
        ah2o=jnp.asarray(np.ascontiguousarray(ah2[1::2])),   # (Ht, Ht) odd output rows
        aw2t=jnp.asarray(aw2t),
    )


def prepare_kernel_params(params):
    """Fold eval-mode BatchNorm into the W 1x1 conv and lay the small weight /
    bias tables out as flat 2-D / 1-D arrays for SMEM placement."""
    w_eff = params["w_w"] * params["bn_scale"]                        # (Cx, M)
    b_eff = params["b_w"] * params["bn_scale"] + params["bn_shift"]   # (1, M)
    return dict(
        wth=params["w_theta"].T,            # (M, Cx*4)  theta conv taps, SMEM scalars
        wph=params["w_phi"].T,              # (M, Cg)    phi 1x1 conv,    SMEM scalars
        ww=w_eff.T,                         # (M, Cx)    W 1x1 conv (BN folded)
        b_phi=params["b_phi"].reshape(-1),  # (M,)
        w_psi=params["w_psi"].reshape(-1),  # (M,)
        b_psi=params["b_psi"].reshape(-1),  # (1,)
        b_w=b_eff.reshape(-1),              # (M,)
    )


def _full_spec(shape):
    n = len(shape)

    def idx(b):
        return (0,) * n

    return pl.BlockSpec(tuple(shape), idx)


def _per_batch_spec(shape):
    n = len(shape)

    def idx(b):
        return (b,) + (0,) * n

    return pl.BlockSpec((1,) + tuple(shape), idx)


def _gate_kernel(x_ref, g_ref,
                 cw4_ref, ah1_ref, aw1t_ref, ah2e_ref, ah2o_ref, aw2t_ref,
                 wth_ref, wph_ref, ww_ref, bphi_ref, wpsi_ref, bpsi_ref, bw_ref,
                 out_ref):
    """One batch element per grid step.

    x_ref : (1, Cx, Ht, 2W)   row-pair packed x  (lane axis = [even row W | odd row W])
    g_ref : (1, Cg*Hg, Wg)    gating signal, channels stacked on the sublane axis
    out   : (1, M,  Ht, 2W)   W(gate(x)) in the same packed layout
    """
    M = wth_ref.shape[0]
    Cx = ww_ref.shape[1]
    Cg = wph_ref.shape[1]
    Hg = g_ref.shape[1] // Cg
    Wt = aw1t_ref.shape[1]

    cw4 = cw4_ref[...]

    # Load x channel planes once; reused by theta and by the W-conv / gating path.
    xs = [x_ref[0, c] for c in range(Cx)]                                 # (Ht, 2W) each

    # --- theta 2x2/stride-2 conv: one tap-selection matmul per channel ---------
    # xq[c][:, k*Wt:(k+1)*Wt] == x[c, 2*ht + i, 2*wt + j]  with k = i*2 + j.
    xq = [jnp.dot(xc, cw4, preferred_element_type=jnp.float32) for xc in xs]  # (Ht, 4Wt)

    # --- phi 1x1 conv + separable resample onto the theta grid -----------------
    # Right interpolation factor applied once to *all* g channels (single matmul).
    gr = jnp.dot(g_ref[0], aw1t_ref[...], preferred_element_type=jnp.float32)  # (Cg*Hg, Wt)
    ah1 = ah1_ref[...]

    # --- attention coefficients on the coarse (Ht, Wt) grid --------------------
    psi_acc = None
    for m in range(M):                               # mid_channels is small; static unroll
        theta_m = None
        for c in range(Cx):
            for k in range(4):
                t = wth_ref[m, c * 4 + k] * xq[c][:, k * Wt:(k + 1) * Wt]
                theta_m = t if theta_m is None else theta_m + t

        phi_r = None
        for c in range(Cg):
            t = wph_ref[m, c] * gr[c * Hg:(c + 1) * Hg, :]
            phi_r = t if phi_r is None else phi_r + t
        # Adding the phi bias after the resample is exact (every interp row sums to 1).
        phi_m = jnp.dot(ah1, phi_r, preferred_element_type=jnp.float32)        # (Ht, Wt)

        f_m = jnp.maximum(theta_m + phi_m + bphi_ref[m], 0.0)
        term = wpsi_ref[m] * f_m                    # psi 1x1 conv (reduce over mid)
        psi_acc = term if psi_acc is None else psi_acc + term

    sig = jax.nn.sigmoid(psi_acc + bpsi_ref[0])                                # (Ht, Wt)

    # --- separable bilinear upsample, produced directly in the packed layout ----
    U = jnp.dot(sig, aw2t_ref[...], preferred_element_type=jnp.float32)        # (Ht, W)
    up_e = jnp.dot(ah2e_ref[...], U, preferred_element_type=jnp.float32)       # (Ht, W)
    up_o = jnp.dot(ah2o_ref[...], U, preferred_element_type=jnp.float32)       # (Ht, W)
    up = jnp.concatenate([up_e, up_o], axis=1)                                 # (Ht, 2W)

    # --- W 1x1 conv (BN folded) commuted with the scalar gate: W(up*x) = up*(W x)+b
    for m in range(M):
        wx = None
        for c in range(Cx):
            t = ww_ref[m, c] * xs[c]
            wx = t if wx is None else wx + t
        out_ref[0, m] = up * wx + bw_ref[m]                                    # (Ht, 2W)


def gate_forward(x, g, kparams, tables):
    """x: (B, Cx, H, W) NCHW, g: (B, Cg, Hg, Wg) NCHW -> (B, M, H, W) NCHW."""
    B, Cx, H, W = x.shape
    _, Cg, Hg, Wg = g.shape
    M = kparams["wth"].shape[0]
    assert H % 2 == 0 and W % 2 == 0, "theta 2x2/stride-2 conv requires even H, W"
    Ht, Wt = H // 2, W // 2

    # Free metadata reshapes of contiguous NCHW (no HBM copies):
    x_r = x.reshape(B, Cx, Ht, 2 * W)      # pack row pairs onto the lane axis
    g_r = g.reshape(B, Cg * Hg, Wg)        # stack g channels on the sublane axis

    smem = pl.BlockSpec(memory_space=pltpu.MemorySpace.SMEM)

    out = pl.pallas_call(
        _gate_kernel,
        out_shape=jax.ShapeDtypeStruct((B, M, Ht, 2 * W), jnp.float32),
        grid=(B,),
        in_specs=[
            _per_batch_spec((Cx, Ht, 2 * W)),
            _per_batch_spec((Cg * Hg, Wg)),
            _full_spec((2 * W, 4 * Wt)),      # cw4
            _full_spec((Ht, Hg)),             # ah1
            _full_spec((Wg, Wt)),             # aw1t
            _full_spec((Ht, Ht)),             # ah2e
            _full_spec((Ht, Ht)),             # ah2o
            _full_spec((Wt, W)),              # aw2t
            smem, smem, smem, smem, smem, smem, smem,
        ],
        out_specs=_per_batch_spec((M, Ht, 2 * W)),
        compiler_params=pltpu.CompilerParams(
            dimension_semantics=("parallel",),
            vmem_limit_bytes=64 * 1024 * 1024,
        ),
    )(x_r, g_r,
      tables["cw4"], tables["ah1"], tables["aw1t"],
      tables["ah2e"], tables["ah2o"], tables["aw2t"],
      kparams["wth"], kparams["wph"], kparams["ww"],
      kparams["b_phi"], kparams["w_psi"], kparams["b_psi"], kparams["b_w"])

    return out.reshape(B, M, H, W)         # free un-packing of the lane layout


def gate_reference(x, g, params):
    """Pure-JAX reference (independent conv / dense-Kronecker path) for the correctness check."""
    B, Cx, H, W = x.shape
    _, Cg, Hg, Wg = g.shape
    M = params["w_theta"].shape[1]
    Ht, Wt = H // 2, W // 2

    w_theta_oihw = params["w_theta"].T.reshape(M, Cx, 2, 2)
    theta_x = jax.lax.conv_general_dilated(
        x, w_theta_oihw, window_strides=(2, 2), padding="VALID",
        dimension_numbers=("NCHW", "OIHW", "NCHW"))

    phi_g = jnp.einsum("bchw,cm->bmhw", g, params["w_phi"]) + params["b_phi"][0][None, :, None, None]
    a1 = jnp.asarray(np.kron(_bilinear_matrix(Ht, Hg), _bilinear_matrix(Wt, Wg)))
    phi_g = jnp.einsum("pq,bmq->bmp", a1, phi_g.reshape(B, M, Hg * Wg)).reshape(B, M, Ht, Wt)

    f = jax.nn.relu(theta_x + phi_g)
    psi = jnp.einsum("bmhw,m->bhw", f, params["w_psi"][:, 0]) + params["b_psi"][0, 0]
    sig = jax.nn.sigmoid(psi)
    a2 = jnp.asarray(np.kron(_bilinear_matrix(H, Ht), _bilinear_matrix(W, Wt)))
    sig_up = jnp.einsum("pq,bq->bp", a2, sig.reshape(B, Ht * Wt)).reshape(B, 1, H, W)

    y = sig_up * x
    wy = jnp.einsum("bchw,cm->bmhw", y, params["w_w"]) + params["b_w"][0][None, :, None, None]
    return wy * params["bn_scale"][0][None, :, None, None] + params["bn_shift"][0][None, :, None, None]


if __name__ == "__main__":
    # Module config: in_channels=8, mid_channels=4 (the module requires
    # in_channels//2 == mid_channels for the final W conv to be shape-consistent).
    B, in_channels, mid = 2, 8, 4
    Cx, Cg = in_channels // 2, in_channels
    H = W = 16          # x spatial
    Hg = Wg = 8         # g spatial (coarser gating signal)

    key = jax.random.PRNGKey(0)
    ks = jax.random.split(key, 12)

    # Deterministic synthetic parameters (shapes match the nn.Module's layers).
    w_theta = 0.1 * jax.random.normal(ks[0], (Cx * 4, mid), jnp.float32)   # theta: (mid, Cx, 2, 2) flattened
    w_phi = 0.1 * jax.random.normal(ks[1], (Cg, mid), jnp.float32)         # phi:   (mid, Cg, 1, 1)
    b_phi = 0.1 * jax.random.normal(ks[2], (1, mid), jnp.float32)
    w_psi = 0.1 * jax.random.normal(ks[3], (mid, 1), jnp.float32)          # psi:   (1, mid, 1, 1)
    b_psi = 0.1 * jax.random.normal(ks[4], (1, 1), jnp.float32)
    w_w = 0.1 * jax.random.normal(ks[5], (Cx, mid), jnp.float32)           # W:     (mid, mid, 1, 1)
    b_w = 0.1 * jax.random.normal(ks[6], (1, mid), jnp.float32)

    # Eval-mode BatchNorm2d, folded into scale/shift.
    bn_gamma = 1.0 + 0.1 * jax.random.normal(ks[7], (mid,), jnp.float32)
    bn_beta = 0.1 * jax.random.normal(ks[8], (mid,), jnp.float32)
    bn_mean = 0.05 * jax.random.normal(ks[9], (mid,), jnp.float32)
    bn_var = 1.0 + 0.1 * jax.random.uniform(ks[10], (mid,), jnp.float32)
    eps = 1e-5
    bn_scale = (bn_gamma / jnp.sqrt(bn_var + eps)).reshape(1, mid)
    bn_shift = (bn_beta - bn_mean * bn_gamma / jnp.sqrt(bn_var + eps)).reshape(1, mid)

    params = dict(w_theta=w_theta, w_phi=w_phi, b_phi=b_phi, w_psi=w_psi, b_psi=b_psi,
                  w_w=w_w, b_w=b_w, bn_scale=bn_scale, bn_shift=bn_shift)

    xk, gk = jax.random.split(ks[11])
    x = jax.random.normal(xk, (B, Cx, H, W), jnp.float32)
    g = jax.random.normal(gk, (B, Cg, Hg, Wg), jnp.float32)

    # One-time host-side preprocessing (fold BN, build interp / tap-selection tables).
    kparams = prepare_kernel_params(params)
    tables = make_gate_tables(H, W, Hg, Wg)
    gate_fn = jax.jit(gate_forward)

    out = jax.block_until_ready(gate_fn(x, g, kparams, tables))
    ref = jax.block_until_ready(gate_reference(x, g, params))

    assert out.shape == (B, mid, H, W), out.shape
    np.testing.assert_allclose(np.asarray(out), np.asarray(ref), atol=1e-4, rtol=1e-4)

    print("KERNEL_OK")
</pallas_src>

<mosaic_0001>
module attributes {stable_mosaic.version = 11 : i64} {
  func.func @_gate_kernel(%arg0: i32, %arg1: memref<1x4x8x32xf32, #tpu.memory_space<vmem>>, %arg2: memref<1x64x8xf32, #tpu.memory_space<vmem>>, %arg3: memref<32x32xf32, #tpu.memory_space<vmem>>, %arg4: memref<8x8xf32, #tpu.memory_space<vmem>>, %arg5: memref<8x8xf32, #tpu.memory_space<vmem>>, %arg6: memref<8x8xf32, #tpu.memory_space<vmem>>, %arg7: memref<8x8xf32, #tpu.memory_space<vmem>>, %arg8: memref<8x16xf32, #tpu.memory_space<vmem>>, %arg9: memref<4x16xf32, #tpu.memory_space<smem>>, %arg10: memref<4x8xf32, #tpu.memory_space<smem>>, %arg11: memref<4x4xf32, #tpu.memory_space<smem>>, %arg12: memref<4xf32, #tpu.memory_space<smem>>, %arg13: memref<4xf32, #tpu.memory_space<smem>>, %arg14: memref<1xf32, #tpu.memory_space<smem>>, %arg15: memref<4xf32, #tpu.memory_space<smem>>, %arg16: memref<1x4x8x32xf32, #tpu.memory_space<vmem>>) attributes {dimension_semantics = [#tpu.dimension_semantics<parallel>], iteration_bounds = array<i64: 2>, scalar_prefetch = 0 : i64, scratch_operands = 0 : i64, tpu.core_type = #tpu.core_type<tc>, window_params = [{transform_indices = @transform_0, window_bounds = array<i64: 1, 4, 8, 32>}, {transform_indices = @transform_1, window_bounds = array<i64: 1, 64, 8>}, {pipeline_mode = #tpu.pipeline_mode<synchronous>, transform_indices = @transform_2, window_bounds = array<i64: 32, 32>}, {pipeline_mode = #tpu.pipeline_mode<synchronous>, transform_indices = @transform_3, window_bounds = array<i64: 8, 8>}, {pipeline_mode = #tpu.pipeline_mode<synchronous>, transform_indices = @transform_4, window_bounds = array<i64: 8, 8>}, {pipeline_mode = #tpu.pipeline_mode<synchronous>, transform_indices = @transform_5, window_bounds = array<i64: 8, 8>}, {pipeline_mode = #tpu.pipeline_mode<synchronous>, transform_indices = @transform_6, window_bounds = array<i64: 8, 8>}, {pipeline_mode = #tpu.pipeline_mode<synchronous>, transform_indices = @transform_7, window_bounds = array<i64: 8, 16>}, {transform_indices = @transform_8, window_bounds = array<i64: 4, 16>}, {transform_indices = @transform_9, window_bounds = array<i64: 4, 8>}, {transform_indices = @transform_10, window_bounds = array<i64: 4, 4>}, {transform_indices = @transform_11, window_bounds = array<i64: 4>}, {transform_indices = @transform_12, window_bounds = array<i64: 4>}, {transform_indices = @transform_13, window_bounds = array<i64: 1>}, {transform_indices = @transform_14, window_bounds = array<i64: 4>}, {transform_indices = @transform_15, window_bounds = array<i64: 1, 4, 8, 32>}]} {
    %c0 = arith.constant 0 : index
    %c0_0 = arith.constant 0 : index
    %0 = vector.load %arg3[%c0, %c0_0] : memref<32x32xf32, #tpu.memory_space<vmem>>, vector<32x32xf32>
    %c0_1 = arith.constant 0 : index
    %c0_2 = arith.constant 0 : index
    %c0_3 = arith.constant 0 : index
    %c0_4 = arith.constant 0 : index
    %1 = vector.load %arg1[%c0_1, %c0_2, %c0_3, %c0_4] : memref<1x4x8x32xf32, #tpu.memory_space<vmem>>, vector<1x1x8x32xf32>
    %2 = vector.shape_cast %1 : vector<1x1x8x32xf32> to vector<8x32xf32>
    %c0_5 = arith.constant 0 : index
    %c1 = arith.constant 1 : index
    %c0_6 = arith.constant 0 : index
    %c0_7 = arith.constant 0 : index
    %3 = vector.load %arg1[%c0_5, %c1, %c0_6, %c0_7] : memref<1x4x8x32xf32, #tpu.memory_space<vmem>>, vector<1x1x8x32xf32>
    %4 = vector.shape_cast %3 : vector<1x1x8x32xf32> to vector<8x32xf32>
    %c0_8 = arith.constant 0 : index
    %c2 = arith.constant 2 : index
    %c0_9 = arith.constant 0 : index
    %c0_10 = arith.constant 0 : index
    %5 = vector.load %arg1[%c0_8, %c2, %c0_9, %c0_10] : memref<1x4x8x32xf32, #tpu.memory_space<vmem>>, vector<1x1x8x32xf32>
    %6 = vector.shape_cast %5 : vector<1x1x8x32xf32> to vector<8x32xf32>
    %c0_11 = arith.constant 0 : index
    %c3 = arith.constant 3 : index
    %c0_12 = arith.constant 0 : index
    %c0_13 = arith.constant 0 : index
    %7 = vector.load %arg1[%c0_11, %c3, %c0_12, %c0_13] : memref<1x4x8x32xf32, #tpu.memory_space<vmem>>, vector<1x1x8x32xf32>
    %8 = vector.shape_cast %7 : vector<1x1x8x32xf32> to vector<8x32xf32>
    %cst = arith.constant dense<0.000000e+00> : vector<8x32xf32>
    %9 = tpu.matmul %2, %0, %cst {dimension_numbers = #tpu.dot_dimension_numbers<[1], [0], [0], [1], [0, 0, 1, 1], [], []>} : vector<8x32xf32>, vector<32x32xf32>, vector<8x32xf32> -> vector<8x32xf32>
    %cst_14 = arith.constant dense<0.000000e+00> : vector<8x32xf32>
    %10 = tpu.matmul %4, %0, %cst_14 {dimension_numbers = #tpu.dot_dimension_numbers<[1], [0], [0], [1], [0, 0, 1, 1], [], []>} : vector<8x32xf32>, vector<32x32xf32>, vector<8x32xf32> -> vector<8x32xf32>
    %cst_15 = arith.constant dense<0.000000e+00> : vector<8x32xf32>
    %11 = tpu.matmul %6, %0, %cst_15 {dimension_numbers = #tpu.dot_dimension_numbers<[1], [0], [0], [1], [0, 0, 1, 1], [], []>} : vector<8x32xf32>, vector<32x32xf32>, vector<8x32xf32> -> vector<8x32xf32>
    %cst_16 = arith.constant dense<0.000000e+00> : vector<8x32xf32>
    %12 = tpu.matmul %8, %0, %cst_16 {dimension_numbers = #tpu.dot_dimension_numbers<[1], [0], [0], [1], [0, 0, 1, 1], [], []>} : vector<8x32xf32>, vector<32x32xf32>, vector<8x32xf32> -> vector<8x32xf32>
    %c0_17 = arith.constant 0 : index
    %c0_18 = arith.constant 0 : index
    %c0_19 = arith.constant 0 : index
    %13 = vector.load %arg2[%c0_17, %c0_18, %c0_19] : memref<1x64x8xf32, #tpu.memory_space<vmem>>, vector<1x64x8xf32>
    %14 = vector.shape_cast %13 : vector<1x64x8xf32> to vector<64x8xf32>
    %c0_20 = arith.constant 0 : index
    %c0_21 = arith.constant 0 : index
    %15 = vector.load %arg5[%c0_20, %c0_21] : memref<8x8xf32, #tpu.memory_space<vmem>>, vector<8x8xf32>
    %cst_22 = arith.constant dense<0.000000e+00> : vector<64x8xf32>
    %16 = tpu.matmul %14, %15, %cst_22 {dimension_numbers = #tpu.dot_dimension_numbers<[1], [0], [0], [1], [0, 0, 1, 1], [], []>} : vector<64x8xf32>, vector<8x8xf32>, vector<64x8xf32> -> vector<64x8xf32>
    %c0_23 = arith.constant 0 : index
    %c0_24 = arith.constant 0 : index
    %17 = vector.load %arg4[%c0_23, %c0_24] : memref<8x8xf32, #tpu.memory_space<vmem>>, vector<8x8xf32>
    %c0_25 = arith.constant 0 : index
    %c0_26 = arith.constant 0 : index
    %18 = memref.load %arg9[%c0_25, %c0_26] : memref<4x16xf32, #tpu.memory_space<smem>>
    %19 = vector.extract_strided_slice %9 {offsets = [0, 0], sizes = [8, 8], strides = [1, 1]} : vector<8x32xf32> to vector<8x8xf32>
    %20 = vector.broadcast %18 : f32 to vector<8x8xf32>
    %21 = arith.mulf %20, %19 : vector<8x8xf32>
    %c0_27 = arith.constant 0 : index
    %c1_28 = arith.constant 1 : index
    %22 = memref.load %arg9[%c0_27, %c1_28] : memref<4x16xf32, #tpu.memory_space<smem>>
    %23 = vector.extract_strided_slice %9 {offsets = [0, 8], sizes = [8, 8], strides = [1, 1]} : vector<8x32xf32> to vector<8x8xf32>
    %24 = vector.broadcast %22 : f32 to vector<8x8xf32>
    %25 = arith.mulf %24, %23 : vector<8x8xf32>
    %26 = arith.addf %21, %25 : vector<8x8xf32>
    %c0_29 = arith.constant 0 : index
    %c2_30 = arith.constant 2 : index
    %27 = memref.load %arg9[%c0_29, %c2_30] : memref<4x16xf32, #tpu.memory_space<smem>>
    %28 = vector.extract_strided_slice %9 {offsets = [0, 16], sizes = [8, 8], strides = [1, 1]} : vector<8x32xf32> to vector<8x8xf32>
    %29 = vector.broadcast %27 : f32 to vector<8x8xf32>
    %30 = arith.mulf %29, %28 : vector<8x8xf32>
    %31 = arith.addf %26, %30 : vector<8x8xf32>
    %c0_31 = arith.constant 0 : index
    %c3_32 = arith.constant 3 : index
    %32 = memref.load %arg9[%c0_31, %c3_32] : memref<4x16xf32, #tpu.memory_space<smem>>
    %33 = vector.extract_strided_slice %9 {offsets = [0, 24], sizes = [8, 8], strides = [1, 1]} : vector<8x32xf32> to vector<8x8xf32>
    %34 = vector.broadcast %32 : f32 to vector<8x8xf32>
    %35 = arith.mulf %34, %33 : vector<8x8xf32>
    %36 = arith.addf %31, %35 : vector<8x8xf32>
    %c0_33 = arith.constant 0 : index
    %c4 = arith.constant 4 : index
    %37 = memref.load %arg9[%c0_33, %c4] : memref<4x16xf32, #tpu.memory_space<smem>>
    %38 = vector.extract_strided_slice %10 {offsets = [0, 0], sizes = [8, 8], strides = [1, 1]} : vector<8x32xf32> to vector<8x8xf32>
    %39 = vector.broadcast %37 : f32 to vector<8x8xf32>
    %40 = arith.mulf %39, %38 : vector<8x8xf32>
    %41 = arith.addf %36, %40 : vector<8x8xf32>
    %c0_34 = arith.constant 0 : index
    %c5 = arith.constant 5 : index
    %42 = memref.load %arg9[%c0_34, %c5] : memref<4x16xf32, #tpu.memory_space<smem>>
    %43 = vector.extract_strided_slice %10 {offsets = [0, 8], sizes = [8, 8], strides = [1, 1]} : vector<8x32xf32> to vector<8x8xf32>
    %44 = vector.broadcast %42 : f32 to vector<8x8xf32>
    %45 = arith.mulf %44, %43 : vector<8x8xf32>
    %46 = arith.addf %41, %45 : vector<8x8xf32>
    %c0_35 = arith.constant 0 : index
    %c6 = arith.constant 6 : index
    %47 = memref.load %arg9[%c0_35, %c6] : memref<4x16xf32, #tpu.memory_space<smem>>
    %48 = vector.extract_strided_slice %10 {offsets = [0, 16], sizes = [8, 8], strides = [1, 1]} : vector<8x32xf32> to vector<8x8xf32>
    %49 = vector.broadcast %47 : f32 to vector<8x8xf32>
    %50 = arith.mulf %49, %48 : vector<8x8xf32>
    %51 = arith.addf %46, %50 : vector<8x8xf32>
    %c0_36 = arith.constant 0 : index
    %c7 = arith.constant 7 : index
    %52 = memref.load %arg9[%c0_36, %c7] : memref<4x16xf32, #tpu.memory_space<smem>>
    %53 = vector.extract_strided_slice %10 {offsets = [0, 24], sizes = [8, 8], strides = [1, 1]} : vector<8x32xf32> to vector<8x8xf32>
    %54 = vector.broadcast %52 : f32 to vector<8x8xf32>
    %55 = arith.mulf %54, %53 : vector<8x8xf32>
    %56 = arith.addf %51, %55 : vector<8x8xf32>
    %c0_37 = arith.constant 0 : index
    %c8 = arith.constant 8 : index
    %57 = memref.load %arg9[%c0_37, %c8] : memref<4x16xf32, #tpu.memory_space<smem>>
    %58 = vector.extract_strided_slice %11 {offsets = [0, 0], sizes = [8, 8], strides = [1, 1]} : vector<8x32xf32> to vector<8x8xf32>
    %59 = vector.broadcast %57 : f32 to vector<8x8xf32>
    %60 = arith.mulf %59, %58 : vector<8x8xf32>
    %61 = arith.addf %56, %60 : vector<8x8xf32>
    %c0_38 = arith.constant 0 : index
    %c9 = arith.constant 9 : index
    %62 = memref.load %arg9[%c0_38, %c9] : memref<4x16xf32, #tpu.memory_space<smem>>
    %63 = vector.extract_strided_slice %11 {offsets = [0, 8], sizes = [8, 8], strides = [1, 1]} : vector<8x32xf32> to vector<8x8xf32>
    %64 = vector.broadcast %62 : f32 to vector<8x8xf32>
    %65 = arith.mulf %64, %63 : vector<8x8xf32>
    %66 = arith.addf %61, %65 : vector<8x8xf32>
    %c0_39 = arith.constant 0 : index
    %c10 = arith.constant 10 : index
    %67 = memref.load %arg9[%c0_39, %c10] : memref<4x16xf32, #tpu.memory_space<smem>>
    %68 = vector.extract_strided_slice %11 {offsets = [0, 16], sizes = [8, 8], strides = [1, 1]} : vector<8x32xf32> to vector<8x8xf32>
    %69 = vector.broadcast %67 : f32 to vector<8x8xf32>
    %70 = arith.mulf %69, %68 : vector<8x8xf32>
    %71 = arith.addf %66, %70 : vector<8x8xf32>
    %c0_40 = arith.constant 0 : index
    %c11 = arith.constant 11 : index
    %72 = memref.load %arg9[%c0_40, %c11] : memref<4x16xf32, #tpu.memory_space<smem>>
    %73 = vector.extract_strided_slice %11 {offsets = [0, 24], sizes = [8, 8], strides = [1, 1]} : vector<8x32xf32> to vector<8x8xf32>
    %74 = vector.broadcast %72 : f32 to vector<8x8xf32>
    %75 = arith.mulf %74, %73 : vector<8x8xf32>
    %76 = arith.addf %71, %75 : vector<8x8xf32>
    %c0_41 = arith.constant 0 : index
    %c12 = arith.constant 12 : index
    %77 = memref.load %arg9[%c0_41, %c12] : memref<4x16xf32, #tpu.memory_space<smem>>
    %78 = vector.extract_strided_slice %12 {offsets = [0, 0], sizes = [8, 8], strides = [1, 1]} : vector<8x32xf32> to vector<8x8xf32>
    %79 = vector.broadcast %77 : f32 to vector<8x8xf32>
    %80 = arith.mulf %79, %78 : vector<8x8xf32>
    %81 = arith.addf %76, %80 : vector<8x8xf32>
    %c0_42 = arith.constant 0 : index
    %c13 = arith.constant 13 : index
    %82 = memref.load %arg9[%c0_42, %c13] : memref<4x16xf32, #tpu.memory_space<smem>>
    %83 = vector.extract_strided_slice %12 {offsets = [0, 8], sizes = [8, 8], strides = [1, 1]} : vector<8x32xf32> to vector<8x8xf32>
    %84 = vector.broadcast %82 : f32 to vector<8x8xf32>
    %85 = arith.mulf %84, %83 : vector<8x8xf32>
    %86 = arith.addf %81, %85 : vector<8x8xf32>
    %c0_43 = arith.constant 0 : index
    %c14 = arith.constant 14 : index
    %87 = memref.load %arg9[%c0_43, %c14] : memref<4x16xf32, #tpu.memory_space<smem>>
    %88 = vector.extract_strided_slice %12 {offsets = [0, 16], sizes = [8, 8], strides = [1, 1]} : vector<8x32xf32> to vector<8x8xf32>
    %89 = vector.broadcast %87 : f32 to vector<8x8xf32>
    %90 = arith.mulf %89, %88 : vector<8x8xf32>
    %91 = arith.addf %86, %90 : vector<8x8xf32>
    %c0_44 = arith.constant 0 : index
    %c15 = arith.constant 15 : index
    %92 = memref.load %arg9[%c0_44, %c15] : memref<4x16xf32, #tpu.memory_space<smem>>
    %93 = vector.extract_strided_slice %12 {offsets = [0, 24], sizes = [8, 8], strides = [1, 1]} : vector<8x32xf32> to vector<8x8xf32>
    %94 = vector.broadcast %92 : f32 to vector<8x8xf32>
    %95 = arith.mulf %94, %93 : vector<8x8xf32>
    %96 = arith.addf %91, %95 : vector<8x8xf32>
    %c0_45 = arith.constant 0 : index
    %c0_46 = arith.constant 0 : index
    %97 = memref.load %arg10[%c0_45, %c0_46] : memref<4x8xf32, #tpu.memory_space<smem>>
    %98 = vector.extract_strided_slice %16 {offsets = [0, 0], sizes = [8, 8], strides = [1, 1]} : vector<64x8xf32> to vector<8x8xf32>
    %99 = vector.broadcast %97 : f32 to vector<8x8xf32>
    %100 = arith.mulf %99, %98 : vector<8x8xf32>
    %c0_47 = arith.constant 0 : index
    %c1_48 = arith.constant 1 : index
    %101 = memref.load %arg10[%c0_47, %c1_48] : memref<4x8xf32, #tpu.memory_space<smem>>
    %102 = vector.extract_strided_slice %16 {offsets = [8, 0], sizes = [8, 8], strides = [1, 1]} : vector<64x8xf32> to vector<8x8xf32>
    %103 = vector.broadcast %101 : f32 to vector<8x8xf32>
    %104 = arith.mulf %103, %102 : vector<8x8xf32>
    %105 = arith.addf %100, %104 : vector<8x8xf32>
    %c0_49 = arith.constant 0 : index
    %c2_50 = arith.constant 2 : index
    %106 = memref.load %arg10[%c0_49, %c2_50] : memref<4x8xf32, #tpu.memory_space<smem>>
    %107 = vector.extract_strided_slice %16 {offsets = [16, 0], sizes = [8, 8], strides = [1, 1]} : vector<64x8xf32> to vector<8x8xf32>
    %108 = vector.broadcast %106 : f32 to vector<8x8xf32>
    %109 = arith.mulf %108, %107 : vector<8x8xf32>
    %110 = arith.addf %105, %109 : vector<8x8xf32>
    %c0_51 = arith.constant 0 : index
    %c3_52 = arith.constant 3 : index
    %111 = memref.load %arg10[%c0_51, %c3_52] : memref<4x8xf32, #tpu.memory_space<smem>>
    %112 = vector.extract_strided_slice %16 {offsets = [24, 0], sizes = [8, 8], strides = [1, 1]} : vector<64x8xf32> to vector<8x8xf32>
    %113 = vector.broadcast %111 : f32 to vector<8x8xf32>
    %114 = arith.mulf %113, %112 : vector<8x8xf32>
    %115 = arith.addf %110, %114 : vector<8x8xf32>
    %c0_53 = arith.constant 0 : index
    %c4_54 = arith.constant 4 : index
    %116 = memref.load %arg10[%c0_53, %c4_54] : memref<4x8xf32, #tpu.memory_space<smem>>
    %117 = vector.extract_strided_slice %16 {offsets = [32, 0], sizes = [8, 8], strides = [1, 1]} : vector<64x8xf32> to vector<8x8xf32>
    %118 = vector.broadcast %116 : f32 to vector<8x8xf32>
    %119 = arith.mulf %118, %117 : vector<8x8xf32>
    %120 = arith.addf %115, %119 : vector<8x8xf32>
    %c0_55 = arith.constant 0 : index
    %c5_56 = arith.constant 5 : index
    %121 = memref.load %arg10[%c0_55, %c5_56] : memref<4x8xf32, #tpu.memory_space<smem>>
    %122 = vector.extract_strided_slice %16 {offsets = [40, 0], sizes = [8, 8], strides = [1, 1]} : vector<64x8xf32> to vector<8x8xf32>
    %123 = vector.broadcast %121 : f32 to vector<8x8xf32>
    %124 = arith.mulf %123, %122 : vector<8x8xf32>
    %125 = arith.addf %120, %124 : vector<8x8xf32>
    %c0_57 = arith.constant 0 : index
    %c6_58 = arith.constant 6 : index
    %126 = memref.load %arg10[%c0_57, %c6_58] : memref<4x8xf32, #tpu.memory_space<smem>>
    %127 = vector.extract_strided_slice %16 {offsets = [48, 0], sizes = [8, 8], strides = [1, 1]} : vector<64x8xf32> to vector<8x8xf32>
    %128 = vector.broadcast %126 : f32 to vector<8x8xf32>
    %129 = arith.mulf %128, %127 : vector<8x8xf32>
    %130 = arith.addf %125, %129 : vector<8x8xf32>
    %c0_59 = arith.constant 0 : index
    %c7_60 = arith.constant 7 : index
    %131 = memref.load %arg10[%c0_59, %c7_60] : memref<4x8xf32, #tpu.memory_space<smem>>
    %132 = vector.extract_strided_slice %16 {offsets = [56, 0], sizes = [8, 8], strides = [1, 1]} : vector<64x8xf32> to vector<8x8xf32>
    %133 = vector.broadcast %131 : f32 to vector<8x8xf32>
    %134 = arith.mulf %133, %132 : vector<8x8xf32>
    %135 = arith.addf %130, %134 : vector<8x8xf32>
    %cst_61 = arith.constant dense<0.000000e+00> : vector<8x8xf32>
    %136 = tpu.matmul %17, %135, %cst_61 {dimension_numbers = #tpu.dot_dimension_numbers<[1], [0], [0], [1], [0, 0, 1, 1], [], []>} : vector<8x8xf32>, vector<8x8xf32>, vector<8x8xf32> -> vector<8x8xf32>
    %137 = arith.addf %96, %136 : vector<8x8xf32>
    %c0_62 = arith.constant 0 : index
    %138 = memref.load %arg12[%c0_62] : memref<4xf32, #tpu.memory_space<smem>>
    %139 = vector.broadcast %138 : f32 to vector<8x8xf32>
    %140 = arith.addf %137, %139 : vector<8x8xf32>
    %cst_63 = arith.constant 0.000000e+00 : f32
    %141 = vector.broadcast %cst_63 : f32 to vector<8x8xf32>
    %142 = arith.maximumf %140, %141 : vector<8x8xf32>
    %c0_64 = arith.constant 0 : index
    %143 = memref.load %arg13[%c0_64] : memref<4xf32, #tpu.memory_space<smem>>
    %144 = vector.broadcast %143 : f32 to vector<8x8xf32>
    %145 = arith.mulf %144, %142 : vector<8x8xf32>
    %c1_65 = arith.constant 1 : index
    %c0_66 = arith.constant 0 : index
    %146 = memref.load %arg9[%c1_65, %c0_66] : memref<4x16xf32, #tpu.memory_space<smem>>
    %147 = vector.extract_strided_slice %9 {offsets = [0, 0], sizes = [8, 8], strides = [1, 1]} : vector<8x32xf32> to vector<8x8xf32>
    %148 = vector.broadcast %146 : f32 to vector<8x8xf32>
    %149 = arith.mulf %148, %147 : vector<8x8xf32>
    %c1_67 = arith.constant 1 : index
    %c1_68 = arith.constant 1 : index
    %150 = memref.load %arg9[%c1_67, %c1_68] : memref<4x16xf32, #tpu.memory_space<smem>>
    %151 = vector.extract_strided_slice %9 {offsets = [0, 8], sizes = [8, 8], strides = [1, 1]} : vector<8x32xf32> to vector<8x8xf32>
    %152 = vector.broadcast %150 : f32 to vector<8x8xf32>
    %153 = arith.mulf %152, %151 : vector<8x8xf32>
    %154 = arith.addf %149, %153 : vector<8x8xf32>
    %c1_69 = arith.constant 1 : index
    %c2_70 = arith.constant 2 : index
    %155 = memref.load %arg9[%c1_69, %c2_70] : memref<4x16xf32, #tpu.memory_space<smem>>
    %156 = vector.extract_strided_slice %9 {offsets = [0, 16], sizes = [8, 8], strides = [1, 1]} : vector<8x32xf32> to vector<8x8xf32>
    %157 = vector.broadcast %155 : f32 to vector<8x8xf32>
    %158 = arith.mulf %157, %156 : vector<8x8xf32>
    %159 = arith.addf %154, %158 : vector<8x8xf32>
    %c1_71 = arith.constant 1 : index
    %c3_72 = arith.constant 3 : index
    %160 = memref.load %arg9[%c1_71, %c3_72] : memref<4x16xf32, #tpu.memory_space<smem>>
    %161 = vector.extract_strided_slice %9 {offsets = [0, 24], sizes = [8, 8], strides = [1, 1]} : vector<8x32xf32> to vector<8x8xf32>
    %162 = vector.broadcast %160 : f32 to vector<8x8xf32>
    %163 = arith.mulf %162, %161 : vector<8x8xf32>
    %164 = arith.addf %159, %163 : vector<8x8xf32>
    %c1_73 = arith.constant 1 : index
    %c4_74 = arith.constant 4 : index
    %165 = memref.load %arg9[%c1_73, %c4_74] : memref<4x16xf32, #tpu.memory_space<smem>>
    %166 = vector.extract_strided_slice %10 {offsets = [0, 0], sizes = [8, 8], strides = [1, 1]} : vector<8x32xf32> to vector<8x8xf32>
    %167 = vector.broadcast %165 : f32 to vector<8x8xf32>
    %168 = arith.mulf %167, %166 : vector<8x8xf32>
    %169 = arith.addf %164, %168 : vector<8x8xf32>
    %c1_75 = arith.constant 1 : index
    %c5_76 = arith.constant 5 : index
    %170 = memref.load %arg9[%c1_75, %c5_76] : memref<4x16xf32, #tpu.memory_space<smem>>
    %171 = vector.extract_strided_slice %10 {offsets = [0, 8], sizes = [8, 8], strides = [1, 1]} : vector<8x32xf32> to vector<8x8xf32>
    %172 = vector.broadcast %170 : f32 to vector<8x8xf32>
    %173 = arith.mulf %172, %171 : vector<8x8xf32>
    %174 = arith.addf %169, %173 : vector<8x8xf32>
    %c1_77 = arith.constant 1 : index
    %c6_78 = arith.constant 6 : index
    %175 = memref.load %arg9[%c1_77, %c6_78] : memref<4x16xf32, #tpu.memory_space<smem>>
    %176 = vector.extract_strided_slice %10 {offsets = [0, 16], sizes = [8, 8], strides = [1, 1]} : vector<8x32xf32> to vector<8x8xf32>
    %177 = vector.broadcast %175 : f32 to vector<8x8xf32>
    %178 = arith.mulf %177, %176 : vector<8x8xf32>
    %179 = arith.addf %174, %178 : vector<8x8xf32>
    %c1_79 = arith.constant 1 : index
    %c7_80 = arith.constant 7 : index
    %180 = memref.load %arg9[%c1_79, %c7_80] : memref<4x16xf32, #tpu.memory_space<smem>>
    %181 = vector.extract_strided_slice %10 {offsets = [0, 24], sizes = [8, 8], strides = [1, 1]} : vector<8x32xf32> to vector<8x8xf32>
    %182 = vector.broadcast %180 : f32 to vector<8x8xf32>
    %183 = arith.mulf %182, %181 : vector<8x8xf32>
    %184 = arith.addf %179, %183 : vector<8x8xf32>
    %c1_81 = arith.constant 1 : index
    %c8_82 = arith.constant 8 : index
    %185 = memref.load %arg9[%c1_81, %c8_82] : memref<4x16xf32, #tpu.memory_space<smem>>
    %186 = vector.extract_strided_slice %11 {offsets = [0, 0], sizes = [8, 8], strides = [1, 1]} : vector<8x32xf32> to vector<8x8xf32>
    %187 = vector.broadcast %185 : f32 to vector<8x8xf32>
    %188 = arith.mulf %187, %186 : vector<8x8xf32>
    %189 = arith.addf %184, %188 : vector<8x8xf32>
    %c1_83 = arith.constant 1 : index
    %c9_84 = arith.constant 9 : index
    %190 = memref.load %arg9[%c1_83, %c9_84] : memref<4x16xf32, #tpu.memory_space<smem>>
    %191 = vector.extract_strided_slice %11 {offsets = [0, 8], sizes = [8, 8], strides = [1, 1]} : vector<8x32xf32> to vector<8x8xf32>
    %192 = vector.broadcast %190 : f32 to vector<8x8xf32>
    %193 = arith.mulf %192, %191 : vector<8x8xf32>
    %194 = arith.addf %189, %193 : vector<8x8xf32>
    %c1_85 = arith.constant 1 : index
    %c10_86 = arith.constant 10 : index
    %195 = memref.load %arg9[%c1_85, %c10_86] : memref<4x16xf32, #tpu.memory_space<smem>>
    %196 = vector.extract_strided_slice %11 {offsets = [0, 16], sizes = [8, 8], strides = [1, 1]} : vector<8x32xf32> to vector<8x8xf32>
    %197 = vector.broadcast %195 : f32 to vector<8x8xf32>
    %198 = arith.mulf %197, %196 : vector<8x8xf32>
    %199 = arith.addf %194, %198 : vector<8x8xf32>
    %c1_87 = arith.constant 1 : index
    %c11_88 = arith.constant 11 : index
    %200 = memref.load %arg9[%c1_87, %c11_88] : memref<4x16xf32, #tpu.memory_space<smem>>
    %201 = vector.extract_strided_slice %11 {offsets = [0, 24], sizes = [8, 8], strides = [1, 1]} : vector<8x32xf32> to vector<8x8xf32>
    %202 = vector.broadcast %200 : f32 to vector<8x8xf32>
    %203 = arith.mulf %202, %201 : vector<8x8xf32>
    %204 = arith.addf %199, %203 : vector<8x8xf32>
    %c1_89 = arith.constant 1 : index
    %c12_90 = arith.constant 12 : index
    %205 = memref.load %arg9[%c1_89, %c12_90] : memref<4x16xf32, #tpu.memory_space<smem>>
    %206 = vector.extract_strided_slice %12 {offsets = [0, 0], sizes = [8, 8], strides = [1, 1]} : vector<8x32xf32> to vector<8x8xf32>
    %207 = vector.broadcast %205 : f32 to vector<8x8xf32>
    %208 = arith.mulf %207, %206 : vector<8x8xf32>
    %209 = arith.addf %204, %208 : vector<8x8xf32>
    %c1_91 = arith.constant 1 : index
    %c13_92 = arith.constant 13 : index
    %210 = memref.load %arg9[%c1_91, %c13_92] : memref<4x16xf32, #tpu.memory_space<smem>>
    %211 = vector.extract_strided_slice %12 {offsets = [0, 8], sizes = [8, 8], strides = [1, 1]} : vector<8x32xf32> to vector<8x8xf32>
    %212 = vector.broadcast %210 : f32 to vector<8x8xf32>
    %213 = arith.mulf %212, %211 : vector<8x8xf32>
    %214 = arith.addf %209, %213 : vector<8x8xf32>
    %c1_93 = arith.constant 1 : index
    %c14_94 = arith.constant 14 : index
    %215 = memref.load %arg9[%c1_93, %c14_94] : memref<4x16xf32, #tpu.memory_space<smem>>
    %216 = vector.extract_strided_slice %12 {offsets = [0, 16], sizes = [8, 8], strides = [1, 1]} : vector<8x32xf32> to vector<8x8xf32>
    %217 = vector.broadcast %215 : f32 to vector<8x8xf32>
    %218 = arith.mulf %217, %216 : vector<8x8xf32>
    %219 = arith.addf %214, %218 : vector<8x8xf32>
    %c1_95 = arith.constant 1 : index
    %c15_96 = arith.constant 15 : index
    %220 = memref.load %arg9[%c1_95, %c15_96] : memref<4x16xf32, #tpu.memory_space<smem>>
    %221 = vector.extract_strided_slice %12 {offsets = [0, 24], sizes = [8, 8], strides = [1, 1]} : vector<8x32xf32> to vector<8x8xf32>
    %222 = vector.broadcast %220 : f32 to vector<8x8xf32>
    %223 = arith.mulf %222, %221 : vector<8x8xf32>
    %224 = arith.addf %219, %223 : vector<8x8xf32>
    %c1_97 = arith.constant 1 : index
    %c0_98 = arith.constant 0 : index
    %225 = memref.load %arg10[%c1_97, %c0_98] : memref<4x8xf32, #tpu.memory_space<smem>>
    %226 = vector.extract_strided_slice %16 {offsets = [0, 0], sizes = [8, 8], strides = [1, 1]} : vector<64x8xf32> to vector<8x8xf32>
    %227 = vector.broadcast %225 : f32 to vector<8x8xf32>
    %228 = arith.mulf %227, %226 : vector<8x8xf32>
    %c1_99 = arith.constant 1 : index
    %c1_100 = arith.constant 1 : index
    %229 = memref.load %arg10[%c1_99, %c1_100] : memref<4x8xf32, #tpu.memory_space<smem>>
    %230 = vector.extract_strided_slice %16 {offsets = [8, 0], sizes = [8, 8], strides = [1, 1]} : vector<64x8xf32> to vector<8x8xf32>
    %231 = vector.broadcast %229 : f32 to vector<8x8xf32>
    %232 = arith.mulf %231, %230 : vector<8x8xf32>
    %233 = arith.addf %228, %232 : vector<8x8xf32>
    %c1_101 = arith.constant 1 : index
    %c2_102 = arith.constant 2 : index
    %234 = memref.load %arg10[%c1_101, %c2_102] : memref<4x8xf32, #tpu.memory_space<smem>>
    %235 = vector.extract_strided_slice %16 {offsets = [16, 0], sizes = [8, 8], strides = [1, 1]} : vector<64x8xf32> to vector<8x8xf32>
    %236 = vector.broadcast %234 : f32 to vector<8x8xf32>
    %237 = arith.mulf %236, %235 : vector<8x8xf32>
    %238 = arith.addf %233, %237 : vector<8x8xf32>
    %c1_103 = arith.constant 1 : index
    %c3_104 = arith.constant 3 : index
    %239 = memref.load %arg10[%c1_103, %c3_104] : memref<4x8xf32, #tpu.memory_space<smem>>
    %240 = vector.extract_strided_slice %16 {offsets = [24, 0], sizes = [8, 8], strides = [1, 1]} : vector<64x8xf32> to vector<8x8xf32>
    %241 = vector.broadcast %239 : f32 to vector<8x8xf32>
    %242 = arith.mulf %241, %240 : vector<8x8xf32>
    %243 = arith.addf %238, %242 : vector<8x8xf32>
    %c1_105 = arith.constant 1 : index
    %c4_106 = arith.constant 4 : index
    %244 = memref.load %arg10[%c1_105, %c4_106] : memref<4x8xf32, #tpu.memory_space<smem>>
    %245 = vector.extract_strided_slice %16 {offsets = [32, 0], sizes = [8, 8], strides = [1, 1]} : vector<64x8xf32> to vector<8x8xf32>
    %246 = vector.broadcast %244 : f32 to vector<8x8xf32>
    %247 = arith.mulf %246, %245 : vector<8x8xf32>
    %248 = arith.addf %243, %247 : vector<8x8xf32>
    %c1_107 = arith.constant 1 : index
    %c5_108 = arith.constant 5 : index
    %249 = memref.load %arg10[%c1_107, %c5_108] : memref<4x8xf32, #tpu.memory_space<smem>>
    %250 = vector.extract_strided_slice %16 {offsets = [40, 0], sizes = [8, 8], strides = [1, 1]} : vector<64x8xf32> to vector<8x8xf32>
    %251 = vector.broadcast %249 : f32 to vector<8x8xf32>
    %252 = arith.mulf %251, %250 : vector<8x8xf32>
    %253 = arith.addf %248, %252 : vector<8x8xf32>
    %c1_109 = arith.constant 1 : index
    %c6_110 = arith.constant 6 : index
    %254 = memref.load %arg10[%c1_109, %c6_110] : memref<4x8xf32, #tpu.memory_space<smem>>
    %255 = vector.extract_strided_slice %16 {offsets = [48, 0], sizes = [8, 8], strides = [1, 1]} : vector<64x8xf32> to vector<8x8xf32>
    %256 = vector.broadcast %254 : f32 to vector<8x8xf32>
    %257 = arith.mulf %256, %255 : vector<8x8xf32>
    %258 = arith.addf %253, %257 : vector<8x8xf32>
    %c1_111 = arith.constant 1 : index
    %c7_112 = arith.constant 7 : index
    %259 = memref.load %arg10[%c1_111, %c7_112] : memref<4x8xf32, #tpu.memory_space<smem>>
    %260 = vector.extract_strided_slice %16 {offsets = [56, 0], sizes = [8, 8], strides = [1, 1]} : vector<64x8xf32> to vector<8x8xf32>
    %261 = vector.broadcast %259 : f32 to vector<8x8xf32>
    %262 = arith.mulf %261, %260 : vector<8x8xf32>
    %263 = arith.addf %258, %262 : vector<8x8xf32>
    %cst_113 = arith.constant dense<0.000000e+00> : vector<8x8xf32>
    %264 = tpu.matmul %17, %263, %cst_113 {dimension_numbers = #tpu.dot_dimension_numbers<[1], [0], [0], [1], [0, 0, 1, 1], [], []>} : vector<8x8xf32>, vector<8x8xf32>, vector<8x8xf32> -> vector<8x8xf32>
    %265 = arith.addf %224, %264 : vector<8x8xf32>
    %c1_114 = arith.constant 1 : index
    %266 = memref.load %arg12[%c1_114] : memref<4xf32, #tpu.memory_space<smem>>
    %267 = vector.broadcast %266 : f32 to vector<8x8xf32>
    %268 = arith.addf %265, %267 : vector<8x8xf32>
    %cst_115 = arith.constant 0.000000e+00 : f32
    %269 = vector.broadcast %cst_115 : f32 to vector<8x8xf32>
    %270 = arith.maximumf %268, %269 : vector<8x8xf32>
    %c1_116 = arith.constant 1 : index
    %271 = memref.load %arg13[%c1_116] : memref<4xf32, #tpu.memory_space<smem>>
    %272 = vector.broadcast %271 : f32 to vector<8x8xf32>
    %273 = arith.mulf %272, %270 : vector<8x8xf32>
    %274 = arith.addf %145, %273 : vector<8x8xf32>
    %c2_117 = arith.constant 2 : index
    %c0_118 = arith.constant 0 : index
    %275 = memref.load %arg9[%c2_117, %c0_118] : memref<4x16xf32, #tpu.memory_space<smem>>
    %276 = vector.extract_strided_slice %9 {offsets = [0, 0], sizes = [8, 8], strides = [1, 1]} : vector<8x32xf32> to vector<8x8xf32>
    %277 = vector.broadcast %275 : f32 to vector<8x8xf32>
    %278 = arith.mulf %277, %276 : vector<8x8xf32>
    %c2_119 = arith.constant 2 : index
    %c1_120 = arith.constant 1 : index
    %279 = memref.load %arg9[%c2_119, %c1_120] : memref<4x16xf32, #tpu.memory_space<smem>>
    %280 = vector.extract_strided_slice %9 {offsets = [0, 8], sizes = [8, 8], strides = [1, 1]} : vector<8x32xf32> to vector<8x8xf32>
    %281 = vector.broadcast %279 : f32 to vector<8x8xf32>
    %282 = arith.mulf %281, %280 : vector<8x8xf32>
    %283 = arith.addf %278, %282 : vector<8x8xf32>
    %c2_121 = arith.constant 2 : index
    %c2_122 = arith.constant 2 : index
    %284 = memref.load %arg9[%c2_121, %c2_122] : memref<4x16xf32, #tpu.memory_space<smem>>
    %285 = vector.extract_strided_slice %9 {offsets = [0, 16], sizes = [8, 8], strides = [1, 1]} : vector<8x32xf32> to vector<8x8xf32>
    %286 = vector.broadcast %284 : f32 to vector<8x8xf32>
    %287 = arith.mulf %286, %285 : vector<8x8xf32>
    %288 = arith.addf %283, %287 : vector<8x8xf32>
    %c2_123 = arith.constant 2 : index
    %c3_124 = arith.constant 3 : index
    %289 = memref.load %arg9[%c2_123, %c3_124] : memref<4x16xf32, #tpu.memory_space<smem>>
    %290 = vector.extract_strided_slice %9 {offsets = [0, 24], sizes = [8, 8], strides = [1, 1]} : vector<8x32xf32> to vector<8x8xf32>
    %291 = vector.broadcast %289 : f32 to vector<8x8xf32>
    %292 = arith.mulf %291, %290 : vector<8x8xf32>
    %293 = arith.addf %288, %292 : vector<8x8xf32>
    %c2_125 = arith.constant 2 : index
    %c4_126 = arith.constant 4 : index
    %294 = memref.load %arg9[%c2_125, %c4_126] : memref<4x16xf32, #tpu.memory_space<smem>>
    %295 = vector.extract_strided_slice %10 {offsets = [0, 0], sizes = [8, 8], strides = [1, 1]} : vector<8x32xf32> to vector<8x8xf32>
    %296 = vector.broadcast %294 : f32 to vector<8x8xf32>
    %297 = arith.mulf %296, %295 : vector<8x8xf32>
    %298 = arith.addf %293, %297 : vector<8x8xf32>
    %c2_127 = arith.constant 2 : index
    %c5_128 = arith.constant 5 : index
    %299 = memref.load %arg9[%c2_127, %c5_128] : memref<4x16xf32, #tpu.memory_space<smem>>
    %300 = vector.extract_strided_slice %10 {offsets = [0, 8], sizes = [8, 8], strides = [1, 1]} : vector<8x32xf32> to vector<8x8xf32>
    %301 = vector.broadcast %299 : f32 to vector<8x8xf32>
    %302 = arith.mulf %301, %300 : vector<8x8xf32>
    %303 = arith.addf %298, %302 : vector<8x8xf32>
    %c2_129 = arith.constant 2 : index
    %c6_130 = arith.constant 6 : index
    %304 = memref.load %arg9[%c2_129, %c6_130] : memref<4x16xf32, #tpu.memory_space<smem>>
    %305 = vector.extract_strided_slice %10 {offsets = [0, 16], sizes = [8, 8], strides = [1, 1]} : vector<8x32xf32> to vector<8x8xf32>
    %306 = vector.broadcast %304 : f32 to vector<8x8xf32>
    %307 = arith.mulf %306, %305 : vector<8x8xf32>
    %308 = arith.addf %303, %307 : vector<8x8xf32>
    %c2_131 = arith.constant 2 : index
    %c7_132 = arith.constant 7 : index
    %309 = memref.load %arg9[%c2_131, %c7_132] : memref<4x16xf32, #tpu.memory_space<smem>>
    %310 = vector.extract_strided_slice %10 {offsets = [0, 24], sizes = [8, 8], strides = [1, 1]} : vector<8x32xf32> to vector<8x8xf32>
    %311 = vector.broadcast %309 : f32 to vector<8x8xf32>
    %312 = arith.mulf %311, %310 : vector<8x8xf32>
    %313 = arith.addf %308, %312 : vector<8x8xf32>
    %c2_133 = arith.constant 2 : index
    %c8_134 = arith.constant 8 : index
    %314 = memref.load %arg9[%c2_133, %c8_134] : memref<4x16xf32, #tpu.memory_space<smem>>
    %315 = vector.extract_strided_slice %11 {offsets = [0, 0], sizes = [8, 8], strides = [1, 1]} : vector<8x32xf32> to vector<8x8xf32>
    %316 = vector.broadcast %314 : f32 to vector<8x8xf32>
    %317 = arith.mulf %316, %315 : vector<8x8xf32>
    %318 = arith.addf %313, %317 : vector<8x8xf32>
    %c2_135 = arith.constant 2 : index
    %c9_136 = arith.constant 9 : index
    %319 = memref.load %arg9[%c2_135, %c9_136] : memref<4x16xf32, #tpu.memory_space<smem>>
    %320 = vector.extract_strided_slice %11 {offsets = [0, 8], sizes = [8, 8], strides = [1, 1]} : vector<8x32xf32> to vector<8x8xf32>
    %321 = vector.broadcast %319 : f32 to vector<8x8xf32>
    %322 = arith.mulf %321, %320 : vector<8x8xf32>
    %323 = arith.addf %318, %322 : vector<8x8xf32>
    %c2_137 = arith.constant 2 : index
    %c10_138 = arith.constant 10 : index
    %324 = memref.load %arg9[%c2_137, %c10_138] : memref<4x16xf32, #tpu.memory_space<smem>>
    %325 = vector.extract_strided_slice %11 {offsets = [0, 16], sizes = [8, 8], strides = [1, 1]} : vector<8x32xf32> to vector<8x8xf32>
    %326 = vector.broadcast %324 : f32 to vector<8x8xf32>
    %327 = arith.mulf %326, %325 : vector<8x8xf32>
    %328 = arith.addf %323, %327 : vector<8x8xf32>
    %c2_139 = arith.constant 2 : index
    %c11_140 = arith.constant 11 : index
    %329 = memref.load %arg9[%c2_139, %c11_140] : memref<4x16xf32, #tpu.memory_space<smem>>
    %330 = vector.extract_strided_slice %11 {offsets = [0, 24], sizes = [8, 8], strides = [1, 1]} : vector<8x32xf32> to vector<8x8xf32>
    %331 = vector.broadcast %329 : f32 to vector<8x8xf32>
    %332 = arith.mulf %331, %330 : vector<8x8xf32>
    %333 = arith.addf %328, %332 : vector<8x8xf32>
    %c2_141 = arith.constant 2 : index
    %c12_142 = arith.constant 12 : index
    %334 = memref.load %arg9[%c2_141, %c12_142] : memref<4x16xf32, #tpu.memory_space<smem>>
    %335 = vector.extract_strided_slice %12 {offsets = [0, 0], sizes = [8, 8], strides = [1, 1]} : vector<8x32xf32> to vector<8x8xf32>
    %336 = vector.broadcast %334 : f32 to vector<8x8xf32>
    %337 = arith.mulf %336, %335 : vector<8x8xf32>
    %338 = arith.addf %333, %337 : vector<8x8xf32>
    %c2_143 = arith.constant 2 : index
    %c13_144 = arith.constant 13 : index
    %339 = memref.load %arg9[%c2_143, %c13_144] : memref<4x16xf32, #tpu.memory_space<smem>>
    %340 = vector.extract_strided_slice %12 {offsets = [0, 8], sizes = [8, 8], strides = [1, 1]} : vector<8x32xf32> to vector<8x8xf32>
    %341 = vector.broadcast %339 : f32 to vector<8x8xf32>
    %342 = arith.mulf %341, %340 : vector<8x8xf32>
    %343 = arith.addf %338, %342 : vector<8x8xf32>
    %c2_145 = arith.constant 2 : index
    %c14_146 = arith.constant 14 : index
    %344 = memref.load %arg9[%c2_145, %c14_146] : memref<4x16xf32, #tpu.memory_space<smem>>
    %345 = vector.extract_strided_slice %12 {offsets = [0, 16], sizes = [8, 8], strides = [1, 1]} : vector<8x32xf32> to vector<8x8xf32>
    %346 = vector.broadcast %344 : f32 to vector<8x8xf32>
    %347 = arith.mulf %346, %345 : vector<8x8xf32>
    %348 = arith.addf %343, %347 : vector<8x8xf32>
    %c2_147 = arith.constant 2 : index
    %c15_148 = arith.constant 15 : index
    %349 = memref.load %arg9[%c2_147, %c15_148] : memref<4x16xf32, #tpu.memory_space<smem>>
    %350 = vector.extract_strided_slice %12 {offsets = [0, 24], sizes = [8, 8], strides = [1, 1]} : vector<8x32xf32> to vector<8x8xf32>
    %351 = vector.broadcast %349 : f32 to vector<8x8xf32>
    %352 = arith.mulf %351, %350 : vector<8x8xf32>
    %353 = arith.addf %348, %352 : vector<8x8xf32>
    %c2_149 = arith.constant 2 : index
    %c0_150 = arith.constant 0 : index
    %354 = memref.load %arg10[%c2_149, %c0_150] : memref<4x8xf32, #tpu.memory_space<smem>>
    %355 = vector.extract_strided_slice %16 {offsets = [0, 0], sizes = [8, 8], strides = [1, 1]} : vector<64x8xf32> to vector<8x8xf32>
    %356 = vector.broadcast %354 : f32 to vector<8x8xf32>
    %357 = arith.mulf %356, %355 : vector<8x8xf32>
    %c2_151 = arith.constant 2 : index
    %c1_152 = arith.constant 1 : index
    %358 = memref.load %arg10[%c2_151, %c1_152] : memref<4x8xf32, #tpu.memory_space<smem>>
    %359 = vector.extract_strided_slice %16 {offsets = [8, 0], sizes = [8, 8], strides = [1, 1]} : vector<64x8xf32> to vector<8x8xf32>
    %360 = vector.broadcast %358 : f32 to vector<8x8xf32>
    %361 = arith.mulf %360, %359 : vector<8x8xf32>
    %362 = arith.addf %357, %361 : vector<8x8xf32>
    %c2_153 = arith.constant 2 : index
    %c2_154 = arith.constant 2 : index
    %363 = memref.load %arg10[%c2_153, %c2_154] : memref<4x8xf32, #tpu.memory_space<smem>>
    %364 = vector.extract_strided_slice %16 {offsets = [16, 0], sizes = [8, 8], strides = [1, 1]} : vector<64x8xf32> to vector<8x8xf32>
    %365 = vector.broadcast %363 : f32 to vector<8x8xf32>
    %366 = arith.mulf %365, %364 : vector<8x8xf32>
    %367 = arith.addf %362, %366 : vector<8x8xf32>
    %c2_155 = arith.constant 2 : index
    %c3_156 = arith.constant 3 : index
    %368 = memref.load %arg10[%c2_155, %c3_156] : memref<4x8xf32, #tpu.memory_space<smem>>
    %369 = vector.extract_strided_slice %16 {offsets = [24, 0], sizes = [8, 8], strides = [1, 1]} : vector<64x8xf32> to vector<8x8xf32>
    %370 = vector.broadcast %368 : f32 to vector<8x8xf32>
    %371 = arith.mulf %370, %369 : vector<8x8xf32>
    %372 = arith.addf %367, %371 : vector<8x8xf32>
    %c2_157 = arith.constant 2 : index
    %c4_158 = arith.constant 4 : index
    %373 = memref.load %arg10[%c2_157, %c4_158] : memref<4x8xf32, #tpu.memory_space<smem>>
    %374 = vector.extract_strided_slice %16 {offsets = [32, 0], sizes = [8, 8], strides = [1, 1]} : vector<64x8xf32> to vector<8x8xf32>
    %375 = vector.broadcast %373 : f32 to vector<8x8xf32>
    %376 = arith.mulf %375, %374 : vector<8x8xf32>
    %377 = arith.addf %372, %376 : vector<8x8xf32>
    %c2_159 = arith.constant 2 : index
    %c5_160 = arith.constant 5 : index
    %378 = memref.load %arg10[%c2_159, %c5_160] : memref<4x8xf32, #tpu.memory_space<smem>>
    %379 = vector.extract_strided_slice %16 {offsets = [40, 0], sizes = [8, 8], strides = [1, 1]} : vector<64x8xf32> to vector<8x8xf32>
    %380 = vector.broadcast %378 : f32 to vector<8x8xf32>
    %381 = arith.mulf %380, %379 : vector<8x8xf32>
    %382 = arith.addf %377, %381 : vector<8x8xf32>
    %c2_161 = arith.constant 2 : index
    %c6_162 = arith.constant 6 : index
    %383 = memref.load %arg10[%c2_161, %c6_162] : memref<4x8xf32, #tpu.memory_space<smem>>
    %384 = vector.extract_strided_slice %16 {offsets = [48, 0], sizes = [8, 8], strides = [1, 1]} : vector<64x8xf32> to vector<8x8xf32>
    %385 = vector.broadcast %383 : f32 to vector<8x8xf32>
    %386 = arith.mulf %385, %384 : vector<8x8xf32>
    %387 = arith.addf %382, %386 : vector<8x8xf32>
    %c2_163 = arith.constant 2 : index
    %c7_164 = arith.constant 7 : index
    %388 = memref.load %arg10[%c2_163, %c7_164] : memref<4x8xf32, #tpu.memory_space<smem>>
    %389 = vector.extract_strided_slice %16 {offsets = [56, 0], sizes = [8, 8], strides = [1, 1]} : vector<64x8xf32> to vector<8x8xf32>
    %390 = vector.broadcast %388 : f32 to vector<8x8xf32>
    %391 = arith.mulf %390, %389 : vector<8x8xf32>
    %392 = arith.addf %387, %391 : vector<8x8xf32>
    %cst_165 = arith.constant dense<0.000000e+00> : vector<8x8xf32>
    %393 = tpu.matmul %17, %392, %cst_165 {dimension_numbers = #tpu.dot_dimension_numbers<[1], [0], [0], [1], [0, 0, 1, 1], [], []>} : vector<8x8xf32>, vector<8x8xf32>, vector<8x8xf32> -> vector<8x8xf32>
    %394 = arith.addf %353, %393 : vector<8x8xf32>
    %c2_166 = arith.constant 2 : index
    %395 = memref.load %arg12[%c2_166] : memref<4xf32, #tpu.memory_space<smem>>
    %396 = vector.broadcast %395 : f32 to vector<8x8xf32>
    %397 = arith.addf %394, %396 : vector<8x8xf32>
    %cst_167 = arith.constant 0.000000e+00 : f32
    %398 = vector.broadcast %cst_167 : f32 to vector<8x8xf32>
    %399 = arith.maximumf %397, %398 : vector<8x8xf32>
    %c2_168 = arith.constant 2 : index
    %400 = memref.load %arg13[%c2_168] : memref<4xf32, #tpu.memory_space<smem>>
    %401 = vector.broadcast %400 : f32 to vector<8x8xf32>
    %402 = arith.mulf %401, %399 : vector<8x8xf32>
    %403 = arith.addf %274, %402 : vector<8x8xf32>
    %c3_169 = arith.constant 3 : index
    %c0_170 = arith.constant 0 : index
    %404 = memref.load %arg9[%c3_169, %c0_170] : memref<4x16xf32, #tpu.memory_space<smem>>
    %405 = vector.extract_strided_slice %9 {offsets = [0, 0], sizes = [8, 8], strides = [1, 1]} : vector<8x32xf32> to vector<8x8xf32>
    %406 = vector.broadcast %404 : f32 to vector<8x8xf32>
    %407 = arith.mulf %406, %405 : vector<8x8xf32>
    %c3_171 = arith.constant 3 : index
    %c1_172 = arith.constant 1 : index
    %408 = memref.load %arg9[%c3_171, %c1_172] : memref<4x16xf32, #tpu.memory_space<smem>>
    %409 = vector.extract_strided_slice %9 {offsets = [0, 8], sizes = [8, 8], strides = [1, 1]} : vector<8x32xf32> to vector<8x8xf32>
    %410 = vector.broadcast %408 : f32 to vector<8x8xf32>
    %411 = arith.mulf %410, %409 : vector<8x8xf32>
    %412 = arith.addf %407, %411 : vector<8x8xf32>
    %c3_173 = arith.constant 3 : index
    %c2_174 = arith.constant 2 : index
    %413 = memref.load %arg9[%c3_173, %c2_174] : memref<4x16xf32, #tpu.memory_space<smem>>
    %414 = vector.extract_strided_slice %9 {offsets = [0, 16], sizes = [8, 8], strides = [1, 1]} : vector<8x32xf32> to vector<8x8xf32>
    %415 = vector.broadcast %413 : f32 to vector<8x8xf32>
    %416 = arith.mulf %415, %414 : vector<8x8xf32>
    %417 = arith.addf %412, %416 : vector<8x8xf32>
    %c3_175 = arith.constant 3 : index
    %c3_176 = arith.constant 3 : index
    %418 = memref.load %arg9[%c3_175, %c3_176] : memref<4x16xf32, #tpu.memory_space<smem>>
    %419 = vector.extract_strided_slice %9 {offsets = [0, 24], sizes = [8, 8], strides = [1, 1]} : vector<8x32xf32> to vector<8x8xf32>
    %420 = vector.broadcast %418 : f32 to vector<8x8xf32>
    %421 = arith.mulf %420, %419 : vector<8x8xf32>
    %422 = arith.addf %417, %421 : vector<8x8xf32>
    %c3_177 = arith.constant 3 : index
    %c4_178 = arith.constant 4 : index
    %423 = memref.load %arg9[%c3_177, %c4_178] : memref<4x16xf32, #tpu.memory_space<smem>>
    %424 = vector.extract_strided_slice %10 {offsets = [0, 0], sizes = [8, 8], strides = [1, 1]} : vector<8x32xf32> to vector<8x8xf32>
    %425 = vector.broadcast %423 : f32 to vector<8x8xf32>
    %426 = arith.mulf %425, %424 : vector<8x8xf32>
    %427 = arith.addf %422, %426 : vector<8x8xf32>
    %c3_179 = arith.constant 3 : index
    %c5_180 = arith.constant 5 : index
    %428 = memref.load %arg9[%c3_179, %c5_180] : memref<4x16xf32, #tpu.memory_space<smem>>
    %429 = vector.extract_strided_slice %10 {offsets = [0, 8], sizes = [8, 8], strides = [1, 1]} : vector<8x32xf32> to vector<8x8xf32>
    %430 = vector.broadcast %428 : f32 to vector<8x8xf32>
    %431 = arith.mulf %430, %429 : vector<8x8xf32>
    %432 = arith.addf %427, %431 : vector<8x8xf32>
    %c3_181 = arith.constant 3 : index
    %c6_182 = arith.constant 6 : index
    %433 = memref.load %arg9[%c3_181, %c6_182] : memref<4x16xf32, #tpu.memory_space<smem>>
    %434 = vector.extract_strided_slice %10 {offsets = [0, 16], sizes = [8, 8], strides = [1, 1]} : vector<8x32xf32> to vector<8x8xf32>
    %435 = vector.broadcast %433 : f32 to vector<8x8xf32>
    %436 = arith.mulf %435, %434 : vector<8x8xf32>
    %437 = arith.addf %432, %436 : vector<8x8xf32>
    %c3_183 = arith.constant 3 : index
    %c7_184 = arith.constant 7 : index
    %438 = memref.load %arg9[%c3_183, %c7_184] : memref<4x16xf32, #tpu.memory_space<smem>>
    %439 = vector.extract_strided_slice %10 {offsets = [0, 24], sizes = [8, 8], strides = [1, 1]} : vector<8x32xf32> to vector<8x8xf32>
    %440 = vector.broadcast %438 : f32 to vector<8x8xf32>
    %441 = arith.mulf %440, %439 : vector<8x8xf32>
    %442 = arith.addf %437, %441 : vector<8x8xf32>
    %c3_185 = arith.constant 3 : index
    %c8_186 = arith.constant 8 : index
    %443 = memref.load %arg9[%c3_185, %c8_186] : memref<4x16xf32, #tpu.memory_space<smem>>
    %444 = vector.extract_strided_slice %11 {offsets = [0, 0], sizes = [8, 8], strides = [1, 1]} : vector<8x32xf32> to vector<8x8xf32>
    %445 = vector.broadcast %443 : f32 to vector<8x8xf32>
    %446 = arith.mulf %445, %444 : vector<8x8xf32>
    %447 = arith.addf %442, %446 : vector<8x8xf32>
    %c3_187 = arith.constant 3 : index
    %c9_188 = arith.constant 9 : index
    %448 = memref.load %arg9[%c3_187, %c9_188] : memref<4x16xf32, #tpu.memory_space<smem>>
    %449 = vector.extract_strided_slice %11 {offsets = [0, 8], sizes = [8, 8], strides = [1, 1]} : vector<8x32xf32> to vector<8x8xf32>
    %450 = vector.broadcast %448 : f32 to vector<8x8xf32>
    %451 = arith.mulf %450, %449 : vector<8x8xf32>
    %452 = arith.addf %447, %451 : vector<8x8xf32>
    %c3_189 = arith.constant 3 : index
    %c10_190 = arith.constant 10 : index
    %453 = memref.load %arg9[%c3_189, %c10_190] : memref<4x16xf32, #tpu.memory_space<smem>>
    %454 = vector.extract_strided_slice %11 {offsets = [0, 16], sizes = [8, 8], strides = [1, 1]} : vector<8x32xf32> to vector<8x8xf32>
    %455 = vector.broadcast %453 : f32 to vector<8x8xf32>
    %456 = arith.mulf %455, %454 : vector<8x8xf32>
    %457 = arith.addf %452, %456 : vector<8x8xf32>
    %c3_191 = arith.constant 3 : index
    %c11_192 = arith.constant 11 : index
    %458 = memref.load %arg9[%c3_191, %c11_192] : memref<4x16xf32, #tpu.memory_space<smem>>
    %459 = vector.extract_strided_slice %11 {offsets = [0, 24], sizes = [8, 8], strides = [1, 1]} : vector<8x32xf32> to vector<8x8xf32>
    %460 = vector.broadcast %458 : f32 to vector<8x8xf32>
    %461 = arith.mulf %460, %459 : vector<8x8xf32>
    %462 = arith.addf %457, %461 : vector<8x8xf32>
    %c3_193 = arith.constant 3 : index
    %c12_194 = arith.constant 12 : index
    %463 = memref.load %arg9[%c3_193, %c12_194] : memref<4x16xf32, #tpu.memory_space<smem>>
    %464 = vector.extract_strided_slice %12 {offsets = [0, 0], sizes = [8, 8], strides = [1, 1]} : vector<8x32xf32> to vector<8x8xf32>
    %465 = vector.broadcast %463 : f32 to vector<8x8xf32>
    %466 = arith.mulf %465, %464 : vector<8x8xf32>
    %467 = arith.addf %462, %466 : vector<8x8xf32>
    %c3_195 = arith.constant 3 : index
    %c13_196 = arith.constant 13 : index
    %468 = memref.load %arg9[%c3_195, %c13_196] : memref<4x16xf32, #tpu.memory_space<smem>>
    %469 = vector.extract_strided_slice %12 {offsets = [0, 8], sizes = [8, 8], strides = [1, 1]} : vector<8x32xf32> to vector<8x8xf32>
    %470 = vector.broadcast %468 : f32 to vector<8x8xf32>
    %471 = arith.mulf %470, %469 : vector<8x8xf32>
    %472 = arith.addf %467, %471 : vector<8x8xf32>
    %c3_197 = arith.constant 3 : index
    %c14_198 = arith.constant 14 : index
    %473 = memref.load %arg9[%c3_197, %c14_198] : memref<4x16xf32, #tpu.memory_space<smem>>
    %474 = vector.extract_strided_slice %12 {offsets = [0, 16], sizes = [8, 8], strides = [1, 1]} : vector<8x32xf32> to vector<8x8xf32>
    %475 = vector.broadcast %473 : f32 to vector<8x8xf32>
    %476 = arith.mulf %475, %474 : vector<8x8xf32>
    %477 = arith.addf %472, %476 : vector<8x8xf32>
    %c3_199 = arith.constant 3 : index
    %c15_200 = arith.constant 15 : index
    %478 = memref.load %arg9[%c3_199, %c15_200] : memref<4x16xf32, #tpu.memory_space<smem>>
    %479 = vector.extract_strided_slice %12 {offsets = [0, 24], sizes = [8, 8], strides = [1, 1]} : vector<8x32xf32> to vector<8x8xf32>
    %480 = vector.broadcast %478 : f32 to vector<8x8xf32>
    %481 = arith.mulf %480, %479 : vector<8x8xf32>
    %482 = arith.addf %477, %481 : vector<8x8xf32>
    %c3_201 = arith.constant 3 : index
    %c0_202 = arith.constant 0 : index
    %483 = memref.load %arg10[%c3_201, %c0_202] : memref<4x8xf32, #tpu.memory_space<smem>>
    %484 = vector.extract_strided_slice %16 {offsets = [0, 0], sizes = [8, 8], strides = [1, 1]} : vector<64x8xf32> to vector<8x8xf32>
    %485 = vector.broadcast %483 : f32 to vector<8x8xf32>
    %486 = arith.mulf %485, %484 : vector<8x8xf32>
    %c3_203 = arith.constant 3 : index
    %c1_204 = arith.constant 1 : index
    %487 = memref.load %arg10[%c3_203, %c1_204] : memref<4x8xf32, #tpu.memory_space<smem>>
    %488 = vector.extract_strided_slice %16 {offsets = [8, 0], sizes = [8, 8], strides = [1, 1]} : vector<64x8xf32> to vector<8x8xf32>
    %489 = vector.broadcast %487 : f32 to vector<8x8xf32>
    %490 = arith.mulf %489, %488 : vector<8x8xf32>
    %491 = arith.addf %486, %490 : vector<8x8xf32>
    %c3_205 = arith.constant 3 : index
    %c2_206 = arith.constant 2 : index
    %492 = memref.load %arg10[%c3_205, %c2_206] : memref<4x8xf32, #tpu.memory_space<smem>>
    %493 = vector.extract_strided_slice %16 {offsets = [16, 0], sizes = [8, 8], strides = [1, 1]} : vector<64x8xf32> to vector<8x8xf32>
    %494 = vector.broadcast %492 : f32 to vector<8x8xf32>
    %495 = arith.mulf %494, %493 : vector<8x8xf32>
    %496 = arith.addf %491, %495 : vector<8x8xf32>
    %c3_207 = arith.constant 3 : index
    %c3_208 = arith.constant 3 : index
    %497 = memref.load %arg10[%c3_207, %c3_208] : memref<4x8xf32, #tpu.memory_space<smem>>
    %498 = vector.extract_strided_slice %16 {offsets = [24, 0], sizes = [8, 8], strides = [1, 1]} : vector<64x8xf32> to vector<8x8xf32>
    %499 = vector.broadcast %497 : f32 to vector<8x8xf32>
    %500 = arith.mulf %499, %498 : vector<8x8xf32>
    %501 = arith.addf %496, %500 : vector<8x8xf32>
    %c3_209 = arith.constant 3 : index
    %c4_210 = arith.constant 4 : index
    %502 = memref.load %arg10[%c3_209, %c4_210] : memref<4x8xf32, #tpu.memory_space<smem>>
    %503 = vector.extract_strided_slice %16 {offsets = [32, 0], sizes = [8, 8], strides = [1, 1]} : vector<64x8xf32> to vector<8x8xf32>
    %504 = vector.broadcast %502 : f32 to vector<8x8xf32>
    %505 = arith.mulf %504, %503 : vector<8x8xf32>
    %506 = arith.addf %501, %505 : vector<8x8xf32>
    %c3_211 = arith.constant 3 : index
    %c5_212 = arith.constant 5 : index
    %507 = memref.load %arg10[%c3_211, %c5_212] : memref<4x8xf32, #tpu.memory_space<smem>>
    %508 = vector.extract_strided_slice %16 {offsets = [40, 0], sizes = [8, 8], strides = [1, 1]} : vector<64x8xf32> to vector<8x8xf32>
    %509 = vector.broadcast %507 : f32 to vector<8x8xf32>
    %510 = arith.mulf %509, %508 : vector<8x8xf32>
    %511 = arith.addf %506, %510 : vector<8x8xf32>
    %c3_213 = arith.constant 3 : index
    %c6_214 = arith.constant 6 : index
    %512 = memref.load %arg10[%c3_213, %c6_214] : memref<4x8xf32, #tpu.memory_space<smem>>
    %513 = vector.extract_strided_slice %16 {offsets = [48, 0], sizes = [8, 8], strides = [1, 1]} : vector<64x8xf32> to vector<8x8xf32>
    %514 = vector.broadcast %512 : f32 to vector<8x8xf32>
    %515 = arith.mulf %514, %513 : vector<8x8xf32>
    %516 = arith.addf %511, %515 : vector<8x8xf32>
    %c3_215 = arith.constant 3 : index
    %c7_216 = arith.constant 7 : index
    %517 = memref.load %arg10[%c3_215, %c7_216] : memref<4x8xf32, #tpu.memory_space<smem>>
    %518 = vector.extract_strided_slice %16 {offsets = [56, 0], sizes = [8, 8], strides = [1, 1]} : vector<64x8xf32> to vector<8x8xf32>
    %519 = vector.broadcast %517 : f32 to vector<8x8xf32>
    %520 = arith.mulf %519, %518 : vector<8x8xf32>
    %521 = arith.addf %516, %520 : vector<8x8xf32>
    %cst_217 = arith.constant dense<0.000000e+00> : vector<8x8xf32>
    %522 = tpu.matmul %17, %521, %cst_217 {dimension_numbers = #tpu.dot_dimension_numbers<[1], [0], [0], [1], [0, 0, 1, 1], [], []>} : vector<8x8xf32>, vector<8x8xf32>, vector<8x8xf32> -> vector<8x8xf32>
    %523 = arith.addf %482, %522 : vector<8x8xf32>
    %c3_218 = arith.constant 3 : index
    %524 = memref.load %arg12[%c3_218] : memref<4xf32, #tpu.memory_space<smem>>
    %525 = vector.broadcast %524 : f32 to vector<8x8xf32>
    %526 = arith.addf %523, %525 : vector<8x8xf32>
    %cst_219 = arith.constant 0.000000e+00 : f32
    %527 = vector.broadcast %cst_219 : f32 to vector<8x8xf32>
    %528 = arith.maximumf %526, %527 : vector<8x8xf32>
    %c3_220 = arith.constant 3 : index
    %529 = memref.load %arg13[%c3_220] : memref<4xf32, #tpu.memory_space<smem>>
    %530 = vector.broadcast %529 : f32 to vector<8x8xf32>
    %531 = arith.mulf %530, %528 : vector<8x8xf32>
    %532 = arith.addf %403, %531 : vector<8x8xf32>
    %c0_221 = arith.constant 0 : index
    %533 = memref.load %arg14[%c0_221] : memref<1xf32, #tpu.memory_space<smem>>
    %534 = vector.broadcast %533 : f32 to vector<8x8xf32>
    %535 = arith.addf %532, %534 : vector<8x8xf32>
    %536 = arith.negf %535 : vector<8x8xf32>
    %537 = math.exp %536 : vector<8x8xf32>
    %cst_222 = arith.constant 1.000000e+00 : f32
    %538 = vector.broadcast %cst_222 : f32 to vector<8x8xf32>
    %539 = arith.addf %538, %537 : vector<8x8xf32>
    %540 = arith.divf %538, %539 : vector<8x8xf32>
    %c0_223 = arith.constant 0 : index
    %c0_224 = arith.constant 0 : index
    %541 = vector.load %arg8[%c0_223, %c0_224] : memref<8x16xf32, #tpu.memory_space<vmem>>, vector<8x16xf32>
    %cst_225 = arith.constant dense<0.000000e+00> : vector<8x16xf32>
    %542 = tpu.matmul %540, %541, %cst_225 {dimension_numbers = #tpu.dot_dimension_numbers<[1], [0], [0], [1], [0, 0, 1, 1], [], []>} : vector<8x8xf32>, vector<8x16xf32>, vector<8x16xf32> -> vector<8x16xf32>
    %c0_226 = arith.constant 0 : index
    %c0_227 = arith.constant 0 : index
    %543 = vector.load %arg6[%c0_226, %c0_227] : memref<8x8xf32, #tpu.memory_space<vmem>>, vector<8x8xf32>
    %cst_228 = arith.constant dense<0.000000e+00> : vector<8x16xf32>
    %544 = tpu.matmul %543, %542, %cst_228 {dimension_numbers = #tpu.dot_dimension_numbers<[1], [0], [0], [1], [0, 0, 1, 1], [], []>} : vector<8x8xf32>, vector<8x16xf32>, vector<8x16xf32> -> vector<8x16xf32>
    %c0_229 = arith.constant 0 : index
    %c0_230 = arith.constant 0 : index
    %545 = vector.load %arg7[%c0_229, %c0_230] : memref<8x8xf32, #tpu.memory_space<vmem>>, vector<8x8xf32>
    %cst_231 = arith.constant dense<0.000000e+00> : vector<8x16xf32>
    %546 = tpu.matmul %545, %542, %cst_231 {dimension_numbers = #tpu.dot_dimension_numbers<[1], [0], [0], [1], [0, 0, 1, 1], [], []>} : vector<8x8xf32>, vector<8x16xf32>, vector<8x16xf32> -> vector<8x16xf32>
    %547 = tpu.concatenate %544, %546 in 1 : vector<8x16xf32>, vector<8x16xf32> -> vector<8x32xf32>
    %c0_232 = arith.constant 0 : index
    %c0_233 = arith.constant 0 : index
    %548 = memref.load %arg11[%c0_232, %c0_233] : memref<4x4xf32, #tpu.memory_space<smem>>
    %549 = vector.broadcast %548 : f32 to vector<8x32xf32>
    %550 = arith.mulf %549, %2 : vector<8x32xf32>
    %c0_234 = arith.constant 0 : index
    %c1_235 = arith.constant 1 : index
    %551 = memref.load %arg11[%c0_234, %c1_235] : memref<4x4xf32, #tpu.memory_space<smem>>
    %552 = vector.broadcast %551 : f32 to vector<8x32xf32>
    %553 = arith.mulf %552, %4 : vector<8x32xf32>
    %554 = arith.addf %550, %553 : vector<8x32xf32>
    %c0_236 = arith.constant 0 : index
    %c2_237 = arith.constant 2 : index
    %555 = memref.load %arg11[%c0_236, %c2_237] : memref<4x4xf32, #tpu.memory_space<smem>>
    %556 = vector.broadcast %555 : f32 to vector<8x32xf32>
    %557 = arith.mulf %556, %6 : vector<8x32xf32>
    %558 = arith.addf %554, %557 : vector<8x32xf32>
    %c0_238 = arith.constant 0 : index
    %c3_239 = arith.constant 3 : index
    %559 = memref.load %arg11[%c0_238, %c3_239] : memref<4x4xf32, #tpu.memory_space<smem>>
    %560 = vector.broadcast %559 : f32 to vector<8x32xf32>
    %561 = arith.mulf %560, %8 : vector<8x32xf32>
    %562 = arith.addf %558, %561 : vector<8x32xf32>
    %563 = arith.mulf %547, %562 : vector<8x32xf32>
    %c0_240 = arith.constant 0 : index
    %564 = memref.load %arg15[%c0_240] : memref<4xf32, #tpu.memory_space<smem>>
    %565 = vector.broadcast %564 : f32 to vector<8x32xf32>
    %566 = arith.addf %563, %565 : vector<8x32xf32>
    %c0_241 = arith.constant 0 : index
    %c0_242 = arith.constant 0 : index
    %c0_243 = arith.constant 0 : index
    %c0_244 = arith.constant 0 : index
    %567 = vector.load %arg16[%c0_241, %c0_242, %c0_243, %c0_244] : memref<1x4x8x32xf32, #tpu.memory_space<vmem>>, vector<1x1x8x32xf32>
    %568 = vector.shape_cast %567 : vector<1x1x8x32xf32> to vector<8x32xf32>
    %569 = vector.shape_cast %566 : vector<8x32xf32> to vector<1x1x8x32xf32>
    tpu.vector_store %arg16[%c0_241, %c0_242, %c0_243, %c0_244], %569 {strides = array<i32>} : memref<1x4x8x32xf32, #tpu.memory_space<vmem>>, vector<1x1x8x32xf32>,
    %c1_245 = arith.constant 1 : index
    %c0_246 = arith.constant 0 : index
    %570 = memref.load %arg11[%c1_245, %c0_246] : memref<4x4xf32, #tpu.memory_space<smem>>
    %571 = vector.broadcast %570 : f32 to vector<8x32xf32>
    %572 = arith.mulf %571, %2 : vector<8x32xf32>
    %c1_247 = arith.constant 1 : index
    %c1_248 = arith.constant 1 : index
    %573 = memref.load %arg11[%c1_247, %c1_248] : memref<4x4xf32, #tpu.memory_space<smem>>
    %574 = vector.broadcast %573 : f32 to vector<8x32xf32>
    %575 = arith.mulf %574, %4 : vector<8x32xf32>
    %576 = arith.addf %572, %575 : vector<8x32xf32>
    %c1_249 = arith.constant 1 : index
    %c2_250 = arith.constant 2 : index
    %577 = memref.load %arg11[%c1_249, %c2_250] : memref<4x4xf32, #tpu.memory_space<smem>>
    %578 = vector.broadcast %577 : f32 to vector<8x32xf32>
    %579 = arith.mulf %578, %6 : vector<8x32xf32>
    %580 = arith.addf %576, %579 : vector<8x32xf32>
    %c1_251 = arith.constant 1 : index
    %c3_252 = arith.constant 3 : index
    %581 = memref.load %arg11[%c1_251, %c3_252] : memref<4x4xf32, #tpu.memory_space<smem>>
    %582 = vector.broadcast %581 : f32 to vector<8x32xf32>
    %583 = arith.mulf %582, %8 : vector<8x32xf32>
    %584 = arith.addf %580, %583 : vector<8x32xf32>
    %585 = arith.mulf %547, %584 : vector<8x32xf32>
    %c1_253 = arith.constant 1 : index
    %586 = memref.load %arg15[%c1_253] : memref<4xf32, #tpu.memory_space<smem>>
    %587 = vector.broadcast %586 : f32 to vector<8x32xf32>
    %588 = arith.addf %585, %587 : vector<8x32xf32>
    %c0_254 = arith.constant 0 : index
    %c1_255 = arith.constant 1 : index
    %c0_256 = arith.constant 0 : index
    %c0_257 = arith.constant 0 : index
    %589 = vector.load %arg16[%c0_254, %c1_255, %c0_256, %c0_257] : memref<1x4x8x32xf32, #tpu.memory_space<vmem>>, vector<1x1x8x32xf32>
    %590 = vector.shape_cast %589 : vector<1x1x8x32xf32> to vector<8x32xf32>
    %591 = vector.shape_cast %588 : vector<8x32xf32> to vector<1x1x8x32xf32>
    tpu.vector_store %arg16[%c0_254, %c1_255, %c0_256, %c0_257], %591 {strides = array<i32>} : memref<1x4x8x32xf32, #tpu.memory_space<vmem>>, vector<1x1x8x32xf32>,
    %c2_258 = arith.constant 2 : index
    %c0_259 = arith.constant 0 : index
    %592 = memref.load %arg11[%c2_258, %c0_259] : memref<4x4xf32, #tpu.memory_space<smem>>
    %593 = vector.broadcast %592 : f32 to vector<8x32xf32>
    %594 = arith.mulf %593, %2 : vector<8x32xf32>
    %c2_260 = arith.constant 2 : index
    %c1_261 = arith.constant 1 : index
    %595 = memref.load %arg11[%c2_260, %c1_261] : memref<4x4xf32, #tpu.memory_space<smem>>
    %596 = vector.broadcast %595 : f32 to vector<8x32xf32>
    %597 = arith.mulf %596, %4 : vector<8x32xf32>
    %598 = arith.addf %594, %597 : vector<8x32xf32>
    %c2_262 = arith.constant 2 : index
    %c2_263 = arith.constant 2 : index
    %599 = memref.load %arg11[%c2_262, %c2_263] : memref<4x4xf32, #tpu.memory_space<smem>>
    %600 = vector.broadcast %599 : f32 to vector<8x32xf32>
    %601 = arith.mulf %600, %6 : vector<8x32xf32>
    %602 = arith.addf %598, %601 : vector<8x32xf32>
    %c2_264 = arith.constant 2 : index
    %c3_265 = arith.constant 3 : index
    %603 = memref.load %arg11[%c2_264, %c3_265] : memref<4x4xf32, #tpu.memory_space<smem>>
    %604 = vector.broadcast %603 : f32 to vector<8x32xf32>
    %605 = arith.mulf %604, %8 : vector<8x32xf32>
    %606 = arith.addf %602, %605 : vector<8x32xf32>
    %607 = arith.mulf %547, %606 : vector<8x32xf32>
    %c2_266 = arith.constant 2 : index
    %608 = memref.load %arg15[%c2_266] : memref<4xf32, #tpu.memory_space<smem>>
    %609 = vector.broadcast %608 : f32 to vector<8x32xf32>
    %610 = arith.addf %607, %609 : vector<8x32xf32>
    %c0_267 = arith.constant 0 : index
    %c2_268 = arith.constant 2 : index
    %c0_269 = arith.constant 0 : index
    %c0_270 = arith.constant 0 : index
    %611 = vector.load %arg16[%c0_267, %c2_268, %c0_269, %c0_270] : memref<1x4x8x32xf32, #tpu.memory_space<vmem>>, vector<1x1x8x32xf32>
    %612 = vector.shape_cast %611 : vector<1x1x8x32xf32> to vector<8x32xf32>
    %613 = vector.shape_cast %610 : vector<8x32xf32> to vector<1x1x8x32xf32>
    tpu.vector_store %arg16[%c0_267, %c2_268, %c0_269, %c0_270], %613 {strides = array<i32>} : memref<1x4x8x32xf32, #tpu.memory_space<vmem>>, vector<1x1x8x32xf32>,
    %c3_271 = arith.constant 3 : index
    %c0_272 = arith.constant 0 : index
    %614 = memref.load %arg11[%c3_271, %c0_272] : memref<4x4xf32, #tpu.memory_space<smem>>
    %615 = vector.broadcast %614 : f32 to vector<8x32xf32>
    %616 = arith.mulf %615, %2 : vector<8x32xf32>
    %c3_273 = arith.constant 3 : index
    %c1_274 = arith.constant 1 : index
    %617 = memref.load %arg11[%c3_273, %c1_274] : memref<4x4xf32, #tpu.memory_space<smem>>
    %618 = vector.broadcast %617 : f32 to vector<8x32xf32>
    %619 = arith.mulf %618, %4 : vector<8x32xf32>
    %620 = arith.addf %616, %619 : vector<8x32xf32>
    %c3_275 = arith.constant 3 : index
    %c2_276 = arith.constant 2 : index
    %621 = memref.load %arg11[%c3_275, %c2_276] : memref<4x4xf32, #tpu.memory_space<smem>>
    %622 = vector.broadcast %621 : f32 to vector<8x32xf32>
    %623 = arith.mulf %622, %6 : vector<8x32xf32>
    %624 = arith.addf %620, %623 : vector<8x32xf32>
    %c3_277 = arith.constant 3 : index
    %c3_278 = arith.constant 3 : index
    %625 = memref.load %arg11[%c3_277, %c3_278] : memref<4x4xf32, #tpu.memory_space<smem>>
    %626 = vector.broadcast %625 : f32 to vector<8x32xf32>
    %627 = arith.mulf %626, %8 : vector<8x32xf32>
    %628 = arith.addf %624, %627 : vector<8x32xf32>
    %629 = arith.mulf %547, %628 : vector<8x32xf32>
    %c3_279 = arith.constant 3 : index
    %630 = memref.load %arg15[%c3_279] : memref<4xf32, #tpu.memory_space<smem>>
    %631 = vector.broadcast %630 : f32 to vector<8x32xf32>
    %632 = arith.addf %629, %631 : vector<8x32xf32>
    %c0_280 = arith.constant 0 : index
    %c3_281 = arith.constant 3 : index
    %c0_282 = arith.constant 0 : index
    %c0_283 = arith.constant 0 : index
    %633 = vector.load %arg16[%c0_280, %c3_281, %c0_282, %c0_283] : memref<1x4x8x32xf32, #tpu.memory_space<vmem>>, vector<1x1x8x32xf32>
    %634 = vector.shape_cast %633 : vector<1x1x8x32xf32> to vector<8x32xf32>
    %635 = vector.shape_cast %632 : vector<8x32xf32> to vector<1x1x8x32xf32>
    tpu.vector_store %arg16[%c0_280, %c3_281, %c0_282, %c0_283], %635 {strides = array<i32>} : memref<1x4x8x32xf32, #tpu.memory_space<vmem>>, vector<1x1x8x32xf32>,
    return
  }
  func.func @transform_0(%arg0: i32) -> (i32, i32, i32, i32) {
    %c0_i32 = arith.constant 0 : i32
    %c0_i32_0 = arith.constant 0 : i32
    %c0_i32_1 = arith.constant 0 : i32
    %c0_i32_2 = arith.constant 0 : i32
    return %arg0, %c0_i32, %c0_i32_0, %c0_i32_1 : i32, i32, i32, i32
  }
  func.func @transform_1(%arg0: i32) -> (i32, i32, i32) {
    %c0_i32 = arith.constant 0 : i32
    %c0_i32_0 = arith.constant 0 : i32
    %c0_i32_1 = arith.constant 0 : i32
    return %arg0, %c0_i32, %c0_i32_0 : i32, i32, i32
  }
  func.func @transform_2(%arg0: i32) -> (i32, i32) {
    %c0_i32 = arith.constant 0 : i32
    %c0_i32_0 = arith.constant 0 : i32
    %c0_i32_1 = arith.constant 0 : i32
    return %c0_i32, %c0_i32_0 : i32, i32
  }
  func.func @transform_3(%arg0: i32) -> (i32, i32) {
    %c0_i32 = arith.constant 0 : i32
    %c0_i32_0 = arith.constant 0 : i32
    %c0_i32_1 = arith.constant 0 : i32
    return %c0_i32, %c0_i32_0 : i32, i32
  }
  func.func @transform_4(%arg0: i32) -> (i32, i32) {
    %c0_i32 = arith.constant 0 : i32
    %c0_i32_0 = arith.constant 0 : i32
    %c0_i32_1 = arith.constant 0 : i32
    return %c0_i32, %c0_i32_0 : i32, i32
  }
  func.func @transform_5(%arg0: i32) -> (i32, i32) {
    %c0_i32 = arith.constant 0 : i32
    %c0_i32_0 = arith.constant 0 : i32
    %c0_i32_1 = arith.constant 0 : i32
    return %c0_i32, %c0_i32_0 : i32, i32
  }
  func.func @transform_6(%arg0: i32) -> (i32, i32) {
    %c0_i32 = arith.constant 0 : i32
    %c0_i32_0 = arith.constant 0 : i32
    %c0_i32_1 = arith.constant 0 : i32
    return %c0_i32, %c0_i32_0 : i32, i32
  }
  func.func @transform_7(%arg0: i32) -> (i32, i32) {
    %c0_i32 = arith.constant 0 : i32
    %c0_i32_0 = arith.constant 0 : i32
    %c0_i32_1 = arith.constant 0 : i32
    return %c0_i32, %c0_i32_0 : i32, i32
  }
  func.func @transform_8(%arg0: i32) -> (i32, i32) {
    %c0_i32 = arith.constant 0 : i32
    %c0_i32_0 = arith.constant 0 : i32
    %c0_i32_1 = arith.constant 0 : i32
    return %c0_i32, %c0_i32_0 : i32, i32
  }
  func.func @transform_9(%arg0: i32) -> (i32, i32) {
    %c0_i32 = arith.constant 0 : i32
    %c0_i32_0 = arith.constant 0 : i32
    %c0_i32_1 = arith.constant 0 : i32
    return %c0_i32, %c0_i32_0 : i32, i32
  }
  func.func @transform_10(%arg0: i32) -> (i32, i32) {
    %c0_i32 = arith.constant 0 : i32
    %c0_i32_0 = arith.constant 0 : i32
    %c0_i32_1 = arith.constant 0 : i32
    return %c0_i32, %c0_i32_0 : i32, i32
  }
  func.func @transform_11(%arg0: i32) -> i32 {
    %c0_i32 = arith.constant 0 : i32
    %c0_i32_0 = arith.constant 0 : i32
    return %c0_i32 : i32
  }
  func.func @transform_12(%arg0: i32) -> i32 {
    %c0_i32 = arith.constant 0 : i32
    %c0_i32_0 = arith.constant 0 : i32
    return %c0_i32 : i32
  }
  func.func @transform_13(%arg0: i32) -> i32 {
    %c0_i32 = arith.constant 0 : i32
    %c0_i32_0 = arith.constant 0 : i32
    return %c0_i32 : i32
  }
  func.func @transform_14(%arg0: i32) -> i32 {
    %c0_i32 = arith.constant 0 : i32
    %c0_i32_0 = arith.constant 0 : i32
    return %c0_i32 : i32
  }
  func.func @transform_15(%arg0: i32) -> (i32, i32, i32, i32) {
    %c0_i32 = arith.constant 0 : i32
    %c0_i32_0 = arith.constant 0 : i32
    %c0_i32_1 = arith.constant 0 : i32
    %c0_i32_2 = arith.constant 0 : i32
    return %arg0, %c0_i32, %c0_i32_0, %c0_i32_1 : i32, i32, i32, i32
  }
}

</mosaic_0001>

<llo_original>
// kernel: gate_forward.1
$region0: #{gate_forward.1}
  #allocation0 [shape = 'u32[]', space=smem, size = 0x4, offset = 0x4, fixed_abs, tag = 'smem constant byte address 0x4 - core index']
  #allocation1 [shape = 'u32[144,128]{1,0:T(1,128)}', space=vmem, size = 0x12000, scoped, tag = 'internal scratch']
  #allocation2 [shape = 'f32[1]{0:T(128)S(6)}', space=smem, size = 0x200, scoped, tag = 'scoped memory for gate_forward.1']
  %s0 = inlined_call_operand.vmem [shape: f32[2,4,8,32], index: 0, kind: input, shape index: {}]
  %s1 = inlined_call_operand.vmem [shape: f32[2,64,8], index: 1, kind: input, shape index: {}]
  %s2 = inlined_call_operand.vmem [shape: f32[32,32], index: 2, kind: input, shape index: {}]
  %s3 = inlined_call_operand.vmem [shape: f32[8,8], index: 3, kind: input, shape index: {}]
  %s4 = inlined_call_operand.vmem [shape: f32[8,8], index: 4, kind: input, shape index: {}]
  %s5 = inlined_call_operand.vmem [shape: f32[8,8], index: 5, kind: input, shape index: {}]
  %s6 = inlined_call_operand.vmem [shape: f32[8,8], index: 6, kind: input, shape index: {}]
  %s7 = inlined_call_operand.vmem [shape: f32[8,16], index: 7, kind: input, shape index: {}]
  %s8 = inlined_call_operand.vmem [shape: f32[4,16], index: 8, kind: input, shape index: {}]
  %s9 = inlined_call_operand.hbm [shape: f32[4,8], index: 9, kind: input, shape index: {}]
  %s10 = inlined_call_operand.hbm [shape: f32[4,4], index: 10, kind: input, shape index: {}]
  %s11 = inlined_call_operand.vmem [shape: f32[4], index: 11, kind: input, shape index: {}]
  %s12 = inlined_call_operand.vmem [shape: f32[4], index: 12, kind: input, shape index: {}]
  %s13 = inlined_call_operand.<no memory space> [shape: f32[1], index: 13, kind: input, shape index: {}]
  %s14 = inlined_call_operand.hbm [shape: f32[4], index: 14, kind: input, shape index: {}]
  %s15 = inlined_call_operand.vmem [shape: f32[2,4,8,32], index: 15, kind: output, shape index: {}]
  %s16 = sld [smem:[#allocation0]]
  $region117: #{gate_forward.1} parent=0
    _
  %s18 = ssub.s32 1, %s16
  %s19 = scalar_select 0, %s18, %s16
  %20 = sst [smem:[#allocation2]] %s13
  $region1: #{gate_forward.1} parent=0
    #allocation3 [shape = 'u8[2048]{0}', space=smem, size = 0x800, scoped, tag = 'input window, operand 8, single buffered']
    #allocation4 [shape = 's32[2]{0}', space=sflag, size = 0x8, scoped, tag = 'scoped memory for gate_forward.1']
    #allocation5 [shape = 's32[2]{0}', space=sflag, size = 0x8, scoped, tag = 'scoped memory for gate_forward.1']
    #allocation6 [shape = 'u8[2048]{0}', space=smem, size = 0x800, scoped, tag = 'input window, operand 9, single buffered']
    #allocation7 [shape = 'u8[2048]{0}', space=smem, size = 0x800, scoped, tag = 'input window, operand 10, single buffered']
    #allocation8 [shape = 's32[1]{0}', space=sflag, size = 0x4, scoped, tag = 'scoped memory for gate_forward.1']
    #allocation9 [shape = 'u8[512]{0}', space=smem, size = 0x200, scoped, tag = 'input window, operand 11, single buffered']
    #allocation10 [shape = 's32[1]{0}', space=sflag, size = 0x4, scoped, tag = 'scoped memory for gate_forward.1']
    #allocation11 [shape = 'u8[512]{0}', space=smem, size = 0x200, scoped, tag = 'input window, operand 12, single buffered']
    #allocation12 [shape = 'u8[512]{0}', space=smem, size = 0x200, scoped, tag = 'input window, operand 14, single buffered']
    %21 = vsyncpa [#allocation5], 0
    %22 = vsyncpa [#allocation4], 0
    %23 = vsyncpa [#allocation8], 0
    %24 = vsyncpa [#allocation10], 0
    loop: start=0, step=1, limit=4
    $region2: #{gate_forward.1} parent=1 // loop_pre_header
      _
    $region3: #{gate_forward.1} parent=1 // loop_header
      %s26 = sphi 0, %s30
      %p27 = scmp.ge.s32.totalorder %s26, 4
      %s36 = sphi 0, %s38
      %s39 = sphi 0, %s36
      %s40 = sphi 0, %s39
      %s56 = sphi 0, %s40
      %s62 = sphi 0, %s64
      %s65 = sphi 0, %s62
      %s66 = sphi 0, %s65
      %s82 = sphi 0, %s66
      %s86 = sphi 0, %s86
      %s88 = sphi 0, %s86
      %s89 = sphi 0, %s88
      %s103 = sphi 0, %s89
      %s107 = sphi 0, %s107
      %s109 = sphi 0, %s107
      %s110 = sphi 0, %s109
      %s124 = sphi 0, %s110
      %s128 = sphi 0, %s128
      %s130 = sphi 0, %s128
      %s131 = sphi 0, %s130
      %s145 = sphi 0, %s131
      %s149 = sphi 0, %s149
      %s151 = sphi 0, %s149
      %s152 = sphi 0, %s151
      %s166 = sphi 0, %s152
      %s170 = sphi 0, %s170
      %s172 = sphi 0, %s170
      %s173 = sphi 0, %s172
      %s187 = sphi 0, %s173
      %s191 = sphi 0, %s191
      %s193 = sphi 0, %s191
      %s194 = sphi 0, %s193
      %s208 = sphi 0, %s194
      %s212 = sphi 0, %s212
      %s214 = sphi 0, %s212
      %s215 = sphi 0, %s214
      %s229 = sphi 0, %s215
      %s233 = sphi 0, %s233
      %s235 = sphi 0, %s233
      %s236 = sphi 0, %s235
      %s250 = sphi 0, %s236
      %s254 = sphi 0, %s254
      %s256 = sphi 0, %s254
      %s257 = sphi 0, %s256
      %s271 = sphi 0, %s257
      %s275 = sphi 0, %s275
      %s277 = sphi 0, %s275
      %s278 = sphi 0, %s277
      %s292 = sphi 0, %s278
      %s296 = sphi 0, %s296
      %s298 = sphi 0, %s296
      %s299 = sphi 0, %s298
      %s313 = sphi 0, %s299
      %s317 = sphi 0, %s317
      %s319 = sphi 0, %s317
      %s320 = sphi 0, %s319
      %s334 = sphi 0, %s320
      %s338 = sphi 0, %s338
      %s340 = sphi 0, %s338
      %s341 = sphi 0, %s340
      %s355 = sphi 0, %s341
      %s361 = sphi 0, %s363
      %s364 = sphi 0, %s361
      %s365 = sphi 0, %s364
      %s381 = sphi 0, %s365
    $region4: #{gate_forward.1} parent=1 // loop_header_branch
      %29 = sbr.rel (%p27) target = $region8
    $region5: #{gate_forward.1} parent=1 // loop_body
      %s31 = ssub.s32 %s26, 1
      %s32 = ssub.s32 %s26, 2
      %s33 = sadd.s32 %s26, 1
      %s34 = ssub.s32 %s26, %s33
      %p35 = scmp.eq.s32.totalorder %s34, 0
      %s37 = sadd.s32 %s36, 1
      %s38 = scalar_select %p35, %s36, %s37
      %p41 = pneg %p35
      %p42 = scmp.eq.s32.totalorder %s26, 1
      %p43 = por %p41, %p42
      %p44 = scmp.ne.s32.totalorder %s36, %s39
      %p45 = scmp.eq.s32.totalorder %s26, 0
      %p46 = por %p44, %p45
      %p47 = scmp.ne.s32.totalorder %s36, %s39
      %p48 = scmp.eq.s32.totalorder %s31, 1
      %p49 = por %p47, %p48
      %p50 = scmp.ne.s32.totalorder %s39, %s40
      %p51 = scmp.eq.s32.totalorder %s31, 0
      %p52 = por %p50, %p51
      %p53 = scmp.ne.s32.totalorder %s39, %s40
      %p54 = scmp.eq.s32.totalorder %s32, 1
      %p55 = por %p53, %p54
      %p57 = scmp.ne.s32.totalorder %s40, %s56
      %p58 = scmp.eq.s32.totalorder %s32, 0
      %p59 = por %p57, %p58
      %s60 = ssub.s32 %s26, %s33
      %p61 = scmp.eq.s32.totalorder %s60, 0
      %s63 = sadd.s32 %s62, 1
      %s64 = scalar_select %p61, %s62, %s63
      %p67 = pneg %p61
      %p68 = scmp.eq.s32.totalorder %s26, 1
      %p69 = por %p67, %p68
      %p70 = scmp.ne.s32.totalorder %s62, %s65
      %p71 = scmp.eq.s32.totalorder %s26, 0
      %p72 = por %p70, %p71
      %p73 = scmp.ne.s32.totalorder %s62, %s65
      %p74 = scmp.eq.s32.totalorder %s31, 1
      %p75 = por %p73, %p74
      %p76 = scmp.ne.s32.totalorder %s65, %s66
      %p77 = scmp.eq.s32.totalorder %s31, 0
      %p78 = por %p76, %p77
      %p79 = scmp.ne.s32.totalorder %s65, %s66
      %p80 = scmp.eq.s32.totalorder %s32, 1
      %p81 = por %p79, %p80
      %p83 = scmp.ne.s32.totalorder %s66, %s82
      %p84 = scmp.eq.s32.totalorder %s32, 0
      %p85 = por %p83, %p84
      %s87 = sadd.s32 %s86, 1
      %p90 = scmp.eq.s32.totalorder %s26, 1
      %p91 = scmp.ne.s32.totalorder %s86, %s88
      %p92 = scmp.eq.s32.totalorder %s26, 0
      %p93 = por %p91, %p92
      %p94 = scmp.ne.s32.totalorder %s86, %s88
      %p95 = scmp.eq.s32.totalorder %s31, 1
      %p96 = por %p94, %p95
      %p97 = scmp.ne.s32.totalorder %s88, %s89
      %p98 = scmp.eq.s32.totalorder %s31, 0
      %p99 = por %p97, %p98
      %p100 = scmp.ne.s32.totalorder %s88, %s89
      %p101 = scmp.eq.s32.totalorder %s32, 1
      %p102 = por %p100, %p101
      %p104 = scmp.ne.s32.totalorder %s89, %s103
      %p105 = scmp.eq.s32.totalorder %s32, 0
      %p106 = por %p104, %p105
      %s108 = sadd.s32 %s107, 1
      %p111 = scmp.eq.s32.totalorder %s26, 1
      %p112 = scmp.ne.s32.totalorder %s107, %s109
      %p113 = scmp.eq.s32.totalorder %s26, 0
      %p114 = por %p112, %p113
      %p115 = scmp.ne.s32.totalorder %s107, %s109
      %p116 = scmp.eq.s32.totalorder %s31, 1
      %p117 = por %p115, %p116
      %p118 = scmp.ne.s32.totalorder %s109, %s110
      %p119 = scmp.eq.s32.totalorder %s31, 0
      %p120 = por %p118, %p119
      %p121 = scmp.ne.s32.totalorder %s109, %s110
      %p122 = scmp.eq.s32.totalorder %s32, 1
      %p123 = por %p121, %p122
      %p125 = scmp.ne.s32.totalorder %s110, %s124
      %p126 = scmp.eq.s32.totalorder %s32, 0
      %p127 = por %p125, %p126
      %s129 = sadd.s32 %s128, 1
      %p132 = scmp.eq.s32.totalorder %s26, 1
      %p133 = scmp.ne.s32.totalorder %s128, %s130
      %p134 = scmp.eq.s32.totalorder %s26, 0
      %p135 = por %p133, %p134
      %p136 = scmp.ne.s32.totalorder %s128, %s130
      %p137 = scmp.eq.s32.totalorder %s31, 1
      %p138 = por %p136, %p137
      %p139 = scmp.ne.s32.totalorder %s130, %s131
      %p140 = scmp.eq.s32.totalorder %s31, 0
      %p141 = por %p139, %p140
      %p142 = scmp.ne.s32.totalorder %s130, %s131
      %p143 = scmp.eq.s32.totalorder %s32, 1
      %p144 = por %p142, %p143
      %p146 = scmp.ne.s32.totalorder %s131, %s145
      %p147 = scmp.eq.s32.totalorder %s32, 0
      %p148 = por %p146, %p147
      %s150 = sadd.s32 %s149, 1
      %p153 = scmp.eq.s32.totalorder %s26, 1
      %p154 = scmp.ne.s32.totalorder %s149, %s151
      %p155 = scmp.eq.s32.totalorder %s26, 0
      %p156 = por %p154, %p155
      %p157 = scmp.ne.s32.totalorder %s149, %s151
      %p158 = scmp.eq.s32.totalorder %s31, 1
      %p159 = por %p157, %p158
      %p160 = scmp.ne.s32.totalorder %s151, %s152
      %p161 = scmp.eq.s32.totalorder %s31, 0
      %p162 = por %p160, %p161
      %p163 = scmp.ne.s32.totalorder %s151, %s152
      %p164 = scmp.eq.s32.totalorder %s32, 1
      %p165 = por %p163, %p164
      %p167 = scmp.ne.s32.totalorder %s152, %s166
      %p168 = scmp.eq.s32.totalorder %s32, 0
      %p169 = por %p167, %p168
      %s171 = sadd.s32 %s170, 1
      %p174 = scmp.eq.s32.totalorder %s26, 1
      %p175 = scmp.ne.s32.totalorder %s170, %s172
      %p176 = scmp.eq.s32.totalorder %s26, 0
      %p177 = por %p175, %p176
      %p178 = scmp.ne.s32.totalorder %s170, %s172
      %p179 = scmp.eq.s32.totalorder %s31, 1
      %p180 = por %p178, %p179
      %p181 = scmp.ne.s32.totalorder %s172, %s173
      %p182 = scmp.eq.s32.totalorder %s31, 0
      %p183 = por %p181, %p182
      %p184 = scmp.ne.s32.totalorder %s172, %s173
      %p185 = scmp.eq.s32.totalorder %s32, 1
      %p186 = por %p184, %p185
      %p188 = scmp.ne.s32.totalorder %s173, %s187
      %p189 = scmp.eq.s32.totalorder %s32, 0
      %p190 = por %p188, %p189
      %s192 = sadd.s32 %s191, 1
      %p195 = scmp.eq.s32.totalorder %s26, 1
      %p196 = scmp.ne.s32.totalorder %s191, %s193
      %p197 = scmp.eq.s32.totalorder %s26, 0
      %p198 = por %p196, %p197
      %p199 = scmp.ne.s32.totalorder %s191, %s193
      %p200 = scmp.eq.s32.totalorder %s31, 1
      %p201 = por %p199, %p200
      %p202 = scmp.ne.s32.totalorder %s193, %s194
      %p203 = scmp.eq.s32.totalorder %s31, 0
      %p204 = por %p202, %p203
      %p205 = scmp.ne.s32.totalorder %s193, %s194
      %p206 = scmp.eq.s32.totalorder %s32, 1
      %p207 = por %p205, %p206
      %p209 = scmp.ne.s32.totalorder %s194, %s208
      %p210 = scmp.eq.s32.totalorder %s32, 0
      %p211 = por %p209, %p210
      %s213 = sadd.s32 %s212, 1
      %p216 = scmp.eq.s32.totalorder %s26, 1
      %p217 = scmp.ne.s32.totalorder %s212, %s214
      %p218 = scmp.eq.s32.totalorder %s26, 0
      %p219 = por %p217, %p218
      %p220 = scmp.ne.s32.totalorder %s212, %s214
      %p221 = scmp.eq.s32.totalorder %s31, 1
      %p222 = por %p220, %p221
      %p223 = scmp.ne.s32.totalorder %s214, %s215
      %p224 = scmp.eq.s32.totalorder %s31, 0
      %p225 = por %p223, %p224
      %p226 = scmp.ne.s32.totalorder %s214, %s215
      %p227 = scmp.eq.s32.totalorder %s32, 1
      %p228 = por %p226, %p227
      %p230 = scmp.ne.s32.totalorder %s215, %s229
      %p231 = scmp.eq.s32.totalorder %s32, 0
      %p232 = por %p230, %p231
      %s234 = sadd.s32 %s233, 1
      %p237 = scmp.eq.s32.totalorder %s26, 1
      %p238 = scmp.ne.s32.totalorder %s233, %s235
      %p239 = scmp.eq.s32.totalorder %s26, 0
      %p240 = por %p238, %p239
      %p241 = scmp.ne.s32.totalorder %s233, %s235
      %p242 = scmp.eq.s32.totalorder %s31, 1
      %p243 = por %p241, %p242
      %p244 = scmp.ne.s32.totalorder %s235, %s236
      %p245 = scmp.eq.s32.totalorder %s31, 0
      %p246 = por %p244, %p245
      %p247 = scmp.ne.s32.totalorder %s235, %s236
      %p248 = scmp.eq.s32.totalorder %s32, 1
      %p249 = por %p247, %p248
      %p251 = scmp.ne.s32.totalorder %s236, %s250
      %p252 = scmp.eq.s32.totalorder %s32, 0
      %p253 = por %p251, %p252
      %s255 = sadd.s32 %s254, 1
      %p258 = scmp.eq.s32.totalorder %s26, 1
      %p259 = scmp.ne.s32.totalorder %s254, %s256
      %p260 = scmp.eq.s32.totalorder %s26, 0
      %p261 = por %p259, %p260
      %p262 = scmp.ne.s32.totalorder %s254, %s256
      %p263 = scmp.eq.s32.totalorder %s31, 1
      %p264 = por %p262, %p263
      %p265 = scmp.ne.s32.totalorder %s256, %s257
      %p266 = scmp.eq.s32.totalorder %s31, 0
      %p267 = por %p265, %p266
      %p268 = scmp.ne.s32.totalorder %s256, %s257
      %p269 = scmp.eq.s32.totalorder %s32, 1
      %p270 = por %p268, %p269
      %p272 = scmp.ne.s32.totalorder %s257, %s271
      %p273 = scmp.eq.s32.totalorder %s32, 0
      %p274 = por %p272, %p273
      %s276 = sadd.s32 %s275, 1
      %p279 = scmp.eq.s32.totalorder %s26, 1
      %p280 = scmp.ne.s32.totalorder %s275, %s277
      %p281 = scmp.eq.s32.totalorder %s26, 0
      %p282 = por %p280, %p281
      %p283 = scmp.ne.s32.totalorder %s275, %s277
      %p284 = scmp.eq.s32.totalorder %s31, 1
      %p285 = por %p283, %p284
      %p286 = scmp.ne.s32.totalorder %s277, %s278
      %p287 = scmp.eq.s32.totalorder %s31, 0
      %p288 = por %p286, %p287
      %p289 = scmp.ne.s32.totalorder %s277, %s278
      %p290 = scmp.eq.s32.totalorder %s32, 1
      %p291 = por %p289, %p290
      %p293 = scmp.ne.s32.totalorder %s278, %s292
      %p294 = scmp.eq.s32.totalorder %s32, 0
      %p295 = por %p293, %p294
      %s297 = sadd.s32 %s296, 1
      %p300 = scmp.eq.s32.totalorder %s26, 1
      %p301 = scmp.ne.s32.totalorder %s296, %s298
      %p302 = scmp.eq.s32.totalorder %s26, 0
      %p303 = por %p301, %p302
      %p304 = scmp.ne.s32.totalorder %s296, %s298
      %p305 = scmp.eq.s32.totalorder %s31, 1
      %p306 = por %p304, %p305
      %p307 = scmp.ne.s32.totalorder %s298, %s299
      %p308 = scmp.eq.s32.totalorder %s31, 0
      %p309 = por %p307, %p308
      %p310 = scmp.ne.s32.totalorder %s298, %s299
      %p311 = scmp.eq.s32.totalorder %s32, 1
      %p312 = por %p310, %p311
      %p314 = scmp.ne.s32.totalorder %s299, %s313
      %p315 = scmp.eq.s32.totalorder %s32, 0
      %p316 = por %p314, %p315
      %s318 = sadd.s32 %s317, 1
      %p321 = scmp.eq.s32.totalorder %s26, 1
      %p322 = scmp.ne.s32.totalorder %s317, %s319
      %p323 = scmp.eq.s32.totalorder %s26, 0
      %p324 = por %p322, %p323
      %p325 = scmp.ne.s32.totalorder %s317, %s319
      %p326 = scmp.eq.s32.totalorder %s31, 1
      %p327 = por %p325, %p326
      %p328 = scmp.ne.s32.totalorder %s319, %s320
      %p329 = scmp.eq.s32.totalorder %s31, 0
      %p330 = por %p328, %p329
      %p331 = scmp.ne.s32.totalorder %s319, %s320
      %p332 = scmp.eq.s32.totalorder %s32, 1
      %p333 = por %p331, %p332
      %p335 = scmp.ne.s32.totalorder %s320, %s334
      %p336 = scmp.eq.s32.totalorder %s32, 0
      %p337 = por %p335, %p336
      %s339 = sadd.s32 %s338, 1
      %p342 = scmp.eq.s32.totalorder %s26, 1
      %p343 = scmp.ne.s32.totalorder %s338, %s340
      %p344 = scmp.eq.s32.totalorder %s26, 0
      %p345 = por %p343, %p344
      %p346 = scmp.ne.s32.totalorder %s338, %s340
      %p347 = scmp.eq.s32.totalorder %s31, 1
      %p348 = por %p346, %p347
      %p349 = scmp.ne.s32.totalorder %s340, %s341
      %p350 = scmp.eq.s32.totalorder %s31, 0
      %p351 = por %p349, %p350
      %p352 = scmp.ne.s32.totalorder %s340, %s341
      %p353 = scmp.eq.s32.totalorder %s32, 1
      %p354 = por %p352, %p353
      %p356 = scmp.ne.s32.totalorder %s341, %s355
      %p357 = scmp.eq.s32.totalorder %s32, 0
      %p358 = por %p356, %p357
      %s359 = ssub.s32 %s26, %s33
      %p360 = scmp.eq.s32.totalorder %s359, 0
      %s362 = sadd.s32 %s361, 1
      %s363 = scalar_select %p360, %s361, %s362
      %p366 = pneg %p360
      %p367 = scmp.eq.s32.totalorder %s26, 1
      %p368 = por %p366, %p367
      %p369 = scmp.ne.s32.totalorder %s361, %s364
      %p370 = scmp.eq.s32.totalorder %s26, 0
      %p371 = por %p369, %p370
      %p372 = scmp.ne.s32.totalorder %s361, %s364
      %p373 = scmp.eq.s32.totalorder %s31, 1
      %p374 = por %p372, %p373
      %p375 = scmp.ne.s32.totalorder %s364, %s365
      %p376 = scmp.eq.s32.totalorder %s31, 0
      %p377 = por %p375, %p376
      %p378 = scmp.ne.s32.totalorder %s364, %s365
      %p379 = scmp.eq.s32.totalorder %s32, 1
      %p380 = por %p378, %p379
      %p382 = scmp.ne.s32.totalorder %s365, %s381
      %p383 = scmp.eq.s32.totalorder %s32, 0
      %p384 = por %p382, %p383
      %p385 = scmp.le.s32.totalorder 1, %s26
      %p386 = scmp.lt.s32.totalorder %s26, 3
      %p387 = pnand %p385, %p386
      %p388 = pneg %p387
      // Predicated region
      $region9: #{gate_forward.1} parent=5 // pred_check
        _
      $region10: #{gate_forward.1} parent=5 // pred_check_branch
        %390 = sbr.rel (%p387) target = $region12
      $region11: #{gate_forward.1} parent=5 // pred_region
        %s391 = ssub.s32 %s26, 1
        // Predicated region
        $region13: #{gate_forward.1} parent=11 // pred_check
          %p392 = pneg %p99
        $region14: #{gate_forward.1} parent=11 // pred_check_branch
          %394 = sbr.rel (%p392) target = $region16
        $region15: #{gate_forward.1} parent=11 // pred_region
          _
        $region16: #{gate_forward.1} parent=11 // pred_fallthru
          _
        // Predicated region
        $region17: #{gate_forward.1} parent=11 // pred_check
          %p395 = pneg %p120
        $region18: #{gate_forward.1} parent=11 // pred_check_branch
          %397 = sbr.rel (%p395) target = $region20
        $region19: #{gate_forward.1} parent=11 // pred_region
          _
        $region20: #{gate_forward.1} parent=11 // pred_fallthru
          _
        // Predicated region
        $region21: #{gate_forward.1} parent=11 // pred_check
          %p398 = pneg %p141
        $region22: #{gate_forward.1} parent=11 // pred_check_branch
          %400 = sbr.rel (%p398) target = $region24
        $region23: #{gate_forward.1} parent=11 // pred_region
          _
        $region24: #{gate_forward.1} parent=11 // pred_fallthru
          _
        // Predicated region
        $region25: #{gate_forward.1} parent=11 // pred_check
          %p401 = pneg %p162
        $region26: #{gate_forward.1} parent=11 // pred_check_branch
          %403 = sbr.rel (%p401) target = $region28
        $region27: #{gate_forward.1} parent=11 // pred_region
          _
        $region28: #{gate_forward.1} parent=11 // pred_fallthru
          _
        // Predicated region
        $region29: #{gate_forward.1} parent=11 // pred_check
          %p404 = pneg %p183
        $region30: #{gate_forward.1} parent=11 // pred_check_branch
          %406 = sbr.rel (%p404) target = $region32
        $region31: #{gate_forward.1} parent=11 // pred_region
          _
        $region32: #{gate_forward.1} parent=11 // pred_fallthru
          _
        // Predicated region
        $region33: #{gate_forward.1} parent=11 // pred_check
          %p407 = pneg %p204
        $region34: #{gate_forward.1} parent=11 // pred_check_branch
          %409 = sbr.rel (%p407) target = $region36
        $region35: #{gate_forward.1} parent=11 // pred_region
          _
        $region36: #{gate_forward.1} parent=11 // pred_fallthru
          _
        // Predicated region
        $region37: #{gate_forward.1} parent=11 // pred_check
          %p410 = pneg %p225
        $region38: #{gate_forward.1} parent=11 // pred_check_branch
          %412 = sbr.rel (%p410) target = $region40
        $region39: #{gate_forward.1} parent=11 // pred_region
          %s414 = ssub.s32 64, 64
          %415 = vsyncadd [#allocation5], %s414
          %s417 = sshll.u32 %s8, 4
          %s418 = int_to_ptr.vmem [resolvable:$true] %s417
          %420 = dma.vmem_to_smem %s418, 64, [#allocation3], [#allocation5]
        $region40: #{gate_forward.1} parent=11 // pred_fallthru
          _
        // Predicated region
        $region41: #{gate_forward.1} parent=11 // pred_check
          %p421 = pneg %p246
        $region42: #{gate_forward.1} parent=11 // pred_check_branch
          %423 = sbr.rel (%p421) target = $region44
        $region43: #{gate_forward.1} parent=11 // pred_region
          %s425 = ssub.s32 64, 64
          %426 = vsyncadd [#allocation4], %s425
          %429 = dma.hbm_to_smem %s9, 64, [#allocation6], [#allocation4]
        $region44: #{gate_forward.1} parent=11 // pred_fallthru
          _
        // Predicated region
        $region45: #{gate_forward.1} parent=11 // pred_check
          %p430 = pneg %p267
        $region46: #{gate_forward.1} parent=11 // pred_check_branch
          %432 = sbr.rel (%p430) target = $region48
        $region47: #{gate_forward.1} parent=11 // pred_region
          %s434 = ssub.s32 64, 64
          %435 = vsyncadd [#allocation8], %s434
          %438 = dma.hbm_to_smem %s10, 64, [#allocation7], [#allocation8]
        $region48: #{gate_forward.1} parent=11 // pred_fallthru
          _
        // Predicated region
        $region49: #{gate_forward.1} parent=11 // pred_check
          %p439 = pneg %p288
        $region50: #{gate_forward.1} parent=11 // pred_check_branch
          %441 = sbr.rel (%p439) target = $region52
        $region51: #{gate_forward.1} parent=11 // pred_region
          %s443 = ssub.s32 16, 16
          %444 = vsyncadd [#allocation10], %s443
          %s446 = sshll.u32 %s11, 4
          %s447 = int_to_ptr.vmem [resolvable:$true] %s446
          %449 = dma.vmem_to_smem %s447, 16, [#allocation9], [#allocation10]
        $region52: #{gate_forward.1} parent=11 // pred_fallthru
          _
        // Predicated region
        $region53: #{gate_forward.1} parent=11 // pred_check
          %p450 = pneg %p309
        $region54: #{gate_forward.1} parent=11 // pred_check_branch
          %452 = sbr.rel (%p450) target = $region56
        $region55: #{gate_forward.1} parent=11 // pred_region
          %s454 = ssub.s32 16, 16
          %455 = vsyncadd [#allocation10], %s454
          %s457 = sshll.u32 %s12, 4
          %s458 = int_to_ptr.vmem [resolvable:$true] %s457
          %460 = dma.vmem_to_smem %s458, 16, [#allocation11], [#allocation10]
        $region56: #{gate_forward.1} parent=11 // pred_fallthru
          _
        // Predicated region
        $region57: #{gate_forward.1} parent=11 // pred_check
          %p461 = pneg %p330
        $region58: #{gate_forward.1} parent=11 // pred_check_branch
          %463 = sbr.rel (%p461) target = $region60
        $region59: #{gate_forward.1} parent=11 // pred_region
          _
        $region60: #{gate_forward.1} parent=11 // pred_fallthru
          _
        // Predicated region
        $region61: #{gate_forward.1} parent=11 // pred_check
          %p464 = pneg %p351
        $region62: #{gate_forward.1} parent=11 // pred_check_branch
          %466 = sbr.rel (%p464) target = $region64
        $region63: #{gate_forward.1} parent=11 // pred_region
          %s468 = ssub.s32 16, 16
          %469 = vsyncadd [#allocation8], %s468
          %472 = dma.hbm_to_smem %s14, 16, [#allocation12], [#allocation8]
        $region64: #{gate_forward.1} parent=11 // pred_fallthru
          _
      $region12: #{gate_forward.1} parent=5 // pred_fallthru
        _
      %p473 = scmp.lt.s32.totalorder %s26, 2
      // Predicated region
      $region65: #{gate_forward.1} parent=5 // pred_check
        %p474 = pneg %p473
      $region66: #{gate_forward.1} parent=5 // pred_check_branch
        %476 = sbr.rel (%p474) target = $region68
      $region67: #{gate_forward.1} parent=5 // pred_region
        // Predicated region
        $region69: #{gate_forward.1} parent=67 // pred_check
          %p477 = pneg %p46
        $region70: #{gate_forward.1} parent=67 // pred_check_branch
          %479 = sbr.rel (%p477) target = $region72
        $region71: #{gate_forward.1} parent=67 // pred_region
          %p480 = scmp.lt.s32.totalorder %s26, 1
          %s481 = scalar_select %p480, %s26, 1
          %s482 = smul.addr %s481, 4
          %s483 = smul.addr %s482, 8
          %s484 = scalar_lea.vmem %s0, %s483
        $region72: #{gate_forward.1} parent=67 // pred_fallthru
          _
        // Predicated region
        $region73: #{gate_forward.1} parent=67 // pred_check
          %p485 = pneg %p72
        $region74: #{gate_forward.1} parent=67 // pred_check_branch
          %487 = sbr.rel (%p485) target = $region76
        $region75: #{gate_forward.1} parent=67 // pred_region
          %p488 = scmp.lt.s32.totalorder %s26, 1
          %s489 = scalar_select %p488, %s26, 1
          %s490 = smul.addr %s489, 8
          %s491 = smul.addr %s490, 8
          %s492 = scalar_lea.vmem %s1, %s491
        $region76: #{gate_forward.1} parent=67 // pred_fallthru
          _
      $region68: #{gate_forward.1} parent=5 // pred_fallthru
        _
      %p493 = scmp.le.s32.totalorder 1, %s26
      %p494 = scmp.lt.s32.totalorder %s26, 3
      %p495 = pnand %p493, %p494
      %p496 = pneg %p495
      // Predicated region
      $region77: #{gate_forward.1} parent=5 // pred_check
        _
      $region78: #{gate_forward.1} parent=5 // pred_check_branch
        %498 = sbr.rel (%p495) target = $region80
      $region79: #{gate_forward.1} parent=5 // pred_region
        %s499 = ssub.s32 %s26, 1
        // Predicated region
        $region81: #{gate_forward.1} parent=79 // pred_check
          %p500 = pneg %p225
        $region82: #{gate_forward.1} parent=79 // pred_check_branch
          %502 = sbr.rel (%p500) target = $region84
        $region83: #{gate_forward.1} parent=79 // pred_region
          %503 = dma.done [#allocation5], 64
        $region84: #{gate_forward.1} parent=79 // pred_fallthru
          _
        // Predicated region
        $region85: #{gate_forward.1} parent=79 // pred_check
          %p504 = pneg %p246
        $region86: #{gate_forward.1} parent=79 // pred_check_branch
          %506 = sbr.rel (%p504) target = $region88
        $region87: #{gate_forward.1} parent=79 // pred_region
          %507 = dma.done [#allocation4], 64
        $region88: #{gate_forward.1} parent=79 // pred_fallthru
          _
        // Predicated region
        $region89: #{gate_forward.1} parent=79 // pred_check
          %p508 = pneg %p267
        $region90: #{gate_forward.1} parent=79 // pred_check_branch
          %510 = sbr.rel (%p508) target = $region92
        $region91: #{gate_forward.1} parent=79 // pred_region
          %511 = dma.done [#allocation8], 64
        $region92: #{gate_forward.1} parent=79 // pred_fallthru
          _
        // Predicated region
        $region93: #{gate_forward.1} parent=79 // pred_check
          %p512 = pneg %p288
        $region94: #{gate_forward.1} parent=79 // pred_check_branch
          %514 = sbr.rel (%p512) target = $region96
        $region95: #{gate_forward.1} parent=79 // pred_region
          %515 = dma.done [#allocation10], 16
        $region96: #{gate_forward.1} parent=79 // pred_fallthru
          _
        // Predicated region
        $region97: #{gate_forward.1} parent=79 // pred_check
          %p516 = pneg %p309
        $region98: #{gate_forward.1} parent=79 // pred_check_branch
          %518 = sbr.rel (%p516) target = $region100
        $region99: #{gate_forward.1} parent=79 // pred_region
          %519 = dma.done [#allocation10], 16
        $region100: #{gate_forward.1} parent=79 // pred_fallthru
          _
        // Predicated region
        $region101: #{gate_forward.1} parent=79 // pred_check
          %p520 = pneg %p351
        $region102: #{gate_forward.1} parent=79 // pred_check_branch
          %522 = sbr.rel (%p520) target = $region104
        $region103: #{gate_forward.1} parent=79 // pred_region
          %523 = dma.done [#allocation8], 16
        $region104: #{gate_forward.1} parent=79 // pred_fallthru
          _
        %524 = sfence
        %p525 = scmp.lt.s32.totalorder %s31, 1
        %s526 = scalar_select %p525, %s31, 1
        %s527 = smul.addr %s526, 4
        %s528 = smul.addr %s527, 8
        %s529 = scalar_lea.vmem %s0, %s528
        %p530 = pneg %p52
        %p531 = pneg %p49
        %p532 = scmp.lt.s32.totalorder %s31, 1
        %s533 = scalar_select %p532, %s31, 1
        %s534 = smul.addr %s533, 8
        %s535 = smul.addr %s534, 8
        %s536 = scalar_lea.vmem %s1, %s535
        %p537 = pneg %p78
        %p538 = pneg %p75
        %p539 = pneg %p99
        %p540 = pneg %p96
        %p541 = pneg %p120
        %p542 = pneg %p117
        %p543 = pneg %p141
        %p544 = pneg %p138
        %p545 = pneg %p162
        %p546 = pneg %p159
        %p547 = pneg %p183
        %p548 = pneg %p180
        %p549 = pneg %p204
        %p550 = pneg %p201
        %p551 = pneg %p225
        %p552 = pneg %p222
        %p553 = pneg %p246
        %p554 = pneg %p243
        %p555 = pneg %p267
        %p556 = pneg %p264
        %p557 = pneg %p288
        %p558 = pneg %p285
        %p559 = pneg %p309
        %p560 = pneg %p306
        %p561 = pneg %p330
        %p562 = pneg %p327
        %p563 = pneg %p351
        %p564 = pneg %p348
        %p565 = pneg %p377
        %p566 = pneg %p374
        %p567 = scmp.lt.s32.totalorder %s31, 1
        %s568 = scalar_select %p567, %s31, 1
        %s569 = smul.addr %s568, 4
        %s570 = smul.addr %s569, 8
        %s571 = scalar_lea.vmem %s15, %s570
        %p572 = scmp.lt.s32.totalorder %s31, 1
        %s573 = scalar_select %p572, %s31, 1
        %s574 = smul.addr %s573, 4
        %s575 = smul.addr %s574, 8
        %s576 = scalar_lea.vmem %s0, %s575
        %p577 = scmp.lt.s32.totalorder %s31, 1
        %s578 = scalar_select %p577, %s31, 1
        %s579 = smul.addr %s578, 8
        %s580 = smul.addr %s579, 8
        %s581 = scalar_lea.vmem %s1, %s580
        %p582 = scmp.lt.s32.totalorder %s31, 1
        %s583 = scalar_select %p582, %s31, 1
        %s584 = smul.addr %s583, 4
        %s585 = smul.addr %s584, 8
        %s586 = scalar_lea.vmem %s15, %s585
        %v587 = vld [vmem:[%s2] sm:$0xff]
        %v588 = vld [vmem:[%s2 + $0x8] sm:$0xff]
        %v589 = vld [vmem:[%s2 + $0x10] sm:$0xff]
        %v590 = vld [vmem:[%s2 + $0x18] sm:$0xff]
        %v591 = vld [vmem:[%s576] sm:$0xff]
        %s592 = scalar_lea.vmem %s576, 8
        %v593 = vld [vmem:[%s592] sm:$0xff]
        %s594 = scalar_lea.vmem %s576, 16
        %v595 = vld [vmem:[%s594] sm:$0xff]
        %s596 = scalar_lea.vmem %s576, 24
        %v597 = vld [vmem:[%s596] sm:$0xff]
        %vm598 = vcmask 261120
        %v600 = vsel %vm598, %v591, 0
        %602 = vmatprep.subr.mxu0 0.0
        %603 = vmatpush1.msra.mxu0 0.0
        %604 = vmatprep.subr.mxu0 0.0
        %605 = vmatpush1.msra.mxu0 0.0
        %606 = vmatprep.subr.mxu0 0.0
        %607 = vmatpush1.msra.mxu0 0.0
        %608 = vmatprep.subr.mxu0 0.0
        %609 = vmatpush1.msra.mxu0 0.0
        %610 = vmatprep.subr.mxu0 0.0
        %611 = vmatpush1.msra.mxu0 0.0
        %612 = vmatprep.subr.mxu0 0.0
        %613 = vmatpush1.msra.mxu0 0.0
        %614 = vmatprep.subr.mxu0 0.0
        %615 = vmatpush1.msra.mxu0 0.0
        %616 = vmatprep.subr.mxu0 0.0
        %617 = vmatpush1.msra.mxu0 0.0
        %618 = vmatprep.subr.mxu0 0.0
        %619 = vmatpush1.msra.mxu0 0.0
        %620 = vmatprep.subr.mxu0 0.0
        %621 = vmatpush1.msra.mxu0 0.0
        %622 = vmatprep.subr.mxu0 0.0
        %623 = vmatpush1.msra.mxu0 0.0
        %624 = vmatprep.subr.mxu0 0.0
        %625 = vmatpush1.msra.mxu0 0.0
        %626 = vmatprep.subr.mxu0 0.0
        %627 = vmatpush1.msra.mxu0 %v590
        %628 = vmatprep.subr.mxu0 0.0
        %629 = vmatpush1.msra.mxu0 %v589
        %630 = vmatprep.subr.mxu0 0.0
        %631 = vmatpush1.msra.mxu0 %v588
        %632 = vmatprep.subr.mxu0 0.0
        %633 = vmatpush1.msra.mxu0 %v587
        %634 = vmatprep.subr.mxu0 0.0
        %635 = vmatpush2.msra.mxu0 0.0
        %636 = vmatprep.subr.mxu0 0.0
        %637 = vmatpush2.msra.mxu0 0.0
        %638 = vmatprep.subr.mxu0 0.0
        %639 = vmatpush2.msra.mxu0 0.0
        %640 = vmatprep.subr.mxu0 0.0
        %641 = vmatpush2.msra.mxu0 0.0
        %642 = vmatprep.subr.mxu0 0.0
        %643 = vmatpush2.msra.mxu0 0.0
        %644 = vmatprep.subr.mxu0 0.0
        %645 = vmatpush2.msra.mxu0 0.0
        %646 = vmatprep.subr.mxu0 0.0
        %647 = vmatpush2.msra.mxu0 0.0
        %648 = vmatprep.subr.mxu0 0.0
        %649 = vmatpush2.msra.mxu0 0.0
        %650 = vmatprep.subr.mxu0 0.0
        %651 = vmatpush2.msra.mxu0 0.0
        %652 = vmatprep.subr.mxu0 0.0
        %653 = vmatpush2.msra.mxu0 0.0
        %654 = vmatprep.subr.mxu0 0.0
        %655 = vmatpush2.msra.mxu0 0.0
        %656 = vmatprep.subr.mxu0 0.0
        %657 = vmatpush2.msra.mxu0 0.0
        %658 = vmatprep.subr.mxu0 0.0
        %659 = vmatpush2.msra.mxu0 0.0
        %660 = vmatprep.subr.mxu0 0.0
        %661 = vmatpush2.msra.mxu0 0.0
        %662 = vmatprep.subr.mxu0 0.0
        %663 = vmatpush2.msra.mxu0 0.0
        %664 = vmatprep.subr.mxu0 0.0
        %665 = vmatpush2.msra.mxu0 0.0
        %666 = vmatprep.mubr.f32.mxu0 0.0
        %667 = vmatmul.mubr.f32.gmra.mxu0 %v600
        %v668 = vpop.f32.mrf.mxu0
        %v669 = vadd.f32 0.0, %v668
        %v670 = vpop.f32.mrf.mxu0
        %671 = vdwg.mxu0
        %v673 = vsel %vm598, %v593, 0
        %675 = vmatprep.subr.mxu0 0.0
        %676 = vmatpush1.msra.mxu0 0.0
        %677 = vmatprep.subr.mxu0 0.0
        %678 = vmatpush1.msra.mxu0 0.0
        %679 = vmatprep.subr.mxu0 0.0
        %680 = vmatpush1.msra.mxu0 0.0
        %681 = vmatprep.subr.mxu0 0.0
        %682 = vmatpush1.msra.mxu0 0.0
        %683 = vmatprep.subr.mxu0 0.0
        %684 = vmatpush1.msra.mxu0 0.0
        %685 = vmatprep.subr.mxu0 0.0
        %686 = vmatpush1.msra.mxu0 0.0
        %687 = vmatprep.subr.mxu0 0.0
        %688 = vmatpush1.msra.mxu0 0.0
        %689 = vmatprep.subr.mxu0 0.0
        %690 = vmatpush1.msra.mxu0 0.0
        %691 = vmatprep.subr.mxu0 0.0
        %692 = vmatpush1.msra.mxu0 0.0
        %693 = vmatprep.subr.mxu0 0.0
        %694 = vmatpush1.msra.mxu0 0.0
        %695 = vmatprep.subr.mxu0 0.0
        %696 = vmatpush1.msra.mxu0 0.0
        %697 = vmatprep.subr.mxu0 0.0
        %698 = vmatpush1.msra.mxu0 0.0
        %699 = vmatprep.subr.mxu0 0.0
        %700 = vmatpush1.msra.mxu0 %v590
        %701 = vmatprep.subr.mxu0 0.0
        %702 = vmatpush1.msra.mxu0 %v589
        %703 = vmatprep.subr.mxu0 0.0
        %704 = vmatpush1.msra.mxu0 %v588
        %705 = vmatprep.subr.mxu0 0.0
        %706 = vmatpush1.msra.mxu0 %v587
        %707 = vmatprep.subr.mxu0 0.0
        %708 = vmatpush2.msra.mxu0 0.0
        %709 = vmatprep.subr.mxu0 0.0
        %710 = vmatpush2.msra.mxu0 0.0
        %711 = vmatprep.subr.mxu0 0.0
        %712 = vmatpush2.msra.mxu0 0.0
        %713 = vmatprep.subr.mxu0 0.0
        %714 = vmatpush2.msra.mxu0 0.0
        %715 = vmatprep.subr.mxu0 0.0
        %716 = vmatpush2.msra.mxu0 0.0
        %717 = vmatprep.subr.mxu0 0.0
        %718 = vmatpush2.msra.mxu0 0.0
        %719 = vmatprep.subr.mxu0 0.0
        %720 = vmatpush2.msra.mxu0 0.0
        %721 = vmatprep.subr.mxu0 0.0
        %722 = vmatpush2.msra.mxu0 0.0
        %723 = vmatprep.subr.mxu0 0.0
        %724 = vmatpush2.msra.mxu0 0.0
        %725 = vmatprep.subr.mxu0 0.0
        %726 = vmatpush2.msra.mxu0 0.0
        %727 = vmatprep.subr.mxu0 0.0
        %728 = vmatpush2.msra.mxu0 0.0
        %729 = vmatprep.subr.mxu0 0.0
        %730 = vmatpush2.msra.mxu0 0.0
        %731 = vmatprep.subr.mxu0 0.0
        %732 = vmatpush2.msra.mxu0 0.0
        %733 = vmatprep.subr.mxu0 0.0
        %734 = vmatpush2.msra.mxu0 0.0
        %735 = vmatprep.subr.mxu0 0.0
        %736 = vmatpush2.msra.mxu0 0.0
        %737 = vmatprep.subr.mxu0 0.0
        %738 = vmatpush2.msra.mxu0 0.0
        %739 = vmatprep.mubr.f32.mxu0 0.0
        %740 = vmatmul.mubr.f32.gmra.mxu0 %v673
        %v741 = vpop.f32.mrf.mxu0
        %v742 = vadd.f32 0.0, %v741
        %v743 = vpop.f32.mrf.mxu0
        %744 = vdwg.mxu0
        %v746 = vsel %vm598, %v595, 0
        %748 = vmatprep.subr.mxu0 0.0
        %749 = vmatpush1.msra.mxu0 0.0
        %750 = vmatprep.subr.mxu0 0.0
        %751 = vmatpush1.msra.mxu0 0.0
        %752 = vmatprep.subr.mxu0 0.0
        %753 = vmatpush1.msra.mxu0 0.0
        %754 = vmatprep.subr.mxu0 0.0
        %755 = vmatpush1.msra.mxu0 0.0
        %756 = vmatprep.subr.mxu0 0.0
        %757 = vmatpush1.msra.mxu0 0.0
        %758 = vmatprep.subr.mxu0 0.0
        %759 = vmatpush1.msra.mxu0 0.0
        %760 = vmatprep.subr.mxu0 0.0
        %761 = vmatpush1.msra.mxu0 0.0
        %762 = vmatprep.subr.mxu0 0.0
        %763 = vmatpush1.msra.mxu0 0.0
        %764 = vmatprep.subr.mxu0 0.0
        %765 = vmatpush1.msra.mxu0 0.0
        %766 = vmatprep.subr.mxu0 0.0
        %767 = vmatpush1.msra.mxu0 0.0
        %768 = vmatprep.subr.mxu0 0.0
        %769 = vmatpush1.msra.mxu0 0.0
        %770 = vmatprep.subr.mxu0 0.0
        %771 = vmatpush1.msra.mxu0 0.0
        %772 = vmatprep.subr.mxu0 0.0
        %773 = vmatpush1.msra.mxu0 %v590
        %774 = vmatprep.subr.mxu0 0.0
        %775 = vmatpush1.msra.mxu0 %v589
        %776 = vmatprep.subr.mxu0 0.0
        %777 = vmatpush1.msra.mxu0 %v588
        %778 = vmatprep.subr.mxu0 0.0
        %779 = vmatpush1.msra.mxu0 %v587
        %780 = vmatprep.subr.mxu0 0.0
        %781 = vmatpush2.msra.mxu0 0.0
        %782 = vmatprep.subr.mxu0 0.0
        %783 = vmatpush2.msra.mxu0 0.0
        %784 = vmatprep.subr.mxu0 0.0
        %785 = vmatpush2.msra.mxu0 0.0
        %786 = vmatprep.subr.mxu0 0.0
        %787 = vmatpush2.msra.mxu0 0.0
        %788 = vmatprep.subr.mxu0 0.0
        %789 = vmatpush2.msra.mxu0 0.0
        %790 = vmatprep.subr.mxu0 0.0
        %791 = vmatpush2.msra.mxu0 0.0
        %792 = vmatprep.subr.mxu0 0.0
        %793 = vmatpush2.msra.mxu0 0.0
        %794 = vmatprep.subr.mxu0 0.0
        %795 = vmatpush2.msra.mxu0 0.0
        %796 = vmatprep.subr.mxu0 0.0
        %797 = vmatpush2.msra.mxu0 0.0
        %798 = vmatprep.subr.mxu0 0.0
        %799 = vmatpush2.msra.mxu0 0.0
        %800 = vmatprep.subr.mxu0 0.0
        %801 = vmatpush2.msra.mxu0 0.0
        %802 = vmatprep.subr.mxu0 0.0
        %803 = vmatpush2.msra.mxu0 0.0
        %804 = vmatprep.subr.mxu0 0.0
        %805 = vmatpush2.msra.mxu0 0.0
        %806 = vmatprep.subr.mxu0 0.0
        %807 = vmatpush2.msra.mxu0 0.0
        %808 = vmatprep.subr.mxu0 0.0
        %809 = vmatpush2.msra.mxu0 0.0
        %810 = vmatprep.subr.mxu0 0.0
        %811 = vmatpush2.msra.mxu0 0.0
        %812 = vmatprep.mubr.f32.mxu0 0.0
        %813 = vmatmul.mubr.f32.gmra.mxu0 %v746
        %v814 = vpop.f32.mrf.mxu0
        %v815 = vadd.f32 0.0, %v814
        %v816 = vpop.f32.mrf.mxu0
        %817 = vdwg.mxu0
        %v819 = vsel %vm598, %v597, 0
        %821 = vmatprep.subr.mxu0 0.0
        %822 = vmatpush1.msra.mxu0 0.0
        %823 = vmatprep.subr.mxu0 0.0
        %824 = vmatpush1.msra.mxu0 0.0
        %825 = vmatprep.subr.mxu0 0.0
        %826 = vmatpush1.msra.mxu0 0.0
        %827 = vmatprep.subr.mxu0 0.0
        %828 = vmatpush1.msra.mxu0 0.0
        %829 = vmatprep.subr.mxu0 0.0
        %830 = vmatpush1.msra.mxu0 0.0
        %831 = vmatprep.subr.mxu0 0.0
        %832 = vmatpush1.msra.mxu0 0.0
        %833 = vmatprep.subr.mxu0 0.0
        %834 = vmatpush1.msra.mxu0 0.0
        %835 = vmatprep.subr.mxu0 0.0
        %836 = vmatpush1.msra.mxu0 0.0
        %837 = vmatprep.subr.mxu0 0.0
        %838 = vmatpush1.msra.mxu0 0.0
        %839 = vmatprep.subr.mxu0 0.0
        %840 = vmatpush1.msra.mxu0 0.0
        %841 = vmatprep.subr.mxu0 0.0
        %842 = vmatpush1.msra.mxu0 0.0
        %843 = vmatprep.subr.mxu0 0.0
        %844 = vmatpush1.msra.mxu0 0.0
        %845 = vmatprep.subr.mxu0 0.0
        %846 = vmatpush1.msra.mxu0 %v590
        %847 = vmatprep.subr.mxu0 0.0
        %848 = vmatpush1.msra.mxu0 %v589
        %849 = vmatprep.subr.mxu0 0.0
        %850 = vmatpush1.msra.mxu0 %v588
        %851 = vmatprep.subr.mxu0 0.0
        %852 = vmatpush1.msra.mxu0 %v587
        %853 = vmatprep.subr.mxu0 0.0
        %854 = vmatpush2.msra.mxu0 0.0
        %855 = vmatprep.subr.mxu0 0.0
        %856 = vmatpush2.msra.mxu0 0.0
        %857 = vmatprep.subr.mxu0 0.0
        %858 = vmatpush2.msra.mxu0 0.0
        %859 = vmatprep.subr.mxu0 0.0
        %860 = vmatpush2.msra.mxu0 0.0
        %861 = vmatprep.subr.mxu0 0.0
        %862 = vmatpush2.msra.mxu0 0.0
        %863 = vmatprep.subr.mxu0 0.0
        %864 = vmatpush2.msra.mxu0 0.0
        %865 = vmatprep.subr.mxu0 0.0
        %866 = vmatpush2.msra.mxu0 0.0
        %867 = vmatprep.subr.mxu0 0.0
        %868 = vmatpush2.msra.mxu0 0.0
        %869 = vmatprep.subr.mxu0 0.0
        %870 = vmatpush2.msra.mxu0 0.0
        %871 = vmatprep.subr.mxu0 0.0
        %872 = vmatpush2.msra.mxu0 0.0
        %873 = vmatprep.subr.mxu0 0.0
        %874 = vmatpush2.msra.mxu0 0.0
        %875 = vmatprep.subr.mxu0 0.0
        %876 = vmatpush2.msra.mxu0 0.0
        %877 = vmatprep.subr.mxu0 0.0
        %878 = vmatpush2.msra.mxu0 0.0
        %879 = vmatprep.subr.mxu0 0.0
        %880 = vmatpush2.msra.mxu0 0.0
        %881 = vmatprep.subr.mxu0 0.0
        %882 = vmatpush2.msra.mxu0 0.0
        %883 = vmatprep.subr.mxu0 0.0
        %884 = vmatpush2.msra.mxu0 0.0
        %885 = vmatprep.mubr.f32.mxu0 0.0
        %886 = vmatmul.mubr.f32.gmra.mxu0 %v819
        %v887 = vpop.f32.mrf.mxu0
        %v888 = vadd.f32 0.0, %v887
        %v889 = vpop.f32.mrf.mxu0
        %890 = vdwg.mxu0
        %v891 = vld [vmem:[%s581] sm:$0xff]
        %v892 = vld [vmem:[%s581 + $0x8] sm:$0xff]
        %v893 = vld [vmem:[%s581 + $0x10] sm:$0xff]
        %v894 = vld [vmem:[%s581 + $0x18] sm:$0xff]
        %v895 = vld [vmem:[%s581 + $0x20] sm:$0xff]
        %v896 = vld [vmem:[%s581 + $0x28] sm:$0xff]
        %v897 = vld [vmem:[%s581 + $0x30] sm:$0xff]
        %v898 = vld [vmem:[%s581 + $0x38] sm:$0xff]
        %v899 = vld [vmem:[%s4] sm:$0xff]
        %vm900 = vcmask 64512
        %v902 = vsel %vm900, %v891, 0
        %v905 = vsel %vm900, %v892, 0
        %v908 = vsel %vm900, %v893, 0
        %v911 = vsel %vm900, %v894, 0
        %v914 = vsel %vm900, %v895, 0
        %v917 = vsel %vm900, %v896, 0
        %v920 = vsel %vm900, %v897, 0
        %v923 = vsel %vm900, %v898, 0
        %925 = vmatprep.subr.mxu0 0.0
        %926 = vmatpush1.msra.mxu0 0.0
        %927 = vmatprep.subr.mxu0 0.0
        %928 = vmatpush1.msra.mxu0 0.0
        %929 = vmatprep.subr.mxu0 0.0
        %930 = vmatpush1.msra.mxu0 0.0
        %931 = vmatprep.subr.mxu0 0.0
        %932 = vmatpush1.msra.mxu0 0.0
        %933 = vmatprep.subr.mxu0 0.0
        %934 = vmatpush1.msra.mxu0 0.0
        %935 = vmatprep.subr.mxu0 0.0
        %936 = vmatpush1.msra.mxu0 0.0
        %937 = vmatprep.subr.mxu0 0.0
        %938 = vmatpush1.msra.mxu0 0.0
        %939 = vmatprep.subr.mxu0 0.0
        %940 = vmatpush1.msra.mxu0 0.0
        %941 = vmatprep.subr.mxu0 0.0
        %942 = vmatpush1.msra.mxu0 0.0
        %943 = vmatprep.subr.mxu0 0.0
        %944 = vmatpush1.msra.mxu0 0.0
        %945 = vmatprep.subr.mxu0 0.0
        %946 = vmatpush1.msra.mxu0 0.0
        %947 = vmatprep.subr.mxu0 0.0
        %948 = vmatpush1.msra.mxu0 0.0
        %949 = vmatprep.subr.mxu0 0.0
        %950 = vmatpush1.msra.mxu0 0.0
        %951 = vmatprep.subr.mxu0 0.0
        %952 = vmatpush1.msra.mxu0 0.0
        %953 = vmatprep.subr.mxu0 0.0
        %954 = vmatpush1.msra.mxu0 0.0
        %955 = vmatprep.subr.mxu0 0.0
        %956 = vmatpush1.msra.mxu0 %v899
        %957 = vmatprep.subr.mxu0 0.0
        %958 = vmatpush2.msra.mxu0 0.0
        %959 = vmatprep.subr.mxu0 0.0
        %960 = vmatpush2.msra.mxu0 0.0
        %961 = vmatprep.subr.mxu0 0.0
        %962 = vmatpush2.msra.mxu0 0.0
        %963 = vmatprep.subr.mxu0 0.0
        %964 = vmatpush2.msra.mxu0 0.0
        %965 = vmatprep.subr.mxu0 0.0
        %966 = vmatpush2.msra.mxu0 0.0
        %967 = vmatprep.subr.mxu0 0.0
        %968 = vmatpush2.msra.mxu0 0.0
        %969 = vmatprep.subr.mxu0 0.0
        %970 = vmatpush2.msra.mxu0 0.0
        %971 = vmatprep.subr.mxu0 0.0
        %972 = vmatpush2.msra.mxu0 0.0
        %973 = vmatprep.subr.mxu0 0.0
        %974 = vmatpush2.msra.mxu0 0.0
        %975 = vmatprep.subr.mxu0 0.0
        %976 = vmatpush2.msra.mxu0 0.0
        %977 = vmatprep.subr.mxu0 0.0
        %978 = vmatpush2.msra.mxu0 0.0
        %979 = vmatprep.subr.mxu0 0.0
        %980 = vmatpush2.msra.mxu0 0.0
        %981 = vmatprep.subr.mxu0 0.0
        %982 = vmatpush2.msra.mxu0 0.0
        %983 = vmatprep.subr.mxu0 0.0
        %984 = vmatpush2.msra.mxu0 0.0
        %985 = vmatprep.subr.mxu0 0.0
        %986 = vmatpush2.msra.mxu0 0.0
        %987 = vmatprep.subr.mxu0 0.0
        %988 = vmatpush2.msra.mxu0 0.0
        %989 = vmatprep.mubr.f32.mxu0 0.0
        %990 = vmatmul.mubr.f32.gmra.mxu0 %v902
        %v991 = vpop.f32.mrf.mxu0
        %v992 = vadd.f32 0.0, %v991
        %v993 = vpop.f32.mrf.mxu0
        %994 = vmatprep.mubr.f32.mxu0 0.0
        %995 = vmatmul.mubr.f32.gmra.mxu0 %v905
        %v996 = vpop.f32.mrf.mxu0
        %v997 = vadd.f32 0.0, %v996
        %v998 = vpop.f32.mrf.mxu0
        %999 = vmatprep.mubr.f32.mxu0 0.0
        %1000 = vmatmul.mubr.f32.gmra.mxu0 %v908
        %v1001 = vpop.f32.mrf.mxu0
        %v1002 = vadd.f32 0.0, %v1001
        %v1003 = vpop.f32.mrf.mxu0
        %1004 = vmatprep.mubr.f32.mxu0 0.0
        %1005 = vmatmul.mubr.f32.gmra.mxu0 %v911
        %v1006 = vpop.f32.mrf.mxu0
        %v1007 = vadd.f32 0.0, %v1006
        %v1008 = vpop.f32.mrf.mxu0
        %1009 = vmatprep.mubr.f32.mxu0 0.0
        %1010 = vmatmul.mubr.f32.gmra.mxu0 %v914
        %v1011 = vpop.f32.mrf.mxu0
        %v1012 = vadd.f32 0.0, %v1011
        %v1013 = vpop.f32.mrf.mxu0
        %1014 = vmatprep.mubr.f32.mxu0 0.0
        %1015 = vmatmul.mubr.f32.gmra.mxu0 %v917
        %v1016 = vpop.f32.mrf.mxu0
        %v1017 = vadd.f32 0.0, %v1016
        %v1018 = vpop.f32.mrf.mxu0
        %1019 = vmatprep.mubr.f32.mxu0 0.0
        %1020 = vmatmul.mubr.f32.gmra.mxu0 %v920
        %v1021 = vpop.f32.mrf.mxu0
        %v1022 = vadd.f32 0.0, %v1021
        %v1023 = vpop.f32.mrf.mxu0
        %1024 = vmatprep.mubr.f32.mxu0 0.0
        %1025 = vmatmul.mubr.f32.gmra.mxu0 %v923
        %v1026 = vpop.f32.mrf.mxu0
        %v1027 = vadd.f32 0.0, %v1026
        %v1028 = vpop.f32.mrf.mxu0
        %1029 = vdwg.mxu0
        %v1030 = vld [vmem:[%s3] sm:$0xff]
        %s1031 = sld [smem:[#allocation3]]
        %v1032 = vstv %s1031
        %v1033 = vmul.f32 %v1032, %v669
        %s1034 = sld [smem:[#allocation3 + $0x1]]
        %v1035 = vstv %s1034
        %v1036 = vmul.f32 %v1035, %v669
        %1038 = vrot.lane.b32.xlu0 %v1036, 120
        %v1039 = vpop.permute.xlu0 %1038
        %v1041 = vadd.f32 %v1033, %v1039
        %s1042 = sld [smem:[#allocation3 + $0x2]]
        %v1043 = vstv %s1042
        %v1044 = vmul.f32 %v1043, %v669
        %1046 = vrot.lane.b32.xlu0 %v1044, 112
        %v1047 = vpop.permute.xlu0 %1046
        %v1049 = vadd.f32 %v1041, %v1047
        %s1050 = sld [smem:[#allocation3 + $0x3]]
        %v1051 = vstv %s1050
        %v1052 = vmul.f32 %v1051, %v669
        %1054 = vrot.lane.b32.xlu0 %v1052, 104
        %v1055 = vpop.permute.xlu0 %1054
        %v1057 = vadd.f32 %v1049, %v1055
        %s1058 = sld [smem:[#allocation3 + $0x4]]
        %v1059 = vstv %s1058
        %v1060 = vmul.f32 %v1059, %v742
        %v1061 = vadd.f32 %v1057, %v1060
        %s1062 = sld [smem:[#allocation3 + $0x5]]
        %v1063 = vstv %s1062
        %v1064 = vmul.f32 %v1063, %v742
        %1066 = vrot.lane.b32.xlu0 %v1064, 120
        %v1067 = vpop.permute.xlu0 %1066
        %v1069 = vadd.f32 %v1061, %v1067
        %s1070 = sld [smem:[#allocation3 + $0x6]]
        %v1071 = vstv %s1070
        %v1072 = vmul.f32 %v1071, %v742
        %1074 = vrot.lane.b32.xlu0 %v1072, 112
        %v1075 = vpop.permute.xlu0 %1074
        %v1077 = vadd.f32 %v1069, %v1075
        %s1078 = sld [smem:[#allocation3 + $0x7]]
        %v1079 = vstv %s1078
        %v1080 = vmul.f32 %v1079, %v742
        %1082 = vrot.lane.b32.xlu0 %v1080, 104
        %v1083 = vpop.permute.xlu0 %1082
        %v1085 = vadd.f32 %v1077, %v1083
        %s1086 = sld [smem:[#allocation3 + $0x8]]
        %v1087 = vstv %s1086
        %v1088 = vmul.f32 %v1087, %v815
        %v1089 = vadd.f32 %v1085, %v1088
        %s1090 = sld [smem:[#allocation3 + $0x9]]
        %v1091 = vstv %s1090
        %v1092 = vmul.f32 %v1091, %v815
        %1094 = vrot.lane.b32.xlu0 %v1092, 120
        %v1095 = vpop.permute.xlu0 %1094
        %v1097 = vadd.f32 %v1089, %v1095
        %s1098 = sld [smem:[#allocation3 + $0xa]]
        %v1099 = vstv %s1098
        %v1100 = vmul.f32 %v1099, %v815
        %1102 = vrot.lane.b32.xlu0 %v1100, 112
        %v1103 = vpop.permute.xlu0 %1102
        %v1105 = vadd.f32 %v1097, %v1103
        %s1106 = sld [smem:[#allocation3 + $0xb]]
        %v1107 = vstv %s1106
        %v1108 = vmul.f32 %v1107, %v815
        %1110 = vrot.lane.b32.xlu0 %v1108, 104
        %v1111 = vpop.permute.xlu0 %1110
        %v1113 = vadd.f32 %v1105, %v1111
        %s1114 = sld [smem:[#allocation3 + $0xc]]
        %v1115 = vstv %s1114
        %v1116 = vmul.f32 %v1115, %v888
        %v1117 = vadd.f32 %v1113, %v1116
        %s1118 = sld [smem:[#allocation3 + $0xd]]
        %v1119 = vstv %s1118
        %v1120 = vmul.f32 %v1119, %v888
        %1122 = vrot.lane.b32.xlu0 %v1120, 120
        %v1123 = vpop.permute.xlu0 %1122
        %v1125 = vadd.f32 %v1117, %v1123
        %s1126 = sld [smem:[#allocation3 + $0xe]]
        %v1127 = vstv %s1126
        %v1128 = vmul.f32 %v1127, %v888
        %1130 = vrot.lane.b32.xlu0 %v1128, 112
        %v1131 = vpop.permute.xlu0 %1130
        %v1133 = vadd.f32 %v1125, %v1131
        %s1134 = sld [smem:[#allocation3 + $0xf]]
        %v1135 = vstv %s1134
        %v1136 = vmul.f32 %v1135, %v888
        %1138 = vrot.lane.b32.xlu0 %v1136, 104
        %v1139 = vpop.permute.xlu0 %1138
        %v1141 = vadd.f32 %v1133, %v1139
        %s1142 = sld [smem:[#allocation6]]
        %v1143 = vstv %s1142
        %v1144 = vmul.f32 %v1143, %v992
        %s1145 = sld [smem:[#allocation6 + $0x1]]
        %v1146 = vstv %s1145
        %v1147 = vmul.f32 %v1146, %v997
        %v1148 = vadd.f32 %v1144, %v1147
        %s1149 = sld [smem:[#allocation6 + $0x2]]
        %v1150 = vstv %s1149
        %v1151 = vmul.f32 %v1150, %v1002
        %v1152 = vadd.f32 %v1148, %v1151
        %s1153 = sld [smem:[#allocation6 + $0x3]]
        %v1154 = vstv %s1153
        %v1155 = vmul.f32 %v1154, %v1007
        %v1156 = vadd.f32 %v1152, %v1155
        %s1157 = sld [smem:[#allocation6 + $0x4]]
        %v1158 = vstv %s1157
        %v1159 = vmul.f32 %v1158, %v1012
        %v1160 = vadd.f32 %v1156, %v1159
        %s1161 = sld [smem:[#allocation6 + $0x5]]
        %v1162 = vstv %s1161
        %v1163 = vmul.f32 %v1162, %v1017
        %v1164 = vadd.f32 %v1160, %v1163
        %s1165 = sld [smem:[#allocation6 + $0x6]]
        %v1166 = vstv %s1165
        %v1167 = vmul.f32 %v1166, %v1022
        %v1168 = vadd.f32 %v1164, %v1167
        %s1169 = sld [smem:[#allocation6 + $0x7]]
        %v1170 = vstv %s1169
        %v1171 = vmul.f32 %v1170, %v1027
        %v1172 = vadd.f32 %v1168, %v1171
        %v1174 = vsel %vm900, %v1030, 0
        %1176 = vmatprep.subr.mxu0 0.0
        %1177 = vmatpush1.msra.mxu0 0.0
        %1178 = vmatprep.subr.mxu0 0.0
        %1179 = vmatpush1.msra.mxu0 0.0
        %1180 = vmatprep.subr.mxu0 0.0
        %1181 = vmatpush1.msra.mxu0 0.0
        %1182 = vmatprep.subr.mxu0 0.0
        %1183 = vmatpush1.msra.mxu0 0.0
        %1184 = vmatprep.subr.mxu0 0.0
        %1185 = vmatpush1.msra.mxu0 0.0
        %1186 = vmatprep.subr.mxu0 0.0
        %1187 = vmatpush1.msra.mxu0 0.0
        %1188 = vmatprep.subr.mxu0 0.0
        %1189 = vmatpush1.msra.mxu0 0.0
        %1190 = vmatprep.subr.mxu0 0.0
        %1191 = vmatpush1.msra.mxu0 0.0
        %1192 = vmatprep.subr.mxu0 0.0
        %1193 = vmatpush1.msra.mxu0 0.0
        %1194 = vmatprep.subr.mxu0 0.0
        %1195 = vmatpush1.msra.mxu0 0.0
        %1196 = vmatprep.subr.mxu0 0.0
        %1197 = vmatpush1.msra.mxu0 0.0
        %1198 = vmatprep.subr.mxu0 0.0
        %1199 = vmatpush1.msra.mxu0 0.0
        %1200 = vmatprep.subr.mxu0 0.0
        %1201 = vmatpush1.msra.mxu0 0.0
        %1202 = vmatprep.subr.mxu0 0.0
        %1203 = vmatpush1.msra.mxu0 0.0
        %1204 = vmatprep.subr.mxu0 0.0
        %1205 = vmatpush1.msra.mxu0 0.0
        %1206 = vmatprep.subr.mxu0 0.0
        %1207 = vmatpush1.msra.mxu0 %v1172
        %1208 = vmatprep.subr.mxu0 0.0
        %1209 = vmatpush2.msra.mxu0 0.0
        %1210 = vmatprep.subr.mxu0 0.0
        %1211 = vmatpush2.msra.mxu0 0.0
        %1212 = vmatprep.subr.mxu0 0.0
        %1213 = vmatpush2.msra.mxu0 0.0
        %1214 = vmatprep.subr.mxu0 0.0
        %1215 = vmatpush2.msra.mxu0 0.0
        %1216 = vmatprep.subr.mxu0 0.0
        %1217 = vmatpush2.msra.mxu0 0.0
        %1218 = vmatprep.subr.mxu0 0.0
        %1219 = vmatpush2.msra.mxu0 0.0
        %1220 = vmatprep.subr.mxu0 0.0
        %1221 = vmatpush2.msra.mxu0 0.0
        %1222 = vmatprep.subr.mxu0 0.0
        %1223 = vmatpush2.msra.mxu0 0.0
        %1224 = vmatprep.subr.mxu0 0.0
        %1225 = vmatpush2.msra.mxu0 0.0
        %1226 = vmatprep.subr.mxu0 0.0
        %1227 = vmatpush2.msra.mxu0 0.0
        %1228 = vmatprep.subr.mxu0 0.0
        %1229 = vmatpush2.msra.mxu0 0.0
        %1230 = vmatprep.subr.mxu0 0.0
        %1231 = vmatpush2.msra.mxu0 0.0
        %1232 = vmatprep.subr.mxu0 0.0
        %1233 = vmatpush2.msra.mxu0 0.0
        %1234 = vmatprep.subr.mxu0 0.0
        %1235 = vmatpush2.msra.mxu0 0.0
        %1236 = vmatprep.subr.mxu0 0.0
        %1237 = vmatpush2.msra.mxu0 0.0
        %1238 = vmatprep.subr.mxu0 0.0
        %1239 = vmatpush2.msra.mxu0 0.0
        %1240 = vmatprep.mubr.f32.mxu0 0.0
        %1241 = vmatmul.mubr.f32.gmra.mxu0 %v1174
        %v1242 = vpop.f32.mrf.mxu0
        %v1243 = vadd.f32 0.0, %v1242
        %v1244 = vpop.f32.mrf.mxu0
        %1245 = vdwg.mxu0
        %v1246 = vadd.f32 %v1141, %v1243
        %s1247 = sld [smem:[#allocation9]]
        %v1248 = vstv %s1247
        %v1249 = vadd.f32 %v1246, %v1248
        %v1250 = vmax.f32 %v1249, 0.0
        %s1251 = sld [smem:[#allocation11]]
        %v1252 = vstv %s1251
        %v1253 = vmul.f32 %v1252, %v1250
        %s1254 = sld [smem:[#allocation3 + $0x80]]
        %v1255 = vstv %s1254
        %v1256 = vmul.f32 %v1255, %v669
        %s1257 = sld [smem:[#allocation3 + $0x81]]
        %v1258 = vstv %s1257
        %v1259 = vmul.f32 %v1258, %v669
        %1261 = vrot.lane.b32.xlu0 %v1259, 120
        %v1262 = vpop.permute.xlu0 %1261
        %v1264 = vadd.f32 %v1256, %v1262
        %s1265 = sld [smem:[#allocation3 + $0x82]]
        %v1266 = vstv %s1265
        %v1267 = vmul.f32 %v1266, %v669
        %1269 = vrot.lane.b32.xlu0 %v1267, 112
        %v1270 = vpop.permute.xlu0 %1269
        %v1272 = vadd.f32 %v1264, %v1270
        %s1273 = sld [smem:[#allocation3 + $0x83]]
        %v1274 = vstv %s1273
        %v1275 = vmul.f32 %v1274, %v669
        %1277 = vrot.lane.b32.xlu0 %v1275, 104
        %v1278 = vpop.permute.xlu0 %1277
        %v1280 = vadd.f32 %v1272, %v1278
        %s1281 = sld [smem:[#allocation3 + $0x84]]
        %v1282 = vstv %s1281
        %v1283 = vmul.f32 %v1282, %v742
        %v1284 = vadd.f32 %v1280, %v1283
        %s1285 = sld [smem:[#allocation3 + $0x85]]
        %v1286 = vstv %s1285
        %v1287 = vmul.f32 %v1286, %v742
        %1289 = vrot.lane.b32.xlu0 %v1287, 120
        %v1290 = vpop.permute.xlu0 %1289
        %v1292 = vadd.f32 %v1284, %v1290
        %s1293 = sld [smem:[#allocation3 + $0x86]]
        %v1294 = vstv %s1293
        %v1295 = vmul.f32 %v1294, %v742
        %1297 = vrot.lane.b32.xlu0 %v1295, 112
        %v1298 = vpop.permute.xlu0 %1297
        %v1300 = vadd.f32 %v1292, %v1298
        %s1301 = sld [smem:[#allocation3 + $0x87]]
        %v1302 = vstv %s1301
        %v1303 = vmul.f32 %v1302, %v742
        %1305 = vrot.lane.b32.xlu0 %v1303, 104
        %v1306 = vpop.permute.xlu0 %1305
        %v1308 = vadd.f32 %v1300, %v1306
        %s1309 = sld [smem:[#allocation3 + $0x88]]
        %v1310 = vstv %s1309
        %v1311 = vmul.f32 %v1310, %v815
        %v1312 = vadd.f32 %v1308, %v1311
        %s1313 = sld [smem:[#allocation3 + $0x89]]
        %v1314 = vstv %s1313
        %v1315 = vmul.f32 %v1314, %v815
        %1317 = vrot.lane.b32.xlu0 %v1315, 120
        %v1318 = vpop.permute.xlu0 %1317
        %v1320 = vadd.f32 %v1312, %v1318
        %s1321 = sld [smem:[#allocation3 + $0x8a]]
        %v1322 = vstv %s1321
        %v1323 = vmul.f32 %v1322, %v815
        %1325 = vrot.lane.b32.xlu0 %v1323, 112
        %v1326 = vpop.permute.xlu0 %1325
        %v1328 = vadd.f32 %v1320, %v1326
        %s1329 = sld [smem:[#allocation3 + $0x8b]]
        %v1330 = vstv %s1329
        %v1331 = vmul.f32 %v1330, %v815
        %1333 = vrot.lane.b32.xlu0 %v1331, 104
        %v1334 = vpop.permute.xlu0 %1333
        %v1336 = vadd.f32 %v1328, %v1334
        %s1337 = sld [smem:[#allocation3 + $0x8c]]
        %v1338 = vstv %s1337
        %v1339 = vmul.f32 %v1338, %v888
        %v1340 = vadd.f32 %v1336, %v1339
        %s1341 = sld [smem:[#allocation3 + $0x8d]]
        %v1342 = vstv %s1341
        %v1343 = vmul.f32 %v1342, %v888
        %1345 = vrot.lane.b32.xlu0 %v1343, 120
        %v1346 = vpop.permute.xlu0 %1345
        %v1348 = vadd.f32 %v1340, %v1346
        %s1349 = sld [smem:[#allocation3 + $0x8e]]
        %v1350 = vstv %s1349
        %v1351 = vmul.f32 %v1350, %v888
        %1353 = vrot.lane.b32.xlu0 %v1351, 112
        %v1354 = vpop.permute.xlu0 %1353
        %v1356 = vadd.f32 %v1348, %v1354
        %s1357 = sld [smem:[#allocation3 + $0x8f]]
        %v1358 = vstv %s1357
        %v1359 = vmul.f32 %v1358, %v888
        %1361 = vrot.lane.b32.xlu0 %v1359, 104
        %v1362 = vpop.permute.xlu0 %1361
        %v1364 = vadd.f32 %v1356, %v1362
        %s1365 = sld [smem:[#allocation6 + $0x80]]
        %v1366 = vstv %s1365
        %v1367 = vmul.f32 %v1366, %v992
        %s1368 = sld [smem:[#allocation6 + $0x81]]
        %v1369 = vstv %s1368
        %v1370 = vmul.f32 %v1369, %v997
        %v1371 = vadd.f32 %v1367, %v1370
        %s1372 = sld [smem:[#allocation6 + $0x82]]
        %v1373 = vstv %s1372
        %v1374 = vmul.f32 %v1373, %v1002
        %v1375 = vadd.f32 %v1371, %v1374
        %s1376 = sld [smem:[#allocation6 + $0x83]]
        %v1377 = vstv %s1376
        %v1378 = vmul.f32 %v1377, %v1007
        %v1379 = vadd.f32 %v1375, %v1378
        %s1380 = sld [smem:[#allocation6 + $0x84]]
        %v1381 = vstv %s1380
        %v1382 = vmul.f32 %v1381, %v1012
        %v1383 = vadd.f32 %v1379, %v1382
        %s1384 = sld [smem:[#allocation6 + $0x85]]
        %v1385 = vstv %s1384
        %v1386 = vmul.f32 %v1385, %v1017
        %v1387 = vadd.f32 %v1383, %v1386
        %s1388 = sld [smem:[#allocation6 + $0x86]]
        %v1389 = vstv %s1388
        %v1390 = vmul.f32 %v1389, %v1022
        %v1391 = vadd.f32 %v1387, %v1390
        %s1392 = sld [smem:[#allocation6 + $0x87]]
        %v1393 = vstv %s1392
        %v1394 = vmul.f32 %v1393, %v1027
        %v1395 = vadd.f32 %v1391, %v1394
        %1396 = vmatprep.subr.mxu0 0.0
        %1397 = vmatpush1.msra.mxu0 0.0
        %1398 = vmatprep.subr.mxu0 0.0
        %1399 = vmatpush1.msra.mxu0 0.0
        %1400 = vmatprep.subr.mxu0 0.0
        %1401 = vmatpush1.msra.mxu0 0.0
        %1402 = vmatprep.subr.mxu0 0.0
        %1403 = vmatpush1.msra.mxu0 0.0
        %1404 = vmatprep.subr.mxu0 0.0
        %1405 = vmatpush1.msra.mxu0 0.0
        %1406 = vmatprep.subr.mxu0 0.0
        %1407 = vmatpush1.msra.mxu0 0.0
        %1408 = vmatprep.subr.mxu0 0.0
        %1409 = vmatpush1.msra.mxu0 0.0
        %1410 = vmatprep.subr.mxu0 0.0
        %1411 = vmatpush1.msra.mxu0 0.0
        %1412 = vmatprep.subr.mxu0 0.0
        %1413 = vmatpush1.msra.mxu0 0.0
        %1414 = vmatprep.subr.mxu0 0.0
        %1415 = vmatpush1.msra.mxu0 0.0
        %1416 = vmatprep.subr.mxu0 0.0
        %1417 = vmatpush1.msra.mxu0 0.0
        %1418 = vmatprep.subr.mxu0 0.0
        %1419 = vmatpush1.msra.mxu0 0.0
        %1420 = vmatprep.subr.mxu0 0.0
        %1421 = vmatpush1.msra.mxu0 0.0
        %1422 = vmatprep.subr.mxu0 0.0
        %1423 = vmatpush1.msra.mxu0 0.0
        %1424 = vmatprep.subr.mxu0 0.0
        %1425 = vmatpush1.msra.mxu0 0.0
        %1426 = vmatprep.subr.mxu0 0.0
        %1427 = vmatpush1.msra.mxu0 %v1395
        %1428 = vmatprep.subr.mxu0 0.0
        %1429 = vmatpush2.msra.mxu0 0.0
        %1430 = vmatprep.subr.mxu0 0.0
        %1431 = vmatpush2.msra.mxu0 0.0
        %1432 = vmatprep.subr.mxu0 0.0
        %1433 = vmatpush2.msra.mxu0 0.0
        %1434 = vmatprep.subr.mxu0 0.0
        %1435 = vmatpush2.msra.mxu0 0.0
        %1436 = vmatprep.subr.mxu0 0.0
        %1437 = vmatpush2.msra.mxu0 0.0
        %1438 = vmatprep.subr.mxu0 0.0
        %1439 = vmatpush2.msra.mxu0 0.0
        %1440 = vmatprep.subr.mxu0 0.0
        %1441 = vmatpush2.msra.mxu0 0.0
        %1442 = vmatprep.subr.mxu0 0.0
        %1443 = vmatpush2.msra.mxu0 0.0
        %1444 = vmatprep.subr.mxu0 0.0
        %1445 = vmatpush2.msra.mxu0 0.0
        %1446 = vmatprep.subr.mxu0 0.0
        %1447 = vmatpush2.msra.mxu0 0.0
        %1448 = vmatprep.subr.mxu0 0.0
        %1449 = vmatpush2.msra.mxu0 0.0
        %1450 = vmatprep.subr.mxu0 0.0
        %1451 = vmatpush2.msra.mxu0 0.0
        %1452 = vmatprep.subr.mxu0 0.0
        %1453 = vmatpush2.msra.mxu0 0.0
        %1454 = vmatprep.subr.mxu0 0.0
        %1455 = vmatpush2.msra.mxu0 0.0
        %1456 = vmatprep.subr.mxu0 0.0
        %1457 = vmatpush2.msra.mxu0 0.0
        %1458 = vmatprep.subr.mxu0 0.0
        %1459 = vmatpush2.msra.mxu0 0.0
        %1460 = vmatprep.mubr.f32.mxu0 0.0
        %1461 = vmatmul.mubr.f32.gmra.mxu0 %v1174
        %v1462 = vpop.f32.mrf.mxu0
        %v1463 = vadd.f32 0.0, %v1462
        %v1464 = vpop.f32.mrf.mxu0
        %1465 = vdwg.mxu0
        %v1466 = vadd.f32 %v1364, %v1463
        %s1467 = sld [smem:[#allocation9 + $0x1]]
        %v1468 = vstv %s1467
        %v1469 = vadd.f32 %v1466, %v1468
        %v1470 = vmax.f32 %v1469, 0.0
        %s1471 = sld [smem:[#allocation11 + $0x1]]
        %v1472 = vstv %s1471
        %v1473 = vmul.f32 %v1472, %v1470
        %v1474 = vadd.f32 %v1253, %v1473
        %s1475 = sld [smem:[#allocation3 + $0x100]]
        %v1476 = vstv %s1475
        %v1477 = vmul.f32 %v1476, %v669
        %s1478 = sld [smem:[#allocation3 + $0x101]]
        %v1479 = vstv %s1478
        %v1480 = vmul.f32 %v1479, %v669
        %1482 = vrot.lane.b32.xlu0 %v1480, 120
        %v1483 = vpop.permute.xlu0 %1482
        %v1485 = vadd.f32 %v1477, %v1483
        %s1486 = sld [smem:[#allocation3 + $0x102]]
        %v1487 = vstv %s1486
        %v1488 = vmul.f32 %v1487, %v669
        %1490 = vrot.lane.b32.xlu0 %v1488, 112
        %v1491 = vpop.permute.xlu0 %1490
        %v1493 = vadd.f32 %v1485, %v1491
        %s1494 = sld [smem:[#allocation3 + $0x103]]
        %v1495 = vstv %s1494
        %v1496 = vmul.f32 %v1495, %v669
        %1498 = vrot.lane.b32.xlu0 %v1496, 104
        %v1499 = vpop.permute.xlu0 %1498
        %v1501 = vadd.f32 %v1493, %v1499
        %s1502 = sld [smem:[#allocation3 + $0x104]]
        %v1503 = vstv %s1502
        %v1504 = vmul.f32 %v1503, %v742
        %v1505 = vadd.f32 %v1501, %v1504
        %s1506 = sld [smem:[#allocation3 + $0x105]]
        %v1507 = vstv %s1506
        %v1508 = vmul.f32 %v1507, %v742
        %1510 = vrot.lane.b32.xlu0 %v1508, 120
        %v1511 = vpop.permute.xlu0 %1510
        %v1513 = vadd.f32 %v1505, %v1511
        %s1514 = sld [smem:[#allocation3 + $0x106]]
        %v1515 = vstv %s1514
        %v1516 = vmul.f32 %v1515, %v742
        %1518 = vrot.lane.b32.xlu0 %v1516, 112
        %v1519 = vpop.permute.xlu0 %1518
        %v1521 = vadd.f32 %v1513, %v1519
        %s1522 = sld [smem:[#allocation3 + $0x107]]
        %v1523 = vstv %s1522
        %v1524 = vmul.f32 %v1523, %v742
        %1526 = vrot.lane.b32.xlu0 %v1524, 104
        %v1527 = vpop.permute.xlu0 %1526
        %v1529 = vadd.f32 %v1521, %v1527
        %s1530 = sld [smem:[#allocation3 + $0x108]]
        %v1531 = vstv %s1530
        %v1532 = vmul.f32 %v1531, %v815
        %v1533 = vadd.f32 %v1529, %v1532
        %s1534 = sld [smem:[#allocation3 + $0x109]]
        %v1535 = vstv %s1534
        %v1536 = vmul.f32 %v1535, %v815
        %1538 = vrot.lane.b32.xlu0 %v1536, 120
        %v1539 = vpop.permute.xlu0 %1538
        %v1541 = vadd.f32 %v1533, %v1539
        %s1542 = sld [smem:[#allocation3 + $0x10a]]
        %v1543 = vstv %s1542
        %v1544 = vmul.f32 %v1543, %v815
        %1546 = vrot.lane.b32.xlu0 %v1544, 112
        %v1547 = vpop.permute.xlu0 %1546
        %v1549 = vadd.f32 %v1541, %v1547
        %s1550 = sld [smem:[#allocation3 + $0x10b]]
        %v1551 = vstv %s1550
        %v1552 = vmul.f32 %v1551, %v815
        %1554 = vrot.lane.b32.xlu0 %v1552, 104
        %v1555 = vpop.permute.xlu0 %1554
        %v1557 = vadd.f32 %v1549, %v1555
        %s1558 = sld [smem:[#allocation3 + $0x10c]]
        %v1559 = vstv %s1558
        %v1560 = vmul.f32 %v1559, %v888
        %v1561 = vadd.f32 %v1557, %v1560
        %s1562 = sld [smem:[#allocation3 + $0x10d]]
        %v1563 = vstv %s1562
        %v1564 = vmul.f32 %v1563, %v888
        %1566 = vrot.lane.b32.xlu0 %v1564, 120
        %v1567 = vpop.permute.xlu0 %1566
        %v1569 = vadd.f32 %v1561, %v1567
        %s1570 = sld [smem:[#allocation3 + $0x10e]]
        %v1571 = vstv %s1570
        %v1572 = vmul.f32 %v1571, %v888
        %1574 = vrot.lane.b32.xlu0 %v1572, 112
        %v1575 = vpop.permute.xlu0 %1574
        %v1577 = vadd.f32 %v1569, %v1575
        %s1578 = sld [smem:[#allocation3 + $0x10f]]
        %v1579 = vstv %s1578
        %v1580 = vmul.f32 %v1579, %v888
        %1582 = vrot.lane.b32.xlu0 %v1580, 104
        %v1583 = vpop.permute.xlu0 %1582
        %v1585 = vadd.f32 %v1577, %v1583
        %s1586 = sld [smem:[#allocation6 + $0x100]]
        %v1587 = vstv %s1586
        %v1588 = vmul.f32 %v1587, %v992
        %s1589 = sld [smem:[#allocation6 + $0x101]]
        %v1590 = vstv %s1589
        %v1591 = vmul.f32 %v1590, %v997
        %v1592 = vadd.f32 %v1588, %v1591
        %s1593 = sld [smem:[#allocation6 + $0x102]]
        %v1594 = vstv %s1593
        %v1595 = vmul.f32 %v1594, %v1002
        %v1596 = vadd.f32 %v1592, %v1595
        %s1597 = sld [smem:[#allocation6 + $0x103]]
        %v1598 = vstv %s1597
        %v1599 = vmul.f32 %v1598, %v1007
        %v1600 = vadd.f32 %v1596, %v1599
        %s1601 = sld [smem:[#allocation6 + $0x104]]
        %v1602 = vstv %s1601
        %v1603 = vmul.f32 %v1602, %v1012
        %v1604 = vadd.f32 %v1600, %v1603
        %s1605 = sld [smem:[#allocation6 + $0x105]]
        %v1606 = vstv %s1605
        %v1607 = vmul.f32 %v1606, %v1017
        %v1608 = vadd.f32 %v1604, %v1607
        %s1609 = sld [smem:[#allocation6 + $0x106]]
        %v1610 = vstv %s1609
        %v1611 = vmul.f32 %v1610, %v1022
        %v1612 = vadd.f32 %v1608, %v1611
        %s1613 = sld [smem:[#allocation6 + $0x107]]
        %v1614 = vstv %s1613
        %v1615 = vmul.f32 %v1614, %v1027
        %v1616 = vadd.f32 %v1612, %v1615
        %1617 = vmatprep.subr.mxu0 0.0
        %1618 = vmatpush1.msra.mxu0 0.0
        %1619 = vmatprep.subr.mxu0 0.0
        %1620 = vmatpush1.msra.mxu0 0.0
        %1621 = vmatprep.subr.mxu0 0.0
        %1622 = vmatpush1.msra.mxu0 0.0
        %1623 = vmatprep.subr.mxu0 0.0
        %1624 = vmatpush1.msra.mxu0 0.0
        %1625 = vmatprep.subr.mxu0 0.0
        %1626 = vmatpush1.msra.mxu0 0.0
        %1627 = vmatprep.subr.mxu0 0.0
        %1628 = vmatpush1.msra.mxu0 0.0
        %1629 = vmatprep.subr.mxu0 0.0
        %1630 = vmatpush1.msra.mxu0 0.0
        %1631 = vmatprep.subr.mxu0 0.0
        %1632 = vmatpush1.msra.mxu0 0.0
        %1633 = vmatprep.subr.mxu0 0.0
        %1634 = vmatpush1.msra.mxu0 0.0
        %1635 = vmatprep.subr.mxu0 0.0
        %1636 = vmatpush1.msra.mxu0 0.0
        %1637 = vmatprep.subr.mxu0 0.0
        %1638 = vmatpush1.msra.mxu0 0.0
        %1639 = vmatprep.subr.mxu0 0.0
        %1640 = vmatpush1.msra.mxu0 0.0
        %1641 = vmatprep.subr.mxu0 0.0
        %1642 = vmatpush1.msra.mxu0 0.0
        %1643 = vmatprep.subr.mxu0 0.0
        %1644 = vmatpush1.msra.mxu0 0.0
        %1645 = vmatprep.subr.mxu0 0.0
        %1646 = vmatpush1.msra.mxu0 0.0
        %1647 = vmatprep.subr.mxu0 0.0
        %1648 = vmatpush1.msra.mxu0 %v1616
        %1649 = vmatprep.subr.mxu0 0.0
        %1650 = vmatpush2.msra.mxu0 0.0
        %1651 = vmatprep.subr.mxu0 0.0
        %1652 = vmatpush2.msra.mxu0 0.0
        %1653 = vmatprep.subr.mxu0 0.0
        %1654 = vmatpush2.msra.mxu0 0.0
        %1655 = vmatprep.subr.mxu0 0.0
        %1656 = vmatpush2.msra.mxu0 0.0
        %1657 = vmatprep.subr.mxu0 0.0
        %1658 = vmatpush2.msra.mxu0 0.0
        %1659 = vmatprep.subr.mxu0 0.0
        %1660 = vmatpush2.msra.mxu0 0.0
        %1661 = vmatprep.subr.mxu0 0.0
        %1662 = vmatpush2.msra.mxu0 0.0
        %1663 = vmatprep.subr.mxu0 0.0
        %1664 = vmatpush2.msra.mxu0 0.0
        %1665 = vmatprep.subr.mxu0 0.0
        %1666 = vmatpush2.msra.mxu0 0.0
        %1667 = vmatprep.subr.mxu0 0.0
        %1668 = vmatpush2.msra.mxu0 0.0
        %1669 = vmatprep.subr.mxu0 0.0
        %1670 = vmatpush2.msra.mxu0 0.0
        %1671 = vmatprep.subr.mxu0 0.0
        %1672 = vmatpush2.msra.mxu0 0.0
        %1673 = vmatprep.subr.mxu0 0.0
        %1674 = vmatpush2.msra.mxu0 0.0
        %1675 = vmatprep.subr.mxu0 0.0
        %1676 = vmatpush2.msra.mxu0 0.0
        %1677 = vmatprep.subr.mxu0 0.0
        %1678 = vmatpush2.msra.mxu0 0.0
        %1679 = vmatprep.subr.mxu0 0.0
        %1680 = vmatpush2.msra.mxu0 0.0
        %1681 = vmatprep.mubr.f32.mxu0 0.0
        %1682 = vmatmul.mubr.f32.gmra.mxu0 %v1174
        %v1683 = vpop.f32.mrf.mxu0
        %v1684 = vadd.f32 0.0, %v1683
        %v1685 = vpop.f32.mrf.mxu0
        %1686 = vdwg.mxu0
        %v1687 = vadd.f32 %v1585, %v1684
        %s1688 = sld [smem:[#allocation9 + $0x2]]
        %v1689 = vstv %s1688
        %v1690 = vadd.f32 %v1687, %v1689
        %v1691 = vmax.f32 %v1690, 0.0
        %s1692 = sld [smem:[#allocation11 + $0x2]]
        %v1693 = vstv %s1692
        %v1694 = vmul.f32 %v1693, %v1691
        %v1695 = vadd.f32 %v1474, %v1694
        %s1696 = sld [smem:[#allocation3 + $0x180]]
        %v1697 = vstv %s1696
        %v1698 = vmul.f32 %v1697, %v669
        %s1699 = sld [smem:[#allocation3 + $0x181]]
        %v1700 = vstv %s1699
        %v1701 = vmul.f32 %v1700, %v669
        %1703 = vrot.lane.b32.xlu0 %v1701, 120
        %v1704 = vpop.permute.xlu0 %1703
        %v1706 = vadd.f32 %v1698, %v1704
        %s1707 = sld [smem:[#allocation3 + $0x182]]
        %v1708 = vstv %s1707
        %v1709 = vmul.f32 %v1708, %v669
        %1711 = vrot.lane.b32.xlu0 %v1709, 112
        %v1712 = vpop.permute.xlu0 %1711
        %v1714 = vadd.f32 %v1706, %v1712
        %s1715 = sld [smem:[#allocation3 + $0x183]]
        %v1716 = vstv %s1715
        %v1717 = vmul.f32 %v1716, %v669
        %1719 = vrot.lane.b32.xlu0 %v1717, 104
        %v1720 = vpop.permute.xlu0 %1719
        %v1722 = vadd.f32 %v1714, %v1720
        %s1723 = sld [smem:[#allocation3 + $0x184]]
        %v1724 = vstv %s1723
        %v1725 = vmul.f32 %v1724, %v742
        %v1726 = vadd.f32 %v1722, %v1725
        %s1727 = sld [smem:[#allocation3 + $0x185]]
        %v1728 = vstv %s1727
        %v1729 = vmul.f32 %v1728, %v742
        %1731 = vrot.lane.b32.xlu0 %v1729, 120
        %v1732 = vpop.permute.xlu0 %1731
        %v1734 = vadd.f32 %v1726, %v1732
        %s1735 = sld [smem:[#allocation3 + $0x186]]
        %v1736 = vstv %s1735
        %v1737 = vmul.f32 %v1736, %v742
        %1739 = vrot.lane.b32.xlu0 %v1737, 112
        %v1740 = vpop.permute.xlu0 %1739
        %v1742 = vadd.f32 %v1734, %v1740
        %s1743 = sld [smem:[#allocation3 + $0x187]]
        %v1744 = vstv %s1743
        %v1745 = vmul.f32 %v1744, %v742
        %1747 = vrot.lane.b32.xlu0 %v1745, 104
        %v1748 = vpop.permute.xlu0 %1747
        %v1750 = vadd.f32 %v1742, %v1748
        %s1751 = sld [smem:[#allocation3 + $0x188]]
        %v1752 = vstv %s1751
        %v1753 = vmul.f32 %v1752, %v815
        %v1754 = vadd.f32 %v1750, %v1753
        %s1755 = sld [smem:[#allocation3 + $0x189]]
        %v1756 = vstv %s1755
        %v1757 = vmul.f32 %v1756, %v815
        %1759 = vrot.lane.b32.xlu0 %v1757, 120
        %v1760 = vpop.permute.xlu0 %1759
        %v1762 = vadd.f32 %v1754, %v1760
        %s1763 = sld [smem:[#allocation3 + $0x18a]]
        %v1764 = vstv %s1763
        %v1765 = vmul.f32 %v1764, %v815
        %1767 = vrot.lane.b32.xlu0 %v1765, 112
        %v1768 = vpop.permute.xlu0 %1767
        %v1770 = vadd.f32 %v1762, %v1768
        %s1771 = sld [smem:[#allocation3 + $0x18b]]
        %v1772 = vstv %s1771
        %v1773 = vmul.f32 %v1772, %v815
        %1775 = vrot.lane.b32.xlu0 %v1773, 104
        %v1776 = vpop.permute.xlu0 %1775
        %v1778 = vadd.f32 %v1770, %v1776
        %s1779 = sld [smem:[#allocation3 + $0x18c]]
        %v1780 = vstv %s1779
        %v1781 = vmul.f32 %v1780, %v888
        %v1782 = vadd.f32 %v1778, %v1781
        %s1783 = sld [smem:[#allocation3 + $0x18d]]
        %v1784 = vstv %s1783
        %v1785 = vmul.f32 %v1784, %v888
        %1787 = vrot.lane.b32.xlu0 %v1785, 120
        %v1788 = vpop.permute.xlu0 %1787
        %v1790 = vadd.f32 %v1782, %v1788
        %s1791 = sld [smem:[#allocation3 + $0x18e]]
        %v1792 = vstv %s1791
        %v1793 = vmul.f32 %v1792, %v888
        %1795 = vrot.lane.b32.xlu0 %v1793, 112
        %v1796 = vpop.permute.xlu0 %1795
        %v1798 = vadd.f32 %v1790, %v1796
        %s1799 = sld [smem:[#allocation3 + $0x18f]]
        %v1800 = vstv %s1799
        %v1801 = vmul.f32 %v1800, %v888
        %1803 = vrot.lane.b32.xlu0 %v1801, 104
        %v1804 = vpop.permute.xlu0 %1803
        %v1806 = vadd.f32 %v1798, %v1804
        %s1807 = sld [smem:[#allocation6 + $0x180]]
        %v1808 = vstv %s1807
        %v1809 = vmul.f32 %v1808, %v992
        %s1810 = sld [smem:[#allocation6 + $0x181]]
        %v1811 = vstv %s1810
        %v1812 = vmul.f32 %v1811, %v997
        %v1813 = vadd.f32 %v1809, %v1812
        %s1814 = sld [smem:[#allocation6 + $0x182]]
        %v1815 = vstv %s1814
        %v1816 = vmul.f32 %v1815, %v1002
        %v1817 = vadd.f32 %v1813, %v1816
        %s1818 = sld [smem:[#allocation6 + $0x183]]
        %v1819 = vstv %s1818
        %v1820 = vmul.f32 %v1819, %v1007
        %v1821 = vadd.f32 %v1817, %v1820
        %s1822 = sld [smem:[#allocation6 + $0x184]]
        %v1823 = vstv %s1822
        %v1824 = vmul.f32 %v1823, %v1012
        %v1825 = vadd.f32 %v1821, %v1824
        %s1826 = sld [smem:[#allocation6 + $0x185]]
        %v1827 = vstv %s1826
        %v1828 = vmul.f32 %v1827, %v1017
        %v1829 = vadd.f32 %v1825, %v1828
        %s1830 = sld [smem:[#allocation6 + $0x186]]
        %v1831 = vstv %s1830
        %v1832 = vmul.f32 %v1831, %v1022
        %v1833 = vadd.f32 %v1829, %v1832
        %s1834 = sld [smem:[#allocation6 + $0x187]]
        %v1835 = vstv %s1834
        %v1836 = vmul.f32 %v1835, %v1027
        %v1837 = vadd.f32 %v1833, %v1836
        %1838 = vmatprep.subr.mxu0 0.0
        %1839 = vmatpush1.msra.mxu0 0.0
        %1840 = vmatprep.subr.mxu0 0.0
        %1841 = vmatpush1.msra.mxu0 0.0
        %1842 = vmatprep.subr.mxu0 0.0
        %1843 = vmatpush1.msra.mxu0 0.0
        %1844 = vmatprep.subr.mxu0 0.0
        %1845 = vmatpush1.msra.mxu0 0.0
        %1846 = vmatprep.subr.mxu0 0.0
        %1847 = vmatpush1.msra.mxu0 0.0
        %1848 = vmatprep.subr.mxu0 0.0
        %1849 = vmatpush1.msra.mxu0 0.0
        %1850 = vmatprep.subr.mxu0 0.0
        %1851 = vmatpush1.msra.mxu0 0.0
        %1852 = vmatprep.subr.mxu0 0.0
        %1853 = vmatpush1.msra.mxu0 0.0
        %1854 = vmatprep.subr.mxu0 0.0
        %1855 = vmatpush1.msra.mxu0 0.0
        %1856 = vmatprep.subr.mxu0 0.0
        %1857 = vmatpush1.msra.mxu0 0.0
        %1858 = vmatprep.subr.mxu0 0.0
        %1859 = vmatpush1.msra.mxu0 0.0
        %1860 = vmatprep.subr.mxu0 0.0
        %1861 = vmatpush1.msra.mxu0 0.0
        %1862 = vmatprep.subr.mxu0 0.0
        %1863 = vmatpush1.msra.mxu0 0.0
        %1864 = vmatprep.subr.mxu0 0.0
        %1865 = vmatpush1.msra.mxu0 0.0
        %1866 = vmatprep.subr.mxu0 0.0
        %1867 = vmatpush1.msra.mxu0 0.0
        %1868 = vmatprep.subr.mxu0 0.0
        %1869 = vmatpush1.msra.mxu0 %v1837
        %1870 = vmatprep.subr.mxu0 0.0
        %1871 = vmatpush2.msra.mxu0 0.0
        %1872 = vmatprep.subr.mxu0 0.0
        %1873 = vmatpush2.msra.mxu0 0.0
        %1874 = vmatprep.subr.mxu0 0.0
        %1875 = vmatpush2.msra.mxu0 0.0
        %1876 = vmatprep.subr.mxu0 0.0
        %1877 = vmatpush2.msra.mxu0 0.0
        %1878 = vmatprep.subr.mxu0 0.0
        %1879 = vmatpush2.msra.mxu0 0.0
        %1880 = vmatprep.subr.mxu0 0.0
        %1881 = vmatpush2.msra.mxu0 0.0
        %1882 = vmatprep.subr.mxu0 0.0
        %1883 = vmatpush2.msra.mxu0 0.0
        %1884 = vmatprep.subr.mxu0 0.0
        %1885 = vmatpush2.msra.mxu0 0.0
        %1886 = vmatprep.subr.mxu0 0.0
        %1887 = vmatpush2.msra.mxu0 0.0
        %1888 = vmatprep.subr.mxu0 0.0
        %1889 = vmatpush2.msra.mxu0 0.0
        %1890 = vmatprep.subr.mxu0 0.0
        %1891 = vmatpush2.msra.mxu0 0.0
        %1892 = vmatprep.subr.mxu0 0.0
        %1893 = vmatpush2.msra.mxu0 0.0
        %1894 = vmatprep.subr.mxu0 0.0
        %1895 = vmatpush2.msra.mxu0 0.0
        %1896 = vmatprep.subr.mxu0 0.0
        %1897 = vmatpush2.msra.mxu0 0.0
        %1898 = vmatprep.subr.mxu0 0.0
        %1899 = vmatpush2.msra.mxu0 0.0
        %1900 = vmatprep.subr.mxu0 0.0
        %1901 = vmatpush2.msra.mxu0 0.0
        %1902 = vmatprep.mubr.f32.mxu0 0.0
        %1903 = vmatmul.mubr.f32.gmra.mxu0 %v1174
        %v1904 = vpop.f32.mrf.mxu0
        %v1905 = vadd.f32 0.0, %v1904
        %v1906 = vpop.f32.mrf.mxu0
        %1907 = vdwg.mxu0
        %v1908 = vadd.f32 %v1806, %v1905
        %s1909 = sld [smem:[#allocation9 + $0x3]]
        %v1910 = vstv %s1909
        %v1911 = vadd.f32 %v1908, %v1910
        %v1912 = vmax.f32 %v1911, 0.0
        %s1913 = sld [smem:[#allocation11 + $0x3]]
        %v1914 = vstv %s1913
        %v1915 = vmul.f32 %v1914, %v1912
        %v1916 = vadd.f32 %v1695, %v1915
        %s1917 = sld [smem:[#allocation2]]
        %v1918 = vstv %s1917
        %v1919 = vadd.f32 %v1916, %v1918
        %v1920 = vxor.u32 %v1919, 2147483648
        %v1921 = vmul.f32 %v1920, 1.442695
        %v1922 = vpow.pop %v1921
        %v1923 = vadd.f32 %v1922, 1.0
        %v1924 = vrcp.pop %v1923
        %v1925 = vmul.f32 1.0, %v1924
        %v1926 = vld [vmem:[%s7] sm:$0xff]
        %v1928 = vsel %vm900, %v1925, 0
        %1930 = vmatprep.subr.mxu0 0.0
        %1931 = vmatpush1.msra.mxu0 0.0
        %1932 = vmatprep.subr.mxu0 0.0
        %1933 = vmatpush1.msra.mxu0 0.0
        %1934 = vmatprep.subr.mxu0 0.0
        %1935 = vmatpush1.msra.mxu0 0.0
        %1936 = vmatprep.subr.mxu0 0.0
        %1937 = vmatpush1.msra.mxu0 0.0
        %1938 = vmatprep.subr.mxu0 0.0
        %1939 = vmatpush1.msra.mxu0 0.0
        %1940 = vmatprep.subr.mxu0 0.0
        %1941 = vmatpush1.msra.mxu0 0.0
        %1942 = vmatprep.subr.mxu0 0.0
        %1943 = vmatpush1.msra.mxu0 0.0
        %1944 = vmatprep.subr.mxu0 0.0
        %1945 = vmatpush1.msra.mxu0 0.0
        %1946 = vmatprep.subr.mxu0 0.0
        %1947 = vmatpush1.msra.mxu0 0.0
        %1948 = vmatprep.subr.mxu0 0.0
        %1949 = vmatpush1.msra.mxu0 0.0
        %1950 = vmatprep.subr.mxu0 0.0
        %1951 = vmatpush1.msra.mxu0 0.0
        %1952 = vmatprep.subr.mxu0 0.0
        %1953 = vmatpush1.msra.mxu0 0.0
        %1954 = vmatprep.subr.mxu0 0.0
        %1955 = vmatpush1.msra.mxu0 0.0
        %1956 = vmatprep.subr.mxu0 0.0
        %1957 = vmatpush1.msra.mxu0 0.0
        %1958 = vmatprep.subr.mxu0 0.0
        %1959 = vmatpush1.msra.mxu0 0.0
        %1960 = vmatprep.subr.mxu0 0.0
        %1961 = vmatpush1.msra.mxu0 %v1926
        %1962 = vmatprep.subr.mxu0 0.0
        %1963 = vmatpush2.msra.mxu0 0.0
        %1964 = vmatprep.subr.mxu0 0.0
        %1965 = vmatpush2.msra.mxu0 0.0
        %1966 = vmatprep.subr.mxu0 0.0
        %1967 = vmatpush2.msra.mxu0 0.0
        %1968 = vmatprep.subr.mxu0 0.0
        %1969 = vmatpush2.msra.mxu0 0.0
        %1970 = vmatprep.subr.mxu0 0.0
        %1971 = vmatpush2.msra.mxu0 0.0
        %1972 = vmatprep.subr.mxu0 0.0
        %1973 = vmatpush2.msra.mxu0 0.0
        %1974 = vmatprep.subr.mxu0 0.0
        %1975 = vmatpush2.msra.mxu0 0.0
        %1976 = vmatprep.subr.mxu0 0.0
        %1977 = vmatpush2.msra.mxu0 0.0
        %1978 = vmatprep.subr.mxu0 0.0
        %1979 = vmatpush2.msra.mxu0 0.0
        %1980 = vmatprep.subr.mxu0 0.0
        %1981 = vmatpush2.msra.mxu0 0.0
        %1982 = vmatprep.subr.mxu0 0.0
        %1983 = vmatpush2.msra.mxu0 0.0
        %1984 = vmatprep.subr.mxu0 0.0
        %1985 = vmatpush2.msra.mxu0 0.0
        %1986 = vmatprep.subr.mxu0 0.0
        %1987 = vmatpush2.msra.mxu0 0.0
        %1988 = vmatprep.subr.mxu0 0.0
        %1989 = vmatpush2.msra.mxu0 0.0
        %1990 = vmatprep.subr.mxu0 0.0
        %1991 = vmatpush2.msra.mxu0 0.0
        %1992 = vmatprep.subr.mxu0 0.0
        %1993 = vmatpush2.msra.mxu0 0.0
        %1994 = vmatprep.mubr.f32.mxu0 0.0
        %1995 = vmatmul.mubr.f32.gmra.mxu0 %v1928
        %v1996 = vpop.f32.mrf.mxu0
        %v1997 = vadd.f32 0.0, %v1996
        %v1998 = vpop.f32.mrf.mxu0
        %1999 = vdwg.mxu0
        %v2000 = vld [vmem:[%s5] sm:$0xff]
        %v2002 = vsel %vm900, %v2000, 0
        %2004 = vmatprep.subr.mxu0 0.0
        %2005 = vmatpush1.msra.mxu0 0.0
        %2006 = vmatprep.subr.mxu0 0.0
        %2007 = vmatpush1.msra.mxu0 0.0
        %2008 = vmatprep.subr.mxu0 0.0
        %2009 = vmatpush1.msra.mxu0 0.0
        %2010 = vmatprep.subr.mxu0 0.0
        %2011 = vmatpush1.msra.mxu0 0.0
        %2012 = vmatprep.subr.mxu0 0.0
        %2013 = vmatpush1.msra.mxu0 0.0
        %2014 = vmatprep.subr.mxu0 0.0
        %2015 = vmatpush1.msra.mxu0 0.0
        %2016 = vmatprep.subr.mxu0 0.0
        %2017 = vmatpush1.msra.mxu0 0.0
        %2018 = vmatprep.subr.mxu0 0.0
        %2019 = vmatpush1.msra.mxu0 0.0
        %2020 = vmatprep.subr.mxu0 0.0
        %2021 = vmatpush1.msra.mxu0 0.0
        %2022 = vmatprep.subr.mxu0 0.0
        %2023 = vmatpush1.msra.mxu0 0.0
        %2024 = vmatprep.subr.mxu0 0.0
        %2025 = vmatpush1.msra.mxu0 0.0
        %2026 = vmatprep.subr.mxu0 0.0
        %2027 = vmatpush1.msra.mxu0 0.0
        %2028 = vmatprep.subr.mxu0 0.0
        %2029 = vmatpush1.msra.mxu0 0.0
        %2030 = vmatprep.subr.mxu0 0.0
        %2031 = vmatpush1.msra.mxu0 0.0
        %2032 = vmatprep.subr.mxu0 0.0
        %2033 = vmatpush1.msra.mxu0 0.0
        %2034 = vmatprep.subr.mxu0 0.0
        %2035 = vmatpush1.msra.mxu0 %v1997
        %2036 = vmatprep.subr.mxu0 0.0
        %2037 = vmatpush2.msra.mxu0 0.0
        %2038 = vmatprep.subr.mxu0 0.0
        %2039 = vmatpush2.msra.mxu0 0.0
        %2040 = vmatprep.subr.mxu0 0.0
        %2041 = vmatpush2.msra.mxu0 0.0
        %2042 = vmatprep.subr.mxu0 0.0
        %2043 = vmatpush2.msra.mxu0 0.0
        %2044 = vmatprep.subr.mxu0 0.0
        %2045 = vmatpush2.msra.mxu0 0.0
        %2046 = vmatprep.subr.mxu0 0.0
        %2047 = vmatpush2.msra.mxu0 0.0
        %2048 = vmatprep.subr.mxu0 0.0
        %2049 = vmatpush2.msra.mxu0 0.0
        %2050 = vmatprep.subr.mxu0 0.0
        %2051 = vmatpush2.msra.mxu0 0.0
        %2052 = vmatprep.subr.mxu0 0.0
        %2053 = vmatpush2.msra.mxu0 0.0
        %2054 = vmatprep.subr.mxu0 0.0
        %2055 = vmatpush2.msra.mxu0 0.0
        %2056 = vmatprep.subr.mxu0 0.0
        %2057 = vmatpush2.msra.mxu0 0.0
        %2058 = vmatprep.subr.mxu0 0.0
        %2059 = vmatpush2.msra.mxu0 0.0
        %2060 = vmatprep.subr.mxu0 0.0
        %2061 = vmatpush2.msra.mxu0 0.0
        %2062 = vmatprep.subr.mxu0 0.0
        %2063 = vmatpush2.msra.mxu0 0.0
        %2064 = vmatprep.subr.mxu0 0.0
        %2065 = vmatpush2.msra.mxu0 0.0
        %2066 = vmatprep.subr.mxu0 0.0
        %2067 = vmatpush2.msra.mxu0 0.0
        %2068 = vmatprep.mubr.f32.mxu0 0.0
        %2069 = vmatmul.mubr.f32.gmra.mxu0 %v2002
        %v2070 = vpop.f32.mrf.mxu0
        %v2071 = vadd.f32 0.0, %v2070
        %v2072 = vpop.f32.mrf.mxu0
        %2073 = vdwg.mxu0
        %v2074 = vld [vmem:[%s6] sm:$0xff]
        %v2076 = vsel %vm900, %v2074, 0
        %2078 = vmatprep.subr.mxu0 0.0
        %2079 = vmatpush1.msra.mxu0 0.0
        %2080 = vmatprep.subr.mxu0 0.0
        %2081 = vmatpush1.msra.mxu0 0.0
        %2082 = vmatprep.subr.mxu0 0.0
        %2083 = vmatpush1.msra.mxu0 0.0
        %2084 = vmatprep.subr.mxu0 0.0
        %2085 = vmatpush1.msra.mxu0 0.0
        %2086 = vmatprep.subr.mxu0 0.0
        %2087 = vmatpush1.msra.mxu0 0.0
        %2088 = vmatprep.subr.mxu0 0.0
        %2089 = vmatpush1.msra.mxu0 0.0
        %2090 = vmatprep.subr.mxu0 0.0
        %2091 = vmatpush1.msra.mxu0 0.0
        %2092 = vmatprep.subr.mxu0 0.0
        %2093 = vmatpush1.msra.mxu0 0.0
        %2094 = vmatprep.subr.mxu0 0.0
        %2095 = vmatpush1.msra.mxu0 0.0
        %2096 = vmatprep.subr.mxu0 0.0
        %2097 = vmatpush1.msra.mxu0 0.0
        %2098 = vmatprep.subr.mxu0 0.0
        %2099 = vmatpush1.msra.mxu0 0.0
        %2100 = vmatprep.subr.mxu0 0.0
        %2101 = vmatpush1.msra.mxu0 0.0
        %2102 = vmatprep.subr.mxu0 0.0
        %2103 = vmatpush1.msra.mxu0 0.0
        %2104 = vmatprep.subr.mxu0 0.0
        %2105 = vmatpush1.msra.mxu0 0.0
        %2106 = vmatprep.subr.mxu0 0.0
        %2107 = vmatpush1.msra.mxu0 0.0
        %2108 = vmatprep.subr.mxu0 0.0
        %2109 = vmatpush1.msra.mxu0 %v1997
        %2110 = vmatprep.subr.mxu0 0.0
        %2111 = vmatpush2.msra.mxu0 0.0
        %2112 = vmatprep.subr.mxu0 0.0
        %2113 = vmatpush2.msra.mxu0 0.0
        %2114 = vmatprep.subr.mxu0 0.0
        %2115 = vmatpush2.msra.mxu0 0.0
        %2116 = vmatprep.subr.mxu0 0.0
        %2117 = vmatpush2.msra.mxu0 0.0
        %2118 = vmatprep.subr.mxu0 0.0
        %2119 = vmatpush2.msra.mxu0 0.0
        %2120 = vmatprep.subr.mxu0 0.0
        %2121 = vmatpush2.msra.mxu0 0.0
        %2122 = vmatprep.subr.mxu0 0.0
        %2123 = vmatpush2.msra.mxu0 0.0
        %2124 = vmatprep.subr.mxu0 0.0
        %2125 = vmatpush2.msra.mxu0 0.0
        %2126 = vmatprep.subr.mxu0 0.0
        %2127 = vmatpush2.msra.mxu0 0.0
        %2128 = vmatprep.subr.mxu0 0.0
        %2129 = vmatpush2.msra.mxu0 0.0
        %2130 = vmatprep.subr.mxu0 0.0
        %2131 = vmatpush2.msra.mxu0 0.0
        %2132 = vmatprep.subr.mxu0 0.0
        %2133 = vmatpush2.msra.mxu0 0.0
        %2134 = vmatprep.subr.mxu0 0.0
        %2135 = vmatpush2.msra.mxu0 0.0
        %2136 = vmatprep.subr.mxu0 0.0
        %2137 = vmatpush2.msra.mxu0 0.0
        %2138 = vmatprep.subr.mxu0 0.0
        %2139 = vmatpush2.msra.mxu0 0.0
        %2140 = vmatprep.subr.mxu0 0.0
        %2141 = vmatpush2.msra.mxu0 0.0
        %2142 = vmatprep.mubr.f32.mxu0 0.0
        %2143 = vmatmul.mubr.f32.gmra.mxu0 %v2076
        %v2144 = vpop.f32.mrf.mxu0
        %v2145 = vadd.f32 0.0, %v2144
        %v2146 = vpop.f32.mrf.mxu0
        %2147 = vdwg.mxu0
        %2149 = vrot.lane.b32.xlu0 %v2145, 16
        %v2150 = vpop.permute.xlu0 %2149
        %vm2152 = vcmask 130048
        %v2153 = vsel %vm2152, %v2071, %v2150
        %s2154 = sld [smem:[#allocation7]]
        %v2155 = vstv %s2154
        %v2156 = vmul.f32 %v2155, %v591
        %s2157 = sld [smem:[#allocation7 + $0x1]]
        %v2158 = vstv %s2157
        %v2159 = vmul.f32 %v2158, %v593
        %v2160 = vadd.f32 %v2156, %v2159
        %s2161 = sld [smem:[#allocation7 + $0x2]]
        %v2162 = vstv %s2161
        %v2163 = vmul.f32 %v2162, %v595
        %v2164 = vadd.f32 %v2160, %v2163
        %s2165 = sld [smem:[#allocation7 + $0x3]]
        %v2166 = vstv %s2165
        %v2167 = vmul.f32 %v2166, %v597
        %v2168 = vadd.f32 %v2164, %v2167
        %v2169 = vmul.f32 %v2153, %v2168
        %s2170 = sld [smem:[#allocation12]]
        %v2171 = vstv %s2170
        %v2172 = vadd.f32 %v2169, %v2171
        %2173 = vst.msk [vmem:[%s586] sm:$0xff] %vm598, %v2172
        %s2174 = sld [smem:[#allocation7 + $0x80]]
        %v2175 = vstv %s2174
        %v2176 = vmul.f32 %v2175, %v591
        %s2177 = sld [smem:[#allocation7 + $0x81]]
        %v2178 = vstv %s2177
        %v2179 = vmul.f32 %v2178, %v593
        %v2180 = vadd.f32 %v2176, %v2179
        %s2181 = sld [smem:[#allocation7 + $0x82]]
        %v2182 = vstv %s2181
        %v2183 = vmul.f32 %v2182, %v595
        %v2184 = vadd.f32 %v2180, %v2183
        %s2185 = sld [smem:[#allocation7 + $0x83]]
        %v2186 = vstv %s2185
        %v2187 = vmul.f32 %v2186, %v597
        %v2188 = vadd.f32 %v2184, %v2187
        %v2189 = vmul.f32 %v2153, %v2188
        %s2190 = sld [smem:[#allocation12 + $0x1]]
        %v2191 = vstv %s2190
        %v2192 = vadd.f32 %v2189, %v2191
        %s2193 = scalar_lea.vmem %s586, 8
        %2194 = vst.msk [vmem:[%s2193] sm:$0xff] %vm598, %v2192
        %s2195 = sld [smem:[#allocation7 + $0x100]]
        %v2196 = vstv %s2195
        %v2197 = vmul.f32 %v2196, %v591
        %s2198 = sld [smem:[#allocation7 + $0x101]]
        %v2199 = vstv %s2198
        %v2200 = vmul.f32 %v2199, %v593
        %v2201 = vadd.f32 %v2197, %v2200
        %s2202 = sld [smem:[#allocation7 + $0x102]]
        %v2203 = vstv %s2202
        %v2204 = vmul.f32 %v2203, %v595
        %v2205 = vadd.f32 %v2201, %v2204
        %s2206 = sld [smem:[#allocation7 + $0x103]]
        %v2207 = vstv %s2206
        %v2208 = vmul.f32 %v2207, %v597
        %v2209 = vadd.f32 %v2205, %v2208
        %v2210 = vmul.f32 %v2153, %v2209
        %s2211 = sld [smem:[#allocation12 + $0x2]]
        %v2212 = vstv %s2211
        %v2213 = vadd.f32 %v2210, %v2212
        %s2214 = scalar_lea.vmem %s586, 16
        %2215 = vst.msk [vmem:[%s2214] sm:$0xff] %vm598, %v2213
        %s2216 = sld [smem:[#allocation7 + $0x180]]
        %v2217 = vstv %s2216
        %v2218 = vmul.f32 %v2217, %v591
        %s2219 = sld [smem:[#allocation7 + $0x181]]
        %v2220 = vstv %s2219
        %v2221 = vmul.f32 %v2220, %v593
        %v2222 = vadd.f32 %v2218, %v2221
        %s2223 = sld [smem:[#allocation7 + $0x182]]
        %v2224 = vstv %s2223
        %v2225 = vmul.f32 %v2224, %v595
        %v2226 = vadd.f32 %v2222, %v2225
        %s2227 = sld [smem:[#allocation7 + $0x183]]
        %v2228 = vstv %s2227
        %v2229 = vmul.f32 %v2228, %v597
        %v2230 = vadd.f32 %v2226, %v2229
        %v2231 = vmul.f32 %v2153, %v2230
        %s2232 = sld [smem:[#allocation12 + $0x3]]
        %v2233 = vstv %s2232
        %v2234 = vadd.f32 %v2231, %v2233
        %s2235 = scalar_lea.vmem %s586, 24
        %2236 = vst.msk [vmem:[%s2235] sm:$0xff] %vm598, %v2234
        %p2237 = scmp.lt.s32.totalorder %s31, 1
        %s2238 = scalar_select %p2237, %s31, 1
        %s2239 = smul.addr %s2238, 4
        %s2240 = smul.addr %s2239, 8
        %s2241 = scalar_lea.vmem %s15, %s2240
        // Predicated region
        $region105: #{gate_forward.1} parent=79 // pred_check
          %p2242 = pneg %p374
        $region106: #{gate_forward.1} parent=79 // pred_check_branch
          %2244 = sbr.rel (%p2242) target = $region108
        $region107: #{gate_forward.1} parent=79 // pred_region
          _
        $region108: #{gate_forward.1} parent=79 // pred_fallthru
          _
      $region80: #{gate_forward.1} parent=5 // pred_fallthru
        _
      %p2245 = scmp.le.s32.totalorder 2, %s26
      // Predicated region
      $region109: #{gate_forward.1} parent=5 // pred_check
        %p2246 = pneg %p2245
      $region110: #{gate_forward.1} parent=5 // pred_check_branch
        %2248 = sbr.rel (%p2246) target = $region112
      $region111: #{gate_forward.1} parent=5 // pred_region
        %s2249 = ssub.s32 %s26, 2
        // Predicated region
        $region113: #{gate_forward.1} parent=111 // pred_check
          %p2250 = pneg %p380
        $region114: #{gate_forward.1} parent=111 // pred_check_branch
          %2252 = sbr.rel (%p2250) target = $region116
        $region115: #{gate_forward.1} parent=111 // pred_region
          %p2253 = scmp.lt.s32.totalorder %s32, 1
          %s2254 = scalar_select %p2253, %s32, 1
          %s2255 = smul.addr %s2254, 4
          %s2256 = smul.addr %s2255, 8
          %s2257 = scalar_lea.vmem %s15, %s2256
        $region116: #{gate_forward.1} parent=111 // pred_fallthru
          _
      $region112: #{gate_forward.1} parent=5 // pred_fallthru
        _
    $region6: #{gate_forward.1} parent=1 // loop_footer
      %s30 = sadd.s32 1, %s26
    $region7: #{gate_forward.1} parent=1 // loop_footer_branch
      %25 = sbr.rel target = $region3
    $region8: #{gate_forward.1} parent=1 // loop_exit
      _
    %2258 = vsyncpa [#allocation4], 1
    %s2259 = scalar_lea.sflag [#allocation4], 1
    %2260 = vsyncpa %s2259, 1
    %2261 = vsyncpa [#allocation8], 1
    %2262 = vsyncpa [#allocation5], 1
    %s2263 = scalar_lea.sflag [#allocation5], 1
    %2264 = vsyncpa %s2263, 1
    %2265 = vsyncpa [#allocation10], 1

</llo_original>
